<compile_context>
chip_gen: v5e
topology: v5e:2x2
jax: 0.10.0
libtpu: 0.0.40
codegen_flags: <defaults>
</compile_context>

<pallas_src>
import numpy as np
import jax
import jax.numpy as jnp
from jax.experimental import pallas as pl
from jax.experimental.pallas import tpu as pltpu

# ---- flow hyperparameters (small but structurally faithful) -----------------
N_FLOWS = 4       # n_flows
DEPTH   = 2       # hidden_depth of BasicFullyConnectedNet in the couplings
D_IN    = 8       # in_channels (scVI latent dim), must be even
D_COND  = 16      # conditioning_dim (perturbation/ESM embedding dim)
D_EMB   = 8       # embedding_dim fed to every coupling block
H_COUP  = 32      # hidden_dim of coupling s/t nets
H_EMBED = 32      # hidden dim of the condition embedder
D_HALF  = D_IN // 2
D_CIN   = D_HALF + D_EMB          # coupling conditioner input dim
H2      = 2 * H_COUP              # fused (s|t) hidden width
NC      = N_FLOWS * 2             # total number of couplings

LRELU_SLOPE     = 0.01            # nn.LeakyReLU() default inside coupling MLPs
EMB_LRELU_SLOPE = 0.2             # LeakyReLU(0.2) inside the embedder
# activation="none" (IgnoreLeakyRelu == identity, zero logdet) as in the
# perturbnet scVI cINN configuration.

MAX_TILE_B = 1024                 # upper bound on the per-grid-step batch tile


def _lrelu(v, slope):
    return jnp.where(v >= 0, v, slope * v)


# =============================================================================
# Kernel (feature-major: features on sublanes, batch on lanes)
# =============================================================================
def flow_kernel(x_ref, c_ref,
                eW0_ref, eb0_ref, eW1_ref, eb1_ref, eW2_ref, eb2_ref,
                loc_ref, scale_ref,
                w0x_ref, w0e_ref, b0_ref, wm_ref, bm_ref, w2_ref, b2_ref,
                out_ref):
    mm_dtype = w0x_ref.dtype          # bf16 (production) or f32 (check path)
    f32 = jnp.float32

    x = x_ref[...]                    # [D_IN,   B]  f32, physical channel order
    c = c_ref[...]                    # [D_COND, B]  f32

    def mm(w, a):                     # W @ a, f32 accumulation on the MXU
        return jnp.dot(w, a.astype(mm_dtype), preferred_element_type=f32)

    # ---- condition embedder (DenseEmbedder), feature-major ------------------
    h = _lrelu(mm(eW0_ref[...], c) + eb0_ref[...], EMB_LRELU_SLOPE)
    h = _lrelu(mm(eW1_ref[...], h) + eb1_ref[...], EMB_LRELU_SLOPE)
    emb = mm(eW2_ref[...], h) + eb2_ref[...]            # [D_EMB, B]

    # ---- all NC loop-invariant condition projections in ONE matmul ----------
    # rows [(2f+i)*H2 : (2f+i+1)*H2] belong to coupling (f, i); slices below
    # are 64-row (sublane-aligned) static slices.
    emb_pre = mm(w0e_ref[...], emb) + b0_ref[...]       # [NC*H2, B]

    s_acc = jnp.zeros_like(x)         # per-channel logdet terms, reduced in wrapper

    for f in range(N_FLOWS):                            # unrolled at trace time
        # ---- ActNorm (loc/scale pre-permuted to physical order) -------------
        # its logdet contribution is a parameter constant -> added in wrapper
        x = scale_ref[f] * (x + loc_ref[f])

        # ---- activation: identity (IgnoreLeakyRelu), zero logdet ------------

        # ---- ConditionalDoubleVectorCouplingBlock ---------------------------
        # fused (s|t) MLP; half selection / swap / Shuffle are folded into the
        # zero-padded, permuted weights produced by pack_params().
        for i in range(2):
            off = (2 * f + i) * H2
            hh = mm(w0x_ref[f, i], x) + emb_pre[off:off + H2, :]
            hh = _lrelu(hh, LRELU_SLOPE)
            for dd in range(DEPTH):
                hh = _lrelu(mm(wm_ref[f, i, dd], hh) + bm_ref[f, i, dd],
                            LRELU_SLOPE)
            st = mm(w2_ref[f, i], hh) + b2_ref[f, i]    # [2*D_IN, B]
            s = jnp.tanh(st[:D_IN, :])                  # zero on passive half
            t = st[D_IN:, :]                            # zero on passive half
            x = x * jnp.exp(s) + t                      # passive: x*1 + 0 = x
            s_acc = s_acc + s

        # ---- Shuffle: folded into the next block's parameters ---------------

    # single merged output slab: rows [:D_IN] = zz (physical order),
    # rows [D_IN:] = per-channel logdet terms
    out_ref[...] = jnp.concatenate([x, s_acc], axis=0)


# =============================================================================
# Wrapper
# =============================================================================
def _const_spec(arr):
    n = arr.ndim
    return pl.BlockSpec(arr.shape, lambda b, _n=n: (0,) * _n)


def _round_up(a, m):
    return ((a + m - 1) // m) * m


def _pick_tile(batch, max_tile=MAX_TILE_B):
    """Largest 128-multiple tile (<= max_tile) dividing the padded batch,
    preferring >= 2 grid steps so ("parallel",) shards across TensorCores."""
    bp = _round_up(batch, 128)
    n128 = bp // 128
    best = 128
    for m in range(1, n128 + 1):
        t = m * 128
        if t > max_tile:
            break
        if n128 % m == 0 and (n128 // m >= 2 or n128 == m == 1):
            best = t
    return best, bp


def net2net_flow_forward(x_nchw, c, packed, actnorm_logdet, pi_final,
                         max_tile_b=MAX_TILE_B):
    """Mirrors Net2NetFlow_scVIFixFlow.forward(x, c) -> (zz, logdet)."""
    B, D, Hs, Ws = x_nchw.shape
    assert (Hs, Ws) == (1, 1) and D == D_IN
    tile_b, Bp = _pick_tile(B, max_tile_b)

    x2d = x_nchw.reshape(B, D).astype(jnp.float32)
    c2d = c.astype(jnp.float32)
    if Bp != B:
        x2d = jnp.pad(x2d, ((0, Bp - B), (0, 0)))
        c2d = jnp.pad(c2d, ((0, Bp - B), (0, 0)))
    xT = x2d.T                       # [D_IN,   Bp]  batch-in-lanes
    cT = c2d.T                       # [D_COND, Bp]

    in_specs = ([pl.BlockSpec((D_IN, tile_b), lambda b: (0, b)),
                 pl.BlockSpec((D_COND, tile_b), lambda b: (0, b))]
                + [_const_spec(w) for w in packed])

    out = pl.pallas_call(
        flow_kernel,
        out_shape=jax.ShapeDtypeStruct((2 * D_IN, Bp), jnp.float32),
        grid=(Bp // tile_b,),
        in_specs=in_specs,
        out_specs=pl.BlockSpec((2 * D_IN, tile_b), lambda b: (0, b)),
        compiler_params=pltpu.CompilerParams(
            dimension_semantics=("parallel",),
            # tiny per-tile footprint; explicit budget stays within v7x's
            # 64 MiB physical / 32 MiB default scoped VMEM on every generation
            vmem_limit_bytes=32 * 1024 * 1024),
    )(xT, cT, *packed)

    zz_phys = out[:D_IN, :B].T                               # [B, D_IN]
    logdet = out[D_IN:, :B].sum(axis=0) + jnp.float32(actnorm_logdet)
    zz = zz_phys[:, pi_final]        # physical -> torch channel ordering
    return zz.reshape(B, D_IN, 1, 1), logdet


# =============================================================================
# Parameter construction (logical, torch-structured, [in, out] weights)
# =============================================================================
def make_params(key):
    ks = iter(jax.random.split(key, 32))

    def w(shape, fan_in):
        return (jax.random.normal(next(ks), shape, jnp.float32)
                / jnp.sqrt(jnp.float32(fan_in)))

    # embedder
    eW0 = w((D_COND, H_EMBED), D_COND); eb0 = 0.01 * w((1, H_EMBED), 1.0)
    eW1 = w((H_EMBED, H_EMBED), H_EMBED); eb1 = 0.01 * w((1, H_EMBED), 1.0)
    eW2 = w((H_EMBED, D_EMB), H_EMBED); eb2 = 0.01 * w((1, D_EMB), 1.0)

    # ActNorm (loc ~0, scale ~1, strictly nonzero)
    an_loc = 0.1 * w((N_FLOWS, 1, D_IN), 1.0)
    an_scale = 1.0 + 0.1 * w((N_FLOWS, 1, D_IN), 1.0)

    def coupling_net():
        W0 = w((N_FLOWS, 2, D_CIN, H_COUP), D_CIN)
        b0 = 0.01 * w((N_FLOWS, 2, 1, H_COUP), 1.0)
        Wm = w((N_FLOWS, 2, DEPTH, H_COUP, H_COUP), H_COUP)
        bm = 0.01 * w((N_FLOWS, 2, DEPTH, 1, H_COUP), 1.0)
        W2 = w((N_FLOWS, 2, H_COUP, D_HALF), H_COUP)
        b2 = 0.01 * w((N_FLOWS, 2, 1, D_HALF), 1.0)
        return W0, b0, Wm, bm, W2, b2

    sW0, sb0, sWm, sbm, sW2, sb2 = coupling_net()
    tW0, tb0, tWm, tbm, tW2, tb2 = coupling_net()

    # Shuffle permutations (index form, trace-time constants)
    perm_idx = np.stack([
        np.array(jax.random.permutation(jax.random.PRNGKey(1000 + f), D_IN))
        for f in range(N_FLOWS)], axis=0).astype(np.int64)

    return (eW0, eb0, eW1, eb1, eW2, eb2, an_loc, an_scale,
            sW0, sb0, sWm, sbm, sW2, sb2,
            tW0, tb0, tWm, tbm, tW2, tb2, perm_idx)


# =============================================================================
# Host-side weight packing: transpose to [out, in], fuse s/t nets, stack all
# condition projections, fold Shuffle + half-swap into the weights, and keep
# track of the final channel permutation.
# Invariant: torch channel p  ==  physical channel pi[p] inside the kernel.
# =============================================================================
def pack_params(params, matmul_dtype=jnp.bfloat16):
    (eW0, eb0, eW1, eb1, eW2, eb2, an_loc, an_scale,
     sW0, sb0, sWm, sbm, sW2, sb2,
     tW0, tb0, tWm, tbm, tW2, tb2, perm_idx) = params
    npf = lambda a: np.asarray(a, np.float32)
    eW0, eb0, eW1, eb1, eW2, eb2 = map(npf, (eW0, eb0, eW1, eb1, eW2, eb2))
    sW0, sb0, sWm, sbm, sW2, sb2 = map(npf, (sW0, sb0, sWm, sbm, sW2, sb2))
    tW0, tb0, tWm, tbm, tW2, tb2 = map(npf, (tW0, tb0, tWm, tbm, tW2, tb2))
    an_loc, an_scale = npf(an_loc), npf(an_scale)
    perm_idx = np.asarray(perm_idx, np.int64)

    H, d = H_COUP, D_HALF
    W0X = np.zeros((N_FLOWS, 2, H2, D_IN), np.float32)
    W0E = np.zeros((NC * H2, D_EMB), np.float32)
    B0  = np.zeros((NC * H2, 1), np.float32)
    WM  = np.zeros((N_FLOWS, 2, DEPTH, H2, H2), np.float32)
    BM  = np.zeros((N_FLOWS, 2, DEPTH, H2, 1), np.float32)
    W2  = np.zeros((N_FLOWS, 2, 2 * D_IN, H2), np.float32)
    B2  = np.zeros((N_FLOWS, 2, 2 * D_IN, 1), np.float32)
    LOC = np.zeros((N_FLOWS, D_IN, 1), np.float32)
    SCL = np.ones((N_FLOWS, D_IN, 1), np.float32)

    pi = np.arange(D_IN)                       # torch pos -> physical channel
    for f in range(N_FLOWS):
        LOC[f, pi, 0] = an_loc[f, 0, :]
        SCL[f, pi, 0] = an_scale[f, 0, :]
        for i in range(2):
            if i == 1:                         # half swap before 2nd coupling
                pi = np.concatenate([pi[d:], pi[:d]])
            row = (2 * f + i) * H2
            # first layer, x rows: gathered from physical channels, fused s|t
            blk0 = np.zeros((H2, D_IN), np.float32)
            blk0[:H, pi[:d]] = sW0[f, i, :d, :].T
            blk0[H:, pi[:d]] = tW0[f, i, :d, :].T
            W0X[f, i] = blk0
            # first layer, condition rows: stacked so all couplings share one matmul
            W0E[row:row + H, :]      = sW0[f, i, d:, :].T
            W0E[row + H:row + H2, :] = tW0[f, i, d:, :].T
            B0[row:row + H, 0]       = sb0[f, i, 0, :]
            B0[row + H:row + H2, 0]  = tb0[f, i, 0, :]
            # hidden layers: block-diagonal keeps s/t hidden states separate
            for dd in range(DEPTH):
                WM[f, i, dd, :H, :H] = sWm[f, i, dd].T
                WM[f, i, dd, H:, H:] = tWm[f, i, dd].T
                BM[f, i, dd, :H, 0]  = sbm[f, i, dd, 0, :]
                BM[f, i, dd, H:, 0]  = tbm[f, i, dd, 0, :]
            # last layer: scatter s/t rows to the physical channels of the
            # transformed half; passive-half rows stay zero (tanh(0)=0, t=0
            # -> identity update there).
            blk2 = np.zeros((2 * D_IN, H2), np.float32)
            blk2[pi[d:], :H]        = sW2[f, i].T
            blk2[D_IN + pi[d:], H:] = tW2[f, i].T
            W2[f, i] = blk2
            bblk = np.zeros((2 * D_IN, 1), np.float32)
            bblk[pi[d:], 0]        = sb2[f, i, 0, :]
            bblk[D_IN + pi[d:], 0] = tb2[f, i, 0, :]
            B2[f, i] = bblk
        # Shuffle: new y[p] = old y[idx[p]]  ->  pi <- pi[idx]
        pi = pi[perm_idx[f]]

    actnorm_logdet = float(np.sum(np.log(np.abs(an_scale))))

    asw = lambda a: jnp.asarray(a, dtype=matmul_dtype)   # matmul operands
    asf = lambda a: jnp.asarray(a, dtype=jnp.float32)    # f32 elementwise
    packed = (asw(eW0.T), asf(eb0.reshape(H_EMBED, 1)),
              asw(eW1.T), asf(eb1.reshape(H_EMBED, 1)),
              asw(eW2.T), asf(eb2.reshape(D_EMB, 1)),
              asf(LOC), asf(SCL),
              asw(W0X), asw(W0E), asf(B0),
              asw(WM), asf(BM), asw(W2), asf(B2))
    return packed, actnorm_logdet, np.asarray(pi)


# =============================================================================
# Pure-JAX f32 reference (torch-structured math, no fusion/folding) for sanity
# =============================================================================
def reference_forward(x_nchw, c, params):
    (eW0, eb0, eW1, eb1, eW2, eb2, an_loc, an_scale,
     sW0, sb0, sWm, sbm, sW2, sb2,
     tW0, tb0, tWm, tbm, tW2, tb2, perm_idx) = params
    x = x_nchw.reshape(x_nchw.shape[0], D_IN)

    def lrelu(v, s): return jnp.where(v >= 0, v, s * v)

    h = lrelu(c @ eW0 + eb0, EMB_LRELU_SLOPE)
    h = lrelu(h @ eW1 + eb1, EMB_LRELU_SLOPE)
    emb = h @ eW2 + eb2

    def mlp(h, f, i, W0, b0, Wm, bm, W2, b2, use_tanh):
        h = lrelu(h @ W0[f, i] + b0[f, i], LRELU_SLOPE)
        for dd in range(DEPTH):
            h = lrelu(h @ Wm[f, i, dd] + bm[f, i, dd], LRELU_SLOPE)
        h = h @ W2[f, i] + b2[f, i]
        return jnp.tanh(h) if use_tanh else h

    logdet = jnp.zeros((x.shape[0],), jnp.float32)
    for f in range(N_FLOWS):
        x = an_scale[f] * (x + an_loc[f])
        logdet = logdet + jnp.sum(jnp.log(jnp.abs(an_scale[f])))
        for i in range(2):
            if i == 1:
                x = jnp.concatenate([x[:, D_HALF:], x[:, :D_HALF]], axis=1)
            xa, xb = x[:, :D_HALF], x[:, D_HALF:]
            cin = jnp.concatenate([xa, emb], axis=1)
            s = mlp(cin, f, i, sW0, sb0, sWm, sbm, sW2, sb2, True)
            t = mlp(cin, f, i, tW0, tb0, tWm, tbm, tW2, tb2, False)
            xb = xb * jnp.exp(s) + t
            x = jnp.concatenate([xa, xb], axis=1)
            logdet = logdet + jnp.sum(s, axis=1)
        x = x[:, perm_idx[f]]
    return x.reshape(-1, D_IN, 1, 1), logdet


if __name__ == "__main__":
    key = jax.random.PRNGKey(0)
    kx, kc, kp = jax.random.split(key, 3)

    B = 384   # exercises the batch grid (3 tiles of 128) and the pad/slice path
    # x mimics scVI latent .unsqueeze(-1).unsqueeze(-1): NCHW [B, D, 1, 1]
    x = jax.random.normal(kx, (B, D_IN, 1, 1), jnp.float32)
    # c mimics the (noised) perturbation embedding: [B, D_COND]
    c = jax.random.normal(kc, (B, D_COND), jnp.float32)

    params = make_params(kp)
    zz_ref, ld_ref = reference_forward(x, c, params)

    # --- correctness gate: f32-packed kernel vs torch-structured reference ---
    packed_f32, ald32, pi32 = pack_params(params, matmul_dtype=jnp.float32)
    zz32, ld32 = net2net_flow_forward(x, c, packed_f32, ald32, pi32)
    zz32 = jax.block_until_ready(zz32); ld32 = jax.block_until_ready(ld32)
    np.testing.assert_allclose(np.asarray(zz32), np.asarray(zz_ref),
                               rtol=1e-4, atol=1e-4)
    np.testing.assert_allclose(np.asarray(ld32), np.asarray(ld_ref),
                               rtol=1e-4, atol=1e-4)

    # --- production path: bf16 matmul operands, f32 accumulation/elementwise -
    packed_bf, aldb, pib = pack_params(params, matmul_dtype=jnp.bfloat16)
    zzb, ldb = net2net_flow_forward(x, c, packed_bf, aldb, pib)
    zzb = jax.block_until_ready(zzb); ldb = jax.block_until_ready(ldb)
    # loose sanity only: bf16 operands vs f32 reference
    np.testing.assert_allclose(np.asarray(zzb), np.asarray(zz_ref),
                               rtol=0.15, atol=0.3)
    np.testing.assert_allclose(np.asarray(ldb), np.asarray(ld_ref),
                               rtol=0.15, atol=0.3)

    assert zzb.shape == (B, D_IN, 1, 1) and ldb.shape == (B,)
    # TODO(synk): sample()/reverse()/NLL loss of the torch module are training
    # or host-side utilities and are intentionally not ported (forward only).
    print("KERNEL_OK")
</pallas_src>

<mosaic_0001>
module attributes {stable_mosaic.version = 11 : i64} {
  func.func @flow_kernel(%arg0: i32, %arg1: memref<8x128xf32, #tpu.memory_space<vmem>>, %arg2: memref<16x128xf32, #tpu.memory_space<vmem>>, %arg3: memref<32x16xf32, #tpu.memory_space<vmem>>, %arg4: memref<32x1xf32, #tpu.memory_space<vmem>>, %arg5: memref<32x32xf32, #tpu.memory_space<vmem>>, %arg6: memref<32x1xf32, #tpu.memory_space<vmem>>, %arg7: memref<8x32xf32, #tpu.memory_space<vmem>>, %arg8: memref<8x1xf32, #tpu.memory_space<vmem>>, %arg9: memref<4x8x1xf32, #tpu.memory_space<vmem>>, %arg10: memref<4x8x1xf32, #tpu.memory_space<vmem>>, %arg11: memref<4x2x64x8xf32, #tpu.memory_space<vmem>>, %arg12: memref<512x8xf32, #tpu.memory_space<vmem>>, %arg13: memref<512x1xf32, #tpu.memory_space<vmem>>, %arg14: memref<4x2x2x64x64xf32, #tpu.memory_space<vmem>>, %arg15: memref<4x2x2x64x1xf32, #tpu.memory_space<vmem>>, %arg16: memref<4x2x16x64xf32, #tpu.memory_space<vmem>>, %arg17: memref<4x2x16x1xf32, #tpu.memory_space<vmem>>, %arg18: memref<16x128xf32, #tpu.memory_space<vmem>>) attributes {dimension_semantics = [#tpu.dimension_semantics<parallel>], iteration_bounds = array<i64: 3>, scalar_prefetch = 0 : i64, scratch_operands = 0 : i64, tpu.core_type = #tpu.core_type<tc>, window_params = [{transform_indices = @transform_0, window_bounds = array<i64: 8, 128>}, {transform_indices = @transform_1, window_bounds = array<i64: 16, 128>}, {pipeline_mode = #tpu.pipeline_mode<synchronous>, transform_indices = @transform_2, window_bounds = array<i64: 32, 16>}, {pipeline_mode = #tpu.pipeline_mode<synchronous>, transform_indices = @transform_3, window_bounds = array<i64: 32, 1>}, {pipeline_mode = #tpu.pipeline_mode<synchronous>, transform_indices = @transform_4, window_bounds = array<i64: 32, 32>}, {pipeline_mode = #tpu.pipeline_mode<synchronous>, transform_indices = @transform_5, window_bounds = array<i64: 32, 1>}, {pipeline_mode = #tpu.pipeline_mode<synchronous>, transform_indices = @transform_6, window_bounds = array<i64: 8, 32>}, {pipeline_mode = #tpu.pipeline_mode<synchronous>, transform_indices = @transform_7, window_bounds = array<i64: 8, 1>}, {pipeline_mode = #tpu.pipeline_mode<synchronous>, transform_indices = @transform_8, window_bounds = array<i64: 4, 8, 1>}, {pipeline_mode = #tpu.pipeline_mode<synchronous>, transform_indices = @transform_9, window_bounds = array<i64: 4, 8, 1>}, {pipeline_mode = #tpu.pipeline_mode<synchronous>, transform_indices = @transform_10, window_bounds = array<i64: 4, 2, 64, 8>}, {pipeline_mode = #tpu.pipeline_mode<synchronous>, transform_indices = @transform_11, window_bounds = array<i64: 512, 8>}, {pipeline_mode = #tpu.pipeline_mode<synchronous>, transform_indices = @transform_12, window_bounds = array<i64: 512, 1>}, {pipeline_mode = #tpu.pipeline_mode<synchronous>, transform_indices = @transform_13, window_bounds = array<i64: 4, 2, 2, 64, 64>}, {pipeline_mode = #tpu.pipeline_mode<synchronous>, transform_indices = @transform_14, window_bounds = array<i64: 4, 2, 2, 64, 1>}, {pipeline_mode = #tpu.pipeline_mode<synchronous>, transform_indices = @transform_15, window_bounds = array<i64: 4, 2, 16, 64>}, {pipeline_mode = #tpu.pipeline_mode<synchronous>, transform_indices = @transform_16, window_bounds = array<i64: 4, 2, 16, 1>}, {transform_indices = @transform_17, window_bounds = array<i64: 16, 128>}]} {
    %c0 = arith.constant 0 : index
    %c0_0 = arith.constant 0 : index
    %0 = vector.load %arg1[%c0, %c0_0] : memref<8x128xf32, #tpu.memory_space<vmem>>, vector<8x128xf32>
    %c0_1 = arith.constant 0 : index
    %c0_2 = arith.constant 0 : index
    %1 = vector.load %arg2[%c0_1, %c0_2] : memref<16x128xf32, #tpu.memory_space<vmem>>, vector<16x128xf32>
    %c0_3 = arith.constant 0 : index
    %c0_4 = arith.constant 0 : index
    %2 = vector.load %arg3[%c0_3, %c0_4] : memref<32x16xf32, #tpu.memory_space<vmem>>, vector<32x16xf32>
    %cst = arith.constant dense<0.000000e+00> : vector<32x128xf32>
    %3 = tpu.matmul %2, %1, %cst {dimension_numbers = #tpu.dot_dimension_numbers<[1], [0], [0], [1], [0, 0, 1, 1], [], []>} : vector<32x16xf32>, vector<16x128xf32>, vector<32x128xf32> -> vector<32x128xf32>
    %c0_5 = arith.constant 0 : index
    %c0_6 = arith.constant 0 : index
    %4 = vector.load %arg4[%c0_5, %c0_6] : memref<32x1xf32, #tpu.memory_space<vmem>>, vector<32x1xf32>
    %5 = vector.broadcast %4 : vector<32x1xf32> to vector<32x128xf32>
    %6 = arith.addf %3, %5 : vector<32x128xf32>
    %cst_7 = arith.constant 0.000000e+00 : f32
    %7 = vector.broadcast %cst_7 : f32 to vector<32x128xf32>
    %8 = arith.cmpf oge, %6, %7 : vector<32x128xf32>
    %cst_8 = arith.constant 2.000000e-01 : f32
    %9 = vector.broadcast %cst_8 : f32 to vector<32x128xf32>
    %10 = arith.mulf %9, %6 : vector<32x128xf32>
    %11 = arith.select %8, %6, %10 : vector<32x128xi1>, vector<32x128xf32>
    %c0_9 = arith.constant 0 : index
    %c0_10 = arith.constant 0 : index
    %12 = vector.load %arg5[%c0_9, %c0_10] : memref<32x32xf32, #tpu.memory_space<vmem>>, vector<32x32xf32>
    %cst_11 = arith.constant dense<0.000000e+00> : vector<32x128xf32>
    %13 = tpu.matmul %12, %11, %cst_11 {dimension_numbers = #tpu.dot_dimension_numbers<[1], [0], [0], [1], [0, 0, 1, 1], [], []>} : vector<32x32xf32>, vector<32x128xf32>, vector<32x128xf32> -> vector<32x128xf32>
    %c0_12 = arith.constant 0 : index
    %c0_13 = arith.constant 0 : index
    %14 = vector.load %arg6[%c0_12, %c0_13] : memref<32x1xf32, #tpu.memory_space<vmem>>, vector<32x1xf32>
    %15 = vector.broadcast %14 : vector<32x1xf32> to vector<32x128xf32>
    %16 = arith.addf %13, %15 : vector<32x128xf32>
    %cst_14 = arith.constant 0.000000e+00 : f32
    %17 = vector.broadcast %cst_14 : f32 to vector<32x128xf32>
    %18 = arith.cmpf oge, %16, %17 : vector<32x128xf32>
    %cst_15 = arith.constant 2.000000e-01 : f32
    %19 = vector.broadcast %cst_15 : f32 to vector<32x128xf32>
    %20 = arith.mulf %19, %16 : vector<32x128xf32>
    %21 = arith.select %18, %16, %20 : vector<32x128xi1>, vector<32x128xf32>
    %c0_16 = arith.constant 0 : index
    %c0_17 = arith.constant 0 : index
    %22 = vector.load %arg7[%c0_16, %c0_17] : memref<8x32xf32, #tpu.memory_space<vmem>>, vector<8x32xf32>
    %cst_18 = arith.constant dense<0.000000e+00> : vector<8x128xf32>
    %23 = tpu.matmul %22, %21, %cst_18 {dimension_numbers = #tpu.dot_dimension_numbers<[1], [0], [0], [1], [0, 0, 1, 1], [], []>} : vector<8x32xf32>, vector<32x128xf32>, vector<8x128xf32> -> vector<8x128xf32>
    %c0_19 = arith.constant 0 : index
    %c0_20 = arith.constant 0 : index
    %24 = vector.load %arg8[%c0_19, %c0_20] : memref<8x1xf32, #tpu.memory_space<vmem>>, vector<8x1xf32>
    %25 = vector.broadcast %24 : vector<8x1xf32> to vector<8x128xf32>
    %26 = arith.addf %23, %25 : vector<8x128xf32>
    %c0_21 = arith.constant 0 : index
    %c0_22 = arith.constant 0 : index
    %27 = vector.load %arg12[%c0_21, %c0_22] : memref<512x8xf32, #tpu.memory_space<vmem>>, vector<512x8xf32>
    %cst_23 = arith.constant dense<0.000000e+00> : vector<512x128xf32>
    %28 = tpu.matmul %27, %26, %cst_23 {dimension_numbers = #tpu.dot_dimension_numbers<[1], [0], [0], [1], [0, 0, 1, 1], [], []>} : vector<512x8xf32>, vector<8x128xf32>, vector<512x128xf32> -> vector<512x128xf32>
    %c0_24 = arith.constant 0 : index
    %c0_25 = arith.constant 0 : index
    %29 = vector.load %arg13[%c0_24, %c0_25] : memref<512x1xf32, #tpu.memory_space<vmem>>, vector<512x1xf32>
    %30 = vector.broadcast %29 : vector<512x1xf32> to vector<512x128xf32>
    %31 = arith.addf %28, %30 : vector<512x128xf32>
    %cst_26 = arith.constant 0.000000e+00 : f32
    %32 = vector.broadcast %cst_26 : f32 to vector<8x128xf32>
    %c0_27 = arith.constant 0 : index
    %c0_28 = arith.constant 0 : index
    %c0_29 = arith.constant 0 : index
    %33 = vector.load %arg10[%c0_27, %c0_28, %c0_29] : memref<4x8x1xf32, #tpu.memory_space<vmem>>, vector<1x8x1xf32>
    %34 = vector.shape_cast %33 : vector<1x8x1xf32> to vector<8x1xf32>
    %c0_30 = arith.constant 0 : index
    %c0_31 = arith.constant 0 : index
    %c0_32 = arith.constant 0 : index
    %35 = vector.load %arg9[%c0_30, %c0_31, %c0_32] : memref<4x8x1xf32, #tpu.memory_space<vmem>>, vector<1x8x1xf32>
    %36 = vector.shape_cast %35 : vector<1x8x1xf32> to vector<8x1xf32>
    %37 = vector.broadcast %36 : vector<8x1xf32> to vector<8x128xf32>
    %38 = arith.addf %0, %37 : vector<8x128xf32>
    %39 = vector.broadcast %34 : vector<8x1xf32> to vector<8x128xf32>
    %40 = arith.mulf %39, %38 : vector<8x128xf32>
    %c0_33 = arith.constant 0 : index
    %c0_34 = arith.constant 0 : index
    %c0_35 = arith.constant 0 : index
    %c0_36 = arith.constant 0 : index
    %41 = vector.load %arg11[%c0_33, %c0_34, %c0_35, %c0_36] : memref<4x2x64x8xf32, #tpu.memory_space<vmem>>, vector<1x1x64x8xf32>
    %42 = vector.shape_cast %41 : vector<1x1x64x8xf32> to vector<64x8xf32>
    %cst_37 = arith.constant dense<0.000000e+00> : vector<64x128xf32>
    %43 = tpu.matmul %42, %40, %cst_37 {dimension_numbers = #tpu.dot_dimension_numbers<[1], [0], [0], [1], [0, 0, 1, 1], [], []>} : vector<64x8xf32>, vector<8x128xf32>, vector<64x128xf32> -> vector<64x128xf32>
    %44 = vector.extract_strided_slice %31 {offsets = [0, 0], sizes = [64, 128], strides = [1, 1]} : vector<512x128xf32> to vector<64x128xf32>
    %45 = arith.addf %43, %44 : vector<64x128xf32>
    %cst_38 = arith.constant 0.000000e+00 : f32
    %46 = vector.broadcast %cst_38 : f32 to vector<64x128xf32>
    %47 = arith.cmpf oge, %45, %46 : vector<64x128xf32>
    %cst_39 = arith.constant 0.00999999977 : f32
    %48 = vector.broadcast %cst_39 : f32 to vector<64x128xf32>
    %49 = arith.mulf %48, %45 : vector<64x128xf32>
    %50 = arith.select %47, %45, %49 : vector<64x128xi1>, vector<64x128xf32>
    %c0_40 = arith.constant 0 : index
    %c0_41 = arith.constant 0 : index
    %c0_42 = arith.constant 0 : index
    %c0_43 = arith.constant 0 : index
    %c0_44 = arith.constant 0 : index
    %51 = vector.load %arg14[%c0_40, %c0_41, %c0_42, %c0_43, %c0_44] : memref<4x2x2x64x64xf32, #tpu.memory_space<vmem>>, vector<1x1x1x64x64xf32>
    %52 = vector.shape_cast %51 : vector<1x1x1x64x64xf32> to vector<64x64xf32>
    %cst_45 = arith.constant dense<0.000000e+00> : vector<64x128xf32>
    %53 = tpu.matmul %52, %50, %cst_45 {dimension_numbers = #tpu.dot_dimension_numbers<[1], [0], [0], [1], [0, 0, 1, 1], [], []>} : vector<64x64xf32>, vector<64x128xf32>, vector<64x128xf32> -> vector<64x128xf32>
    %c0_46 = arith.constant 0 : index
    %c0_47 = arith.constant 0 : index
    %c0_48 = arith.constant 0 : index
    %c0_49 = arith.constant 0 : index
    %c0_50 = arith.constant 0 : index
    %54 = vector.load %arg15[%c0_46, %c0_47, %c0_48, %c0_49, %c0_50] : memref<4x2x2x64x1xf32, #tpu.memory_space<vmem>>, vector<1x1x1x64x1xf32>
    %55 = vector.shape_cast %54 : vector<1x1x1x64x1xf32> to vector<64x1xf32>
    %56 = vector.broadcast %55 : vector<64x1xf32> to vector<64x128xf32>
    %57 = arith.addf %53, %56 : vector<64x128xf32>
    %cst_51 = arith.constant 0.000000e+00 : f32
    %58 = vector.broadcast %cst_51 : f32 to vector<64x128xf32>
    %59 = arith.cmpf oge, %57, %58 : vector<64x128xf32>
    %cst_52 = arith.constant 0.00999999977 : f32
    %60 = vector.broadcast %cst_52 : f32 to vector<64x128xf32>
    %61 = arith.mulf %60, %57 : vector<64x128xf32>
    %62 = arith.select %59, %57, %61 : vector<64x128xi1>, vector<64x128xf32>
    %c0_53 = arith.constant 0 : index
    %c0_54 = arith.constant 0 : index
    %c1 = arith.constant 1 : index
    %c0_55 = arith.constant 0 : index
    %c0_56 = arith.constant 0 : index
    %63 = vector.load %arg14[%c0_53, %c0_54, %c1, %c0_55, %c0_56] : memref<4x2x2x64x64xf32, #tpu.memory_space<vmem>>, vector<1x1x1x64x64xf32>
    %64 = vector.shape_cast %63 : vector<1x1x1x64x64xf32> to vector<64x64xf32>
    %cst_57 = arith.constant dense<0.000000e+00> : vector<64x128xf32>
    %65 = tpu.matmul %64, %62, %cst_57 {dimension_numbers = #tpu.dot_dimension_numbers<[1], [0], [0], [1], [0, 0, 1, 1], [], []>} : vector<64x64xf32>, vector<64x128xf32>, vector<64x128xf32> -> vector<64x128xf32>
    %c0_58 = arith.constant 0 : index
    %c0_59 = arith.constant 0 : index
    %c1_60 = arith.constant 1 : index
    %c0_61 = arith.constant 0 : index
    %c0_62 = arith.constant 0 : index
    %66 = vector.load %arg15[%c0_58, %c0_59, %c1_60, %c0_61, %c0_62] : memref<4x2x2x64x1xf32, #tpu.memory_space<vmem>>, vector<1x1x1x64x1xf32>
    %67 = vector.shape_cast %66 : vector<1x1x1x64x1xf32> to vector<64x1xf32>
    %68 = vector.broadcast %67 : vector<64x1xf32> to vector<64x128xf32>
    %69 = arith.addf %65, %68 : vector<64x128xf32>
    %cst_63 = arith.constant 0.000000e+00 : f32
    %70 = vector.broadcast %cst_63 : f32 to vector<64x128xf32>
    %71 = arith.cmpf oge, %69, %70 : vector<64x128xf32>
    %cst_64 = arith.constant 0.00999999977 : f32
    %72 = vector.broadcast %cst_64 : f32 to vector<64x128xf32>
    %73 = arith.mulf %72, %69 : vector<64x128xf32>
    %74 = arith.select %71, %69, %73 : vector<64x128xi1>, vector<64x128xf32>
    %c0_65 = arith.constant 0 : index
    %c0_66 = arith.constant 0 : index
    %c0_67 = arith.constant 0 : index
    %c0_68 = arith.constant 0 : index
    %75 = vector.load %arg16[%c0_65, %c0_66, %c0_67, %c0_68] : memref<4x2x16x64xf32, #tpu.memory_space<vmem>>, vector<1x1x16x64xf32>
    %76 = vector.shape_cast %75 : vector<1x1x16x64xf32> to vector<16x64xf32>
    %cst_69 = arith.constant dense<0.000000e+00> : vector<16x128xf32>
    %77 = tpu.matmul %76, %74, %cst_69 {dimension_numbers = #tpu.dot_dimension_numbers<[1], [0], [0], [1], [0, 0, 1, 1], [], []>} : vector<16x64xf32>, vector<64x128xf32>, vector<16x128xf32> -> vector<16x128xf32>
    %c0_70 = arith.constant 0 : index
    %c0_71 = arith.constant 0 : index
    %c0_72 = arith.constant 0 : index
    %c0_73 = arith.constant 0 : index
    %78 = vector.load %arg17[%c0_70, %c0_71, %c0_72, %c0_73] : memref<4x2x16x1xf32, #tpu.memory_space<vmem>>, vector<1x1x16x1xf32>
    %79 = vector.shape_cast %78 : vector<1x1x16x1xf32> to vector<16x1xf32>
    %80 = vector.broadcast %79 : vector<16x1xf32> to vector<16x128xf32>
    %81 = arith.addf %77, %80 : vector<16x128xf32>
    %82 = vector.extract_strided_slice %81 {offsets = [0, 0], sizes = [8, 128], strides = [1, 1]} : vector<16x128xf32> to vector<8x128xf32>
    %83 = math.tanh %82 : vector<8x128xf32>
    %84 = vector.extract_strided_slice %81 {offsets = [8, 0], sizes = [8, 128], strides = [1, 1]} : vector<16x128xf32> to vector<8x128xf32>
    %85 = math.exp %83 : vector<8x128xf32>
    %86 = arith.mulf %40, %85 : vector<8x128xf32>
    %87 = arith.addf %86, %84 : vector<8x128xf32>
    %88 = arith.addf %32, %83 : vector<8x128xf32>
    %c0_74 = arith.constant 0 : index
    %c1_75 = arith.constant 1 : index
    %c0_76 = arith.constant 0 : index
    %c0_77 = arith.constant 0 : index
    %89 = vector.load %arg11[%c0_74, %c1_75, %c0_76, %c0_77] : memref<4x2x64x8xf32, #tpu.memory_space<vmem>>, vector<1x1x64x8xf32>
    %90 = vector.shape_cast %89 : vector<1x1x64x8xf32> to vector<64x8xf32>
    %cst_78 = arith.constant dense<0.000000e+00> : vector<64x128xf32>
    %91 = tpu.matmul %90, %87, %cst_78 {dimension_numbers = #tpu.dot_dimension_numbers<[1], [0], [0], [1], [0, 0, 1, 1], [], []>} : vector<64x8xf32>, vector<8x128xf32>, vector<64x128xf32> -> vector<64x128xf32>
    %92 = vector.extract_strided_slice %31 {offsets = [64, 0], sizes = [64, 128], strides = [1, 1]} : vector<512x128xf32> to vector<64x128xf32>
    %93 = arith.addf %91, %92 : vector<64x128xf32>
    %cst_79 = arith.constant 0.000000e+00 : f32
    %94 = vector.broadcast %cst_79 : f32 to vector<64x128xf32>
    %95 = arith.cmpf oge, %93, %94 : vector<64x128xf32>
    %cst_80 = arith.constant 0.00999999977 : f32
    %96 = vector.broadcast %cst_80 : f32 to vector<64x128xf32>
    %97 = arith.mulf %96, %93 : vector<64x128xf32>
    %98 = arith.select %95, %93, %97 : vector<64x128xi1>, vector<64x128xf32>
    %c0_81 = arith.constant 0 : index
    %c1_82 = arith.constant 1 : index
    %c0_83 = arith.constant 0 : index
    %c0_84 = arith.constant 0 : index
    %c0_85 = arith.constant 0 : index
    %99 = vector.load %arg14[%c0_81, %c1_82, %c0_83, %c0_84, %c0_85] : memref<4x2x2x64x64xf32, #tpu.memory_space<vmem>>, vector<1x1x1x64x64xf32>
    %100 = vector.shape_cast %99 : vector<1x1x1x64x64xf32> to vector<64x64xf32>
    %cst_86 = arith.constant dense<0.000000e+00> : vector<64x128xf32>
    %101 = tpu.matmul %100, %98, %cst_86 {dimension_numbers = #tpu.dot_dimension_numbers<[1], [0], [0], [1], [0, 0, 1, 1], [], []>} : vector<64x64xf32>, vector<64x128xf32>, vector<64x128xf32> -> vector<64x128xf32>
    %c0_87 = arith.constant 0 : index
    %c1_88 = arith.constant 1 : index
    %c0_89 = arith.constant 0 : index
    %c0_90 = arith.constant 0 : index
    %c0_91 = arith.constant 0 : index
    %102 = vector.load %arg15[%c0_87, %c1_88, %c0_89, %c0_90, %c0_91] : memref<4x2x2x64x1xf32, #tpu.memory_space<vmem>>, vector<1x1x1x64x1xf32>
    %103 = vector.shape_cast %102 : vector<1x1x1x64x1xf32> to vector<64x1xf32>
    %104 = vector.broadcast %103 : vector<64x1xf32> to vector<64x128xf32>
    %105 = arith.addf %101, %104 : vector<64x128xf32>
    %cst_92 = arith.constant 0.000000e+00 : f32
    %106 = vector.broadcast %cst_92 : f32 to vector<64x128xf32>
    %107 = arith.cmpf oge, %105, %106 : vector<64x128xf32>
    %cst_93 = arith.constant 0.00999999977 : f32
    %108 = vector.broadcast %cst_93 : f32 to vector<64x128xf32>
    %109 = arith.mulf %108, %105 : vector<64x128xf32>
    %110 = arith.select %107, %105, %109 : vector<64x128xi1>, vector<64x128xf32>
    %c0_94 = arith.constant 0 : index
    %c1_95 = arith.constant 1 : index
    %c1_96 = arith.constant 1 : index
    %c0_97 = arith.constant 0 : index
    %c0_98 = arith.constant 0 : index
    %111 = vector.load %arg14[%c0_94, %c1_95, %c1_96, %c0_97, %c0_98] : memref<4x2x2x64x64xf32, #tpu.memory_space<vmem>>, vector<1x1x1x64x64xf32>
    %112 = vector.shape_cast %111 : vector<1x1x1x64x64xf32> to vector<64x64xf32>
    %cst_99 = arith.constant dense<0.000000e+00> : vector<64x128xf32>
    %113 = tpu.matmul %112, %110, %cst_99 {dimension_numbers = #tpu.dot_dimension_numbers<[1], [0], [0], [1], [0, 0, 1, 1], [], []>} : vector<64x64xf32>, vector<64x128xf32>, vector<64x128xf32> -> vector<64x128xf32>
    %c0_100 = arith.constant 0 : index
    %c1_101 = arith.constant 1 : index
    %c1_102 = arith.constant 1 : index
    %c0_103 = arith.constant 0 : index
    %c0_104 = arith.constant 0 : index
    %114 = vector.load %arg15[%c0_100, %c1_101, %c1_102, %c0_103, %c0_104] : memref<4x2x2x64x1xf32, #tpu.memory_space<vmem>>, vector<1x1x1x64x1xf32>
    %115 = vector.shape_cast %114 : vector<1x1x1x64x1xf32> to vector<64x1xf32>
    %116 = vector.broadcast %115 : vector<64x1xf32> to vector<64x128xf32>
    %117 = arith.addf %113, %116 : vector<64x128xf32>
    %cst_105 = arith.constant 0.000000e+00 : f32
    %118 = vector.broadcast %cst_105 : f32 to vector<64x128xf32>
    %119 = arith.cmpf oge, %117, %118 : vector<64x128xf32>
    %cst_106 = arith.constant 0.00999999977 : f32
    %120 = vector.broadcast %cst_106 : f32 to vector<64x128xf32>
    %121 = arith.mulf %120, %117 : vector<64x128xf32>
    %122 = arith.select %119, %117, %121 : vector<64x128xi1>, vector<64x128xf32>
    %c0_107 = arith.constant 0 : index
    %c1_108 = arith.constant 1 : index
    %c0_109 = arith.constant 0 : index
    %c0_110 = arith.constant 0 : index
    %123 = vector.load %arg16[%c0_107, %c1_108, %c0_109, %c0_110] : memref<4x2x16x64xf32, #tpu.memory_space<vmem>>, vector<1x1x16x64xf32>
    %124 = vector.shape_cast %123 : vector<1x1x16x64xf32> to vector<16x64xf32>
    %cst_111 = arith.constant dense<0.000000e+00> : vector<16x128xf32>
    %125 = tpu.matmul %124, %122, %cst_111 {dimension_numbers = #tpu.dot_dimension_numbers<[1], [0], [0], [1], [0, 0, 1, 1], [], []>} : vector<16x64xf32>, vector<64x128xf32>, vector<16x128xf32> -> vector<16x128xf32>
    %c0_112 = arith.constant 0 : index
    %c1_113 = arith.constant 1 : index
    %c0_114 = arith.constant 0 : index
    %c0_115 = arith.constant 0 : index
    %126 = vector.load %arg17[%c0_112, %c1_113, %c0_114, %c0_115] : memref<4x2x16x1xf32, #tpu.memory_space<vmem>>, vector<1x1x16x1xf32>
    %127 = vector.shape_cast %126 : vector<1x1x16x1xf32> to vector<16x1xf32>
    %128 = vector.broadcast %127 : vector<16x1xf32> to vector<16x128xf32>
    %129 = arith.addf %125, %128 : vector<16x128xf32>
    %130 = vector.extract_strided_slice %129 {offsets = [0, 0], sizes = [8, 128], strides = [1, 1]} : vector<16x128xf32> to vector<8x128xf32>
    %131 = math.tanh %130 : vector<8x128xf32>
    %132 = vector.extract_strided_slice %129 {offsets = [8, 0], sizes = [8, 128], strides = [1, 1]} : vector<16x128xf32> to vector<8x128xf32>
    %133 = math.exp %131 : vector<8x128xf32>
    %134 = arith.mulf %87, %133 : vector<8x128xf32>
    %135 = arith.addf %134, %132 : vector<8x128xf32>
    %136 = arith.addf %88, %131 : vector<8x128xf32>
    %c1_116 = arith.constant 1 : index
    %c0_117 = arith.constant 0 : index
    %c0_118 = arith.constant 0 : index
    %137 = vector.load %arg10[%c1_116, %c0_117, %c0_118] : memref<4x8x1xf32, #tpu.memory_space<vmem>>, vector<1x8x1xf32>
    %138 = vector.shape_cast %137 : vector<1x8x1xf32> to vector<8x1xf32>
    %c1_119 = arith.constant 1 : index
    %c0_120 = arith.constant 0 : index
    %c0_121 = arith.constant 0 : index
    %139 = vector.load %arg9[%c1_119, %c0_120, %c0_121] : memref<4x8x1xf32, #tpu.memory_space<vmem>>, vector<1x8x1xf32>
    %140 = vector.shape_cast %139 : vector<1x8x1xf32> to vector<8x1xf32>
    %141 = vector.broadcast %140 : vector<8x1xf32> to vector<8x128xf32>
    %142 = arith.addf %135, %141 : vector<8x128xf32>
    %143 = vector.broadcast %138 : vector<8x1xf32> to vector<8x128xf32>
    %144 = arith.mulf %143, %142 : vector<8x128xf32>
    %c1_122 = arith.constant 1 : index
    %c0_123 = arith.constant 0 : index
    %c0_124 = arith.constant 0 : index
    %c0_125 = arith.constant 0 : index
    %145 = vector.load %arg11[%c1_122, %c0_123, %c0_124, %c0_125] : memref<4x2x64x8xf32, #tpu.memory_space<vmem>>, vector<1x1x64x8xf32>
    %146 = vector.shape_cast %145 : vector<1x1x64x8xf32> to vector<64x8xf32>
    %cst_126 = arith.constant dense<0.000000e+00> : vector<64x128xf32>
    %147 = tpu.matmul %146, %144, %cst_126 {dimension_numbers = #tpu.dot_dimension_numbers<[1], [0], [0], [1], [0, 0, 1, 1], [], []>} : vector<64x8xf32>, vector<8x128xf32>, vector<64x128xf32> -> vector<64x128xf32>
    %148 = vector.extract_strided_slice %31 {offsets = [128, 0], sizes = [64, 128], strides = [1, 1]} : vector<512x128xf32> to vector<64x128xf32>
    %149 = arith.addf %147, %148 : vector<64x128xf32>
    %cst_127 = arith.constant 0.000000e+00 : f32
    %150 = vector.broadcast %cst_127 : f32 to vector<64x128xf32>
    %151 = arith.cmpf oge, %149, %150 : vector<64x128xf32>
    %cst_128 = arith.constant 0.00999999977 : f32
    %152 = vector.broadcast %cst_128 : f32 to vector<64x128xf32>
    %153 = arith.mulf %152, %149 : vector<64x128xf32>
    %154 = arith.select %151, %149, %153 : vector<64x128xi1>, vector<64x128xf32>
    %c1_129 = arith.constant 1 : index
    %c0_130 = arith.constant 0 : index
    %c0_131 = arith.constant 0 : index
    %c0_132 = arith.constant 0 : index
    %c0_133 = arith.constant 0 : index
    %155 = vector.load %arg14[%c1_129, %c0_130, %c0_131, %c0_132, %c0_133] : memref<4x2x2x64x64xf32, #tpu.memory_space<vmem>>, vector<1x1x1x64x64xf32>
    %156 = vector.shape_cast %155 : vector<1x1x1x64x64xf32> to vector<64x64xf32>
    %cst_134 = arith.constant dense<0.000000e+00> : vector<64x128xf32>
    %157 = tpu.matmul %156, %154, %cst_134 {dimension_numbers = #tpu.dot_dimension_numbers<[1], [0], [0], [1], [0, 0, 1, 1], [], []>} : vector<64x64xf32>, vector<64x128xf32>, vector<64x128xf32> -> vector<64x128xf32>
    %c1_135 = arith.constant 1 : index
    %c0_136 = arith.constant 0 : index
    %c0_137 = arith.constant 0 : index
    %c0_138 = arith.constant 0 : index
    %c0_139 = arith.constant 0 : index
    %158 = vector.load %arg15[%c1_135, %c0_136, %c0_137, %c0_138, %c0_139] : memref<4x2x2x64x1xf32, #tpu.memory_space<vmem>>, vector<1x1x1x64x1xf32>
    %159 = vector.shape_cast %158 : vector<1x1x1x64x1xf32> to vector<64x1xf32>
    %160 = vector.broadcast %159 : vector<64x1xf32> to vector<64x128xf32>
    %161 = arith.addf %157, %160 : vector<64x128xf32>
    %cst_140 = arith.constant 0.000000e+00 : f32
    %162 = vector.broadcast %cst_140 : f32 to vector<64x128xf32>
    %163 = arith.cmpf oge, %161, %162 : vector<64x128xf32>
    %cst_141 = arith.constant 0.00999999977 : f32
    %164 = vector.broadcast %cst_141 : f32 to vector<64x128xf32>
    %165 = arith.mulf %164, %161 : vector<64x128xf32>
    %166 = arith.select %163, %161, %165 : vector<64x128xi1>, vector<64x128xf32>
    %c1_142 = arith.constant 1 : index
    %c0_143 = arith.constant 0 : index
    %c1_144 = arith.constant 1 : index
    %c0_145 = arith.constant 0 : index
    %c0_146 = arith.constant 0 : index
    %167 = vector.load %arg14[%c1_142, %c0_143, %c1_144, %c0_145, %c0_146] : memref<4x2x2x64x64xf32, #tpu.memory_space<vmem>>, vector<1x1x1x64x64xf32>
    %168 = vector.shape_cast %167 : vector<1x1x1x64x64xf32> to vector<64x64xf32>
    %cst_147 = arith.constant dense<0.000000e+00> : vector<64x128xf32>
    %169 = tpu.matmul %168, %166, %cst_147 {dimension_numbers = #tpu.dot_dimension_numbers<[1], [0], [0], [1], [0, 0, 1, 1], [], []>} : vector<64x64xf32>, vector<64x128xf32>, vector<64x128xf32> -> vector<64x128xf32>
    %c1_148 = arith.constant 1 : index
    %c0_149 = arith.constant 0 : index
    %c1_150 = arith.constant 1 : index
    %c0_151 = arith.constant 0 : index
    %c0_152 = arith.constant 0 : index
    %170 = vector.load %arg15[%c1_148, %c0_149, %c1_150, %c0_151, %c0_152] : memref<4x2x2x64x1xf32, #tpu.memory_space<vmem>>, vector<1x1x1x64x1xf32>
    %171 = vector.shape_cast %170 : vector<1x1x1x64x1xf32> to vector<64x1xf32>
    %172 = vector.broadcast %171 : vector<64x1xf32> to vector<64x128xf32>
    %173 = arith.addf %169, %172 : vector<64x128xf32>
    %cst_153 = arith.constant 0.000000e+00 : f32
    %174 = vector.broadcast %cst_153 : f32 to vector<64x128xf32>
    %175 = arith.cmpf oge, %173, %174 : vector<64x128xf32>
    %cst_154 = arith.constant 0.00999999977 : f32
    %176 = vector.broadcast %cst_154 : f32 to vector<64x128xf32>
    %177 = arith.mulf %176, %173 : vector<64x128xf32>
    %178 = arith.select %175, %173, %177 : vector<64x128xi1>, vector<64x128xf32>
    %c1_155 = arith.constant 1 : index
    %c0_156 = arith.constant 0 : index
    %c0_157 = arith.constant 0 : index
    %c0_158 = arith.constant 0 : index
    %179 = vector.load %arg16[%c1_155, %c0_156, %c0_157, %c0_158] : memref<4x2x16x64xf32, #tpu.memory_space<vmem>>, vector<1x1x16x64xf32>
    %180 = vector.shape_cast %179 : vector<1x1x16x64xf32> to vector<16x64xf32>
    %cst_159 = arith.constant dense<0.000000e+00> : vector<16x128xf32>
    %181 = tpu.matmul %180, %178, %cst_159 {dimension_numbers = #tpu.dot_dimension_numbers<[1], [0], [0], [1], [0, 0, 1, 1], [], []>} : vector<16x64xf32>, vector<64x128xf32>, vector<16x128xf32> -> vector<16x128xf32>
    %c1_160 = arith.constant 1 : index
    %c0_161 = arith.constant 0 : index
    %c0_162 = arith.constant 0 : index
    %c0_163 = arith.constant 0 : index
    %182 = vector.load %arg17[%c1_160, %c0_161, %c0_162, %c0_163] : memref<4x2x16x1xf32, #tpu.memory_space<vmem>>, vector<1x1x16x1xf32>
    %183 = vector.shape_cast %182 : vector<1x1x16x1xf32> to vector<16x1xf32>
    %184 = vector.broadcast %183 : vector<16x1xf32> to vector<16x128xf32>
    %185 = arith.addf %181, %184 : vector<16x128xf32>
    %186 = vector.extract_strided_slice %185 {offsets = [0, 0], sizes = [8, 128], strides = [1, 1]} : vector<16x128xf32> to vector<8x128xf32>
    %187 = math.tanh %186 : vector<8x128xf32>
    %188 = vector.extract_strided_slice %185 {offsets = [8, 0], sizes = [8, 128], strides = [1, 1]} : vector<16x128xf32> to vector<8x128xf32>
    %189 = math.exp %187 : vector<8x128xf32>
    %190 = arith.mulf %144, %189 : vector<8x128xf32>
    %191 = arith.addf %190, %188 : vector<8x128xf32>
    %192 = arith.addf %136, %187 : vector<8x128xf32>
    %c1_164 = arith.constant 1 : index
    %c1_165 = arith.constant 1 : index
    %c0_166 = arith.constant 0 : index
    %c0_167 = arith.constant 0 : index
    %193 = vector.load %arg11[%c1_164, %c1_165, %c0_166, %c0_167] : memref<4x2x64x8xf32, #tpu.memory_space<vmem>>, vector<1x1x64x8xf32>
    %194 = vector.shape_cast %193 : vector<1x1x64x8xf32> to vector<64x8xf32>
    %cst_168 = arith.constant dense<0.000000e+00> : vector<64x128xf32>
    %195 = tpu.matmul %194, %191, %cst_168 {dimension_numbers = #tpu.dot_dimension_numbers<[1], [0], [0], [1], [0, 0, 1, 1], [], []>} : vector<64x8xf32>, vector<8x128xf32>, vector<64x128xf32> -> vector<64x128xf32>
    %196 = vector.extract_strided_slice %31 {offsets = [192, 0], sizes = [64, 128], strides = [1, 1]} : vector<512x128xf32> to vector<64x128xf32>
    %197 = arith.addf %195, %196 : vector<64x128xf32>
    %cst_169 = arith.constant 0.000000e+00 : f32
    %198 = vector.broadcast %cst_169 : f32 to vector<64x128xf32>
    %199 = arith.cmpf oge, %197, %198 : vector<64x128xf32>
    %cst_170 = arith.constant 0.00999999977 : f32
    %200 = vector.broadcast %cst_170 : f32 to vector<64x128xf32>
    %201 = arith.mulf %200, %197 : vector<64x128xf32>
    %202 = arith.select %199, %197, %201 : vector<64x128xi1>, vector<64x128xf32>
    %c1_171 = arith.constant 1 : index
    %c1_172 = arith.constant 1 : index
    %c0_173 = arith.constant 0 : index
    %c0_174 = arith.constant 0 : index
    %c0_175 = arith.constant 0 : index
    %203 = vector.load %arg14[%c1_171, %c1_172, %c0_173, %c0_174, %c0_175] : memref<4x2x2x64x64xf32, #tpu.memory_space<vmem>>, vector<1x1x1x64x64xf32>
    %204 = vector.shape_cast %203 : vector<1x1x1x64x64xf32> to vector<64x64xf32>
    %cst_176 = arith.constant dense<0.000000e+00> : vector<64x128xf32>
    %205 = tpu.matmul %204, %202, %cst_176 {dimension_numbers = #tpu.dot_dimension_numbers<[1], [0], [0], [1], [0, 0, 1, 1], [], []>} : vector<64x64xf32>, vector<64x128xf32>, vector<64x128xf32> -> vector<64x128xf32>
    %c1_177 = arith.constant 1 : index
    %c1_178 = arith.constant 1 : index
    %c0_179 = arith.constant 0 : index
    %c0_180 = arith.constant 0 : index
    %c0_181 = arith.constant 0 : index
    %206 = vector.load %arg15[%c1_177, %c1_178, %c0_179, %c0_180, %c0_181] : memref<4x2x2x64x1xf32, #tpu.memory_space<vmem>>, vector<1x1x1x64x1xf32>
    %207 = vector.shape_cast %206 : vector<1x1x1x64x1xf32> to vector<64x1xf32>
    %208 = vector.broadcast %207 : vector<64x1xf32> to vector<64x128xf32>
    %209 = arith.addf %205, %208 : vector<64x128xf32>
    %cst_182 = arith.constant 0.000000e+00 : f32
    %210 = vector.broadcast %cst_182 : f32 to vector<64x128xf32>
    %211 = arith.cmpf oge, %209, %210 : vector<64x128xf32>
    %cst_183 = arith.constant 0.00999999977 : f32
    %212 = vector.broadcast %cst_183 : f32 to vector<64x128xf32>
    %213 = arith.mulf %212, %209 : vector<64x128xf32>
    %214 = arith.select %211, %209, %213 : vector<64x128xi1>, vector<64x128xf32>
    %c1_184 = arith.constant 1 : index
    %c1_185 = arith.constant 1 : index
    %c1_186 = arith.constant 1 : index
    %c0_187 = arith.constant 0 : index
    %c0_188 = arith.constant 0 : index
    %215 = vector.load %arg14[%c1_184, %c1_185, %c1_186, %c0_187, %c0_188] : memref<4x2x2x64x64xf32, #tpu.memory_space<vmem>>, vector<1x1x1x64x64xf32>
    %216 = vector.shape_cast %215 : vector<1x1x1x64x64xf32> to vector<64x64xf32>
    %cst_189 = arith.constant dense<0.000000e+00> : vector<64x128xf32>
    %217 = tpu.matmul %216, %214, %cst_189 {dimension_numbers = #tpu.dot_dimension_numbers<[1], [0], [0], [1], [0, 0, 1, 1], [], []>} : vector<64x64xf32>, vector<64x128xf32>, vector<64x128xf32> -> vector<64x128xf32>
    %c1_190 = arith.constant 1 : index
    %c1_191 = arith.constant 1 : index
    %c1_192 = arith.constant 1 : index
    %c0_193 = arith.constant 0 : index
    %c0_194 = arith.constant 0 : index
    %218 = vector.load %arg15[%c1_190, %c1_191, %c1_192, %c0_193, %c0_194] : memref<4x2x2x64x1xf32, #tpu.memory_space<vmem>>, vector<1x1x1x64x1xf32>
    %219 = vector.shape_cast %218 : vector<1x1x1x64x1xf32> to vector<64x1xf32>
    %220 = vector.broadcast %219 : vector<64x1xf32> to vector<64x128xf32>
    %221 = arith.addf %217, %220 : vector<64x128xf32>
    %cst_195 = arith.constant 0.000000e+00 : f32
    %222 = vector.broadcast %cst_195 : f32 to vector<64x128xf32>
    %223 = arith.cmpf oge, %221, %222 : vector<64x128xf32>
    %cst_196 = arith.constant 0.00999999977 : f32
    %224 = vector.broadcast %cst_196 : f32 to vector<64x128xf32>
    %225 = arith.mulf %224, %221 : vector<64x128xf32>
    %226 = arith.select %223, %221, %225 : vector<64x128xi1>, vector<64x128xf32>
    %c1_197 = arith.constant 1 : index
    %c1_198 = arith.constant 1 : index
    %c0_199 = arith.constant 0 : index
    %c0_200 = arith.constant 0 : index
    %227 = vector.load %arg16[%c1_197, %c1_198, %c0_199, %c0_200] : memref<4x2x16x64xf32, #tpu.memory_space<vmem>>, vector<1x1x16x64xf32>
    %228 = vector.shape_cast %227 : vector<1x1x16x64xf32> to vector<16x64xf32>
    %cst_201 = arith.constant dense<0.000000e+00> : vector<16x128xf32>
    %229 = tpu.matmul %228, %226, %cst_201 {dimension_numbers = #tpu.dot_dimension_numbers<[1], [0], [0], [1], [0, 0, 1, 1], [], []>} : vector<16x64xf32>, vector<64x128xf32>, vector<16x128xf32> -> vector<16x128xf32>
    %c1_202 = arith.constant 1 : index
    %c1_203 = arith.constant 1 : index
    %c0_204 = arith.constant 0 : index
    %c0_205 = arith.constant 0 : index
    %230 = vector.load %arg17[%c1_202, %c1_203, %c0_204, %c0_205] : memref<4x2x16x1xf32, #tpu.memory_space<vmem>>, vector<1x1x16x1xf32>
    %231 = vector.shape_cast %230 : vector<1x1x16x1xf32> to vector<16x1xf32>
    %232 = vector.broadcast %231 : vector<16x1xf32> to vector<16x128xf32>
    %233 = arith.addf %229, %232 : vector<16x128xf32>
    %234 = vector.extract_strided_slice %233 {offsets = [0, 0], sizes = [8, 128], strides = [1, 1]} : vector<16x128xf32> to vector<8x128xf32>
    %235 = math.tanh %234 : vector<8x128xf32>
    %236 = vector.extract_strided_slice %233 {offsets = [8, 0], sizes = [8, 128], strides = [1, 1]} : vector<16x128xf32> to vector<8x128xf32>
    %237 = math.exp %235 : vector<8x128xf32>
    %238 = arith.mulf %191, %237 : vector<8x128xf32>
    %239 = arith.addf %238, %236 : vector<8x128xf32>
    %240 = arith.addf %192, %235 : vector<8x128xf32>
    %c2 = arith.constant 2 : index
    %c0_206 = arith.constant 0 : index
    %c0_207 = arith.constant 0 : index
    %241 = vector.load %arg10[%c2, %c0_206, %c0_207] : memref<4x8x1xf32, #tpu.memory_space<vmem>>, vector<1x8x1xf32>
    %242 = vector.shape_cast %241 : vector<1x8x1xf32> to vector<8x1xf32>
    %c2_208 = arith.constant 2 : index
    %c0_209 = arith.constant 0 : index
    %c0_210 = arith.constant 0 : index
    %243 = vector.load %arg9[%c2_208, %c0_209, %c0_210] : memref<4x8x1xf32, #tpu.memory_space<vmem>>, vector<1x8x1xf32>
    %244 = vector.shape_cast %243 : vector<1x8x1xf32> to vector<8x1xf32>
    %245 = vector.broadcast %244 : vector<8x1xf32> to vector<8x128xf32>
    %246 = arith.addf %239, %245 : vector<8x128xf32>
    %247 = vector.broadcast %242 : vector<8x1xf32> to vector<8x128xf32>
    %248 = arith.mulf %247, %246 : vector<8x128xf32>
    %c2_211 = arith.constant 2 : index
    %c0_212 = arith.constant 0 : index
    %c0_213 = arith.constant 0 : index
    %c0_214 = arith.constant 0 : index
    %249 = vector.load %arg11[%c2_211, %c0_212, %c0_213, %c0_214] : memref<4x2x64x8xf32, #tpu.memory_space<vmem>>, vector<1x1x64x8xf32>
    %250 = vector.shape_cast %249 : vector<1x1x64x8xf32> to vector<64x8xf32>
    %cst_215 = arith.constant dense<0.000000e+00> : vector<64x128xf32>
    %251 = tpu.matmul %250, %248, %cst_215 {dimension_numbers = #tpu.dot_dimension_numbers<[1], [0], [0], [1], [0, 0, 1, 1], [], []>} : vector<64x8xf32>, vector<8x128xf32>, vector<64x128xf32> -> vector<64x128xf32>
    %252 = vector.extract_strided_slice %31 {offsets = [256, 0], sizes = [64, 128], strides = [1, 1]} : vector<512x128xf32> to vector<64x128xf32>
    %253 = arith.addf %251, %252 : vector<64x128xf32>
    %cst_216 = arith.constant 0.000000e+00 : f32
    %254 = vector.broadcast %cst_216 : f32 to vector<64x128xf32>
    %255 = arith.cmpf oge, %253, %254 : vector<64x128xf32>
    %cst_217 = arith.constant 0.00999999977 : f32
    %256 = vector.broadcast %cst_217 : f32 to vector<64x128xf32>
    %257 = arith.mulf %256, %253 : vector<64x128xf32>
    %258 = arith.select %255, %253, %257 : vector<64x128xi1>, vector<64x128xf32>
    %c2_218 = arith.constant 2 : index
    %c0_219 = arith.constant 0 : index
    %c0_220 = arith.constant 0 : index
    %c0_221 = arith.constant 0 : index
    %c0_222 = arith.constant 0 : index
    %259 = vector.load %arg14[%c2_218, %c0_219, %c0_220, %c0_221, %c0_222] : memref<4x2x2x64x64xf32, #tpu.memory_space<vmem>>, vector<1x1x1x64x64xf32>
    %260 = vector.shape_cast %259 : vector<1x1x1x64x64xf32> to vector<64x64xf32>
    %cst_223 = arith.constant dense<0.000000e+00> : vector<64x128xf32>
    %261 = tpu.matmul %260, %258, %cst_223 {dimension_numbers = #tpu.dot_dimension_numbers<[1], [0], [0], [1], [0, 0, 1, 1], [], []>} : vector<64x64xf32>, vector<64x128xf32>, vector<64x128xf32> -> vector<64x128xf32>
    %c2_224 = arith.constant 2 : index
    %c0_225 = arith.constant 0 : index
    %c0_226 = arith.constant 0 : index
    %c0_227 = arith.constant 0 : index
    %c0_228 = arith.constant 0 : index
    %262 = vector.load %arg15[%c2_224, %c0_225, %c0_226, %c0_227, %c0_228] : memref<4x2x2x64x1xf32, #tpu.memory_space<vmem>>, vector<1x1x1x64x1xf32>
    %263 = vector.shape_cast %262 : vector<1x1x1x64x1xf32> to vector<64x1xf32>
    %264 = vector.broadcast %263 : vector<64x1xf32> to vector<64x128xf32>
    %265 = arith.addf %261, %264 : vector<64x128xf32>
    %cst_229 = arith.constant 0.000000e+00 : f32
    %266 = vector.broadcast %cst_229 : f32 to vector<64x128xf32>
    %267 = arith.cmpf oge, %265, %266 : vector<64x128xf32>
    %cst_230 = arith.constant 0.00999999977 : f32
    %268 = vector.broadcast %cst_230 : f32 to vector<64x128xf32>
    %269 = arith.mulf %268, %265 : vector<64x128xf32>
    %270 = arith.select %267, %265, %269 : vector<64x128xi1>, vector<64x128xf32>
    %c2_231 = arith.constant 2 : index
    %c0_232 = arith.constant 0 : index
    %c1_233 = arith.constant 1 : index
    %c0_234 = arith.constant 0 : index
    %c0_235 = arith.constant 0 : index
    %271 = vector.load %arg14[%c2_231, %c0_232, %c1_233, %c0_234, %c0_235] : memref<4x2x2x64x64xf32, #tpu.memory_space<vmem>>, vector<1x1x1x64x64xf32>
    %272 = vector.shape_cast %271 : vector<1x1x1x64x64xf32> to vector<64x64xf32>
    %cst_236 = arith.constant dense<0.000000e+00> : vector<64x128xf32>
    %273 = tpu.matmul %272, %270, %cst_236 {dimension_numbers = #tpu.dot_dimension_numbers<[1], [0], [0], [1], [0, 0, 1, 1], [], []>} : vector<64x64xf32>, vector<64x128xf32>, vector<64x128xf32> -> vector<64x128xf32>
    %c2_237 = arith.constant 2 : index
    %c0_238 = arith.constant 0 : index
    %c1_239 = arith.constant 1 : index
    %c0_240 = arith.constant 0 : index
    %c0_241 = arith.constant 0 : index
    %274 = vector.load %arg15[%c2_237, %c0_238, %c1_239, %c0_240, %c0_241] : memref<4x2x2x64x1xf32, #tpu.memory_space<vmem>>, vector<1x1x1x64x1xf32>
    %275 = vector.shape_cast %274 : vector<1x1x1x64x1xf32> to vector<64x1xf32>
    %276 = vector.broadcast %275 : vector<64x1xf32> to vector<64x128xf32>
    %277 = arith.addf %273, %276 : vector<64x128xf32>
    %cst_242 = arith.constant 0.000000e+00 : f32
    %278 = vector.broadcast %cst_242 : f32 to vector<64x128xf32>
    %279 = arith.cmpf oge, %277, %278 : vector<64x128xf32>
    %cst_243 = arith.constant 0.00999999977 : f32
    %280 = vector.broadcast %cst_243 : f32 to vector<64x128xf32>
    %281 = arith.mulf %280, %277 : vector<64x128xf32>
    %282 = arith.select %279, %277, %281 : vector<64x128xi1>, vector<64x128xf32>
    %c2_244 = arith.constant 2 : index
    %c0_245 = arith.constant 0 : index
    %c0_246 = arith.constant 0 : index
    %c0_247 = arith.constant 0 : index
    %283 = vector.load %arg16[%c2_244, %c0_245, %c0_246, %c0_247] : memref<4x2x16x64xf32, #tpu.memory_space<vmem>>, vector<1x1x16x64xf32>
    %284 = vector.shape_cast %283 : vector<1x1x16x64xf32> to vector<16x64xf32>
    %cst_248 = arith.constant dense<0.000000e+00> : vector<16x128xf32>
    %285 = tpu.matmul %284, %282, %cst_248 {dimension_numbers = #tpu.dot_dimension_numbers<[1], [0], [0], [1], [0, 0, 1, 1], [], []>} : vector<16x64xf32>, vector<64x128xf32>, vector<16x128xf32> -> vector<16x128xf32>
    %c2_249 = arith.constant 2 : index
    %c0_250 = arith.constant 0 : index
    %c0_251 = arith.constant 0 : index
    %c0_252 = arith.constant 0 : index
    %286 = vector.load %arg17[%c2_249, %c0_250, %c0_251, %c0_252] : memref<4x2x16x1xf32, #tpu.memory_space<vmem>>, vector<1x1x16x1xf32>
    %287 = vector.shape_cast %286 : vector<1x1x16x1xf32> to vector<16x1xf32>
    %288 = vector.broadcast %287 : vector<16x1xf32> to vector<16x128xf32>
    %289 = arith.addf %285, %288 : vector<16x128xf32>
    %290 = vector.extract_strided_slice %289 {offsets = [0, 0], sizes = [8, 128], strides = [1, 1]} : vector<16x128xf32> to vector<8x128xf32>
    %291 = math.tanh %290 : vector<8x128xf32>
    %292 = vector.extract_strided_slice %289 {offsets = [8, 0], sizes = [8, 128], strides = [1, 1]} : vector<16x128xf32> to vector<8x128xf32>
    %293 = math.exp %291 : vector<8x128xf32>
    %294 = arith.mulf %248, %293 : vector<8x128xf32>
    %295 = arith.addf %294, %292 : vector<8x128xf32>
    %296 = arith.addf %240, %291 : vector<8x128xf32>
    %c2_253 = arith.constant 2 : index
    %c1_254 = arith.constant 1 : index
    %c0_255 = arith.constant 0 : index
    %c0_256 = arith.constant 0 : index
    %297 = vector.load %arg11[%c2_253, %c1_254, %c0_255, %c0_256] : memref<4x2x64x8xf32, #tpu.memory_space<vmem>>, vector<1x1x64x8xf32>
    %298 = vector.shape_cast %297 : vector<1x1x64x8xf32> to vector<64x8xf32>
    %cst_257 = arith.constant dense<0.000000e+00> : vector<64x128xf32>
    %299 = tpu.matmul %298, %295, %cst_257 {dimension_numbers = #tpu.dot_dimension_numbers<[1], [0], [0], [1], [0, 0, 1, 1], [], []>} : vector<64x8xf32>, vector<8x128xf32>, vector<64x128xf32> -> vector<64x128xf32>
    %300 = vector.extract_strided_slice %31 {offsets = [320, 0], sizes = [64, 128], strides = [1, 1]} : vector<512x128xf32> to vector<64x128xf32>
    %301 = arith.addf %299, %300 : vector<64x128xf32>
    %cst_258 = arith.constant 0.000000e+00 : f32
    %302 = vector.broadcast %cst_258 : f32 to vector<64x128xf32>
    %303 = arith.cmpf oge, %301, %302 : vector<64x128xf32>
    %cst_259 = arith.constant 0.00999999977 : f32
    %304 = vector.broadcast %cst_259 : f32 to vector<64x128xf32>
    %305 = arith.mulf %304, %301 : vector<64x128xf32>
    %306 = arith.select %303, %301, %305 : vector<64x128xi1>, vector<64x128xf32>
    %c2_260 = arith.constant 2 : index
    %c1_261 = arith.constant 1 : index
    %c0_262 = arith.constant 0 : index
    %c0_263 = arith.constant 0 : index
    %c0_264 = arith.constant 0 : index
    %307 = vector.load %arg14[%c2_260, %c1_261, %c0_262, %c0_263, %c0_264] : memref<4x2x2x64x64xf32, #tpu.memory_space<vmem>>, vector<1x1x1x64x64xf32>
    %308 = vector.shape_cast %307 : vector<1x1x1x64x64xf32> to vector<64x64xf32>
    %cst_265 = arith.constant dense<0.000000e+00> : vector<64x128xf32>
    %309 = tpu.matmul %308, %306, %cst_265 {dimension_numbers = #tpu.dot_dimension_numbers<[1], [0], [0], [1], [0, 0, 1, 1], [], []>} : vector<64x64xf32>, vector<64x128xf32>, vector<64x128xf32> -> vector<64x128xf32>
    %c2_266 = arith.constant 2 : index
    %c1_267 = arith.constant 1 : index
    %c0_268 = arith.constant 0 : index
    %c0_269 = arith.constant 0 : index
    %c0_270 = arith.constant 0 : index
    %310 = vector.load %arg15[%c2_266, %c1_267, %c0_268, %c0_269, %c0_270] : memref<4x2x2x64x1xf32, #tpu.memory_space<vmem>>, vector<1x1x1x64x1xf32>
    %311 = vector.shape_cast %310 : vector<1x1x1x64x1xf32> to vector<64x1xf32>
    %312 = vector.broadcast %311 : vector<64x1xf32> to vector<64x128xf32>
    %313 = arith.addf %309, %312 : vector<64x128xf32>
    %cst_271 = arith.constant 0.000000e+00 : f32
    %314 = vector.broadcast %cst_271 : f32 to vector<64x128xf32>
    %315 = arith.cmpf oge, %313, %314 : vector<64x128xf32>
    %cst_272 = arith.constant 0.00999999977 : f32
    %316 = vector.broadcast %cst_272 : f32 to vector<64x128xf32>
    %317 = arith.mulf %316, %313 : vector<64x128xf32>
    %318 = arith.select %315, %313, %317 : vector<64x128xi1>, vector<64x128xf32>
    %c2_273 = arith.constant 2 : index
    %c1_274 = arith.constant 1 : index
    %c1_275 = arith.constant 1 : index
    %c0_276 = arith.constant 0 : index
    %c0_277 = arith.constant 0 : index
    %319 = vector.load %arg14[%c2_273, %c1_274, %c1_275, %c0_276, %c0_277] : memref<4x2x2x64x64xf32, #tpu.memory_space<vmem>>, vector<1x1x1x64x64xf32>
    %320 = vector.shape_cast %319 : vector<1x1x1x64x64xf32> to vector<64x64xf32>
    %cst_278 = arith.constant dense<0.000000e+00> : vector<64x128xf32>
    %321 = tpu.matmul %320, %318, %cst_278 {dimension_numbers = #tpu.dot_dimension_numbers<[1], [0], [0], [1], [0, 0, 1, 1], [], []>} : vector<64x64xf32>, vector<64x128xf32>, vector<64x128xf32> -> vector<64x128xf32>
    %c2_279 = arith.constant 2 : index
    %c1_280 = arith.constant 1 : index
    %c1_281 = arith.constant 1 : index
    %c0_282 = arith.constant 0 : index
    %c0_283 = arith.constant 0 : index
    %322 = vector.load %arg15[%c2_279, %c1_280, %c1_281, %c0_282, %c0_283] : memref<4x2x2x64x1xf32, #tpu.memory_space<vmem>>, vector<1x1x1x64x1xf32>
    %323 = vector.shape_cast %322 : vector<1x1x1x64x1xf32> to vector<64x1xf32>
    %324 = vector.broadcast %323 : vector<64x1xf32> to vector<64x128xf32>
    %325 = arith.addf %321, %324 : vector<64x128xf32>
    %cst_284 = arith.constant 0.000000e+00 : f32
    %326 = vector.broadcast %cst_284 : f32 to vector<64x128xf32>
    %327 = arith.cmpf oge, %325, %326 : vector<64x128xf32>
    %cst_285 = arith.constant 0.00999999977 : f32
    %328 = vector.broadcast %cst_285 : f32 to vector<64x128xf32>
    %329 = arith.mulf %328, %325 : vector<64x128xf32>
    %330 = arith.select %327, %325, %329 : vector<64x128xi1>, vector<64x128xf32>
    %c2_286 = arith.constant 2 : index
    %c1_287 = arith.constant 1 : index
    %c0_288 = arith.constant 0 : index
    %c0_289 = arith.constant 0 : index
    %331 = vector.load %arg16[%c2_286, %c1_287, %c0_288, %c0_289] : memref<4x2x16x64xf32, #tpu.memory_space<vmem>>, vector<1x1x16x64xf32>
    %332 = vector.shape_cast %331 : vector<1x1x16x64xf32> to vector<16x64xf32>
    %cst_290 = arith.constant dense<0.000000e+00> : vector<16x128xf32>
    %333 = tpu.matmul %332, %330, %cst_290 {dimension_numbers = #tpu.dot_dimension_numbers<[1], [0], [0], [1], [0, 0, 1, 1], [], []>} : vector<16x64xf32>, vector<64x128xf32>, vector<16x128xf32> -> vector<16x128xf32>
    %c2_291 = arith.constant 2 : index
    %c1_292 = arith.constant 1 : index
    %c0_293 = arith.constant 0 : index
    %c0_294 = arith.constant 0 : index
    %334 = vector.load %arg17[%c2_291, %c1_292, %c0_293, %c0_294] : memref<4x2x16x1xf32, #tpu.memory_space<vmem>>, vector<1x1x16x1xf32>
    %335 = vector.shape_cast %334 : vector<1x1x16x1xf32> to vector<16x1xf32>
    %336 = vector.broadcast %335 : vector<16x1xf32> to vector<16x128xf32>
    %337 = arith.addf %333, %336 : vector<16x128xf32>
    %338 = vector.extract_strided_slice %337 {offsets = [0, 0], sizes = [8, 128], strides = [1, 1]} : vector<16x128xf32> to vector<8x128xf32>
    %339 = math.tanh %338 : vector<8x128xf32>
    %340 = vector.extract_strided_slice %337 {offsets = [8, 0], sizes = [8, 128], strides = [1, 1]} : vector<16x128xf32> to vector<8x128xf32>
    %341 = math.exp %339 : vector<8x128xf32>
    %342 = arith.mulf %295, %341 : vector<8x128xf32>
    %343 = arith.addf %342, %340 : vector<8x128xf32>
    %344 = arith.addf %296, %339 : vector<8x128xf32>
    %c3 = arith.constant 3 : index
    %c0_295 = arith.constant 0 : index
    %c0_296 = arith.constant 0 : index
    %345 = vector.load %arg10[%c3, %c0_295, %c0_296] : memref<4x8x1xf32, #tpu.memory_space<vmem>>, vector<1x8x1xf32>
    %346 = vector.shape_cast %345 : vector<1x8x1xf32> to vector<8x1xf32>
    %c3_297 = arith.constant 3 : index
    %c0_298 = arith.constant 0 : index
    %c0_299 = arith.constant 0 : index
    %347 = vector.load %arg9[%c3_297, %c0_298, %c0_299] : memref<4x8x1xf32, #tpu.memory_space<vmem>>, vector<1x8x1xf32>
    %348 = vector.shape_cast %347 : vector<1x8x1xf32> to vector<8x1xf32>
    %349 = vector.broadcast %348 : vector<8x1xf32> to vector<8x128xf32>
    %350 = arith.addf %343, %349 : vector<8x128xf32>
    %351 = vector.broadcast %346 : vector<8x1xf32> to vector<8x128xf32>
    %352 = arith.mulf %351, %350 : vector<8x128xf32>
    %c3_300 = arith.constant 3 : index
    %c0_301 = arith.constant 0 : index
    %c0_302 = arith.constant 0 : index
    %c0_303 = arith.constant 0 : index
    %353 = vector.load %arg11[%c3_300, %c0_301, %c0_302, %c0_303] : memref<4x2x64x8xf32, #tpu.memory_space<vmem>>, vector<1x1x64x8xf32>
    %354 = vector.shape_cast %353 : vector<1x1x64x8xf32> to vector<64x8xf32>
    %cst_304 = arith.constant dense<0.000000e+00> : vector<64x128xf32>
    %355 = tpu.matmul %354, %352, %cst_304 {dimension_numbers = #tpu.dot_dimension_numbers<[1], [0], [0], [1], [0, 0, 1, 1], [], []>} : vector<64x8xf32>, vector<8x128xf32>, vector<64x128xf32> -> vector<64x128xf32>
    %356 = vector.extract_strided_slice %31 {offsets = [384, 0], sizes = [64, 128], strides = [1, 1]} : vector<512x128xf32> to vector<64x128xf32>
    %357 = arith.addf %355, %356 : vector<64x128xf32>
    %cst_305 = arith.constant 0.000000e+00 : f32
    %358 = vector.broadcast %cst_305 : f32 to vector<64x128xf32>
    %359 = arith.cmpf oge, %357, %358 : vector<64x128xf32>
    %cst_306 = arith.constant 0.00999999977 : f32
    %360 = vector.broadcast %cst_306 : f32 to vector<64x128xf32>
    %361 = arith.mulf %360, %357 : vector<64x128xf32>
    %362 = arith.select %359, %357, %361 : vector<64x128xi1>, vector<64x128xf32>
    %c3_307 = arith.constant 3 : index
    %c0_308 = arith.constant 0 : index
    %c0_309 = arith.constant 0 : index
    %c0_310 = arith.constant 0 : index
    %c0_311 = arith.constant 0 : index
    %363 = vector.load %arg14[%c3_307, %c0_308, %c0_309, %c0_310, %c0_311] : memref<4x2x2x64x64xf32, #tpu.memory_space<vmem>>, vector<1x1x1x64x64xf32>
    %364 = vector.shape_cast %363 : vector<1x1x1x64x64xf32> to vector<64x64xf32>
    %cst_312 = arith.constant dense<0.000000e+00> : vector<64x128xf32>
    %365 = tpu.matmul %364, %362, %cst_312 {dimension_numbers = #tpu.dot_dimension_numbers<[1], [0], [0], [1], [0, 0, 1, 1], [], []>} : vector<64x64xf32>, vector<64x128xf32>, vector<64x128xf32> -> vector<64x128xf32>
    %c3_313 = arith.constant 3 : index
    %c0_314 = arith.constant 0 : index
    %c0_315 = arith.constant 0 : index
    %c0_316 = arith.constant 0 : index
    %c0_317 = arith.constant 0 : index
    %366 = vector.load %arg15[%c3_313, %c0_314, %c0_315, %c0_316, %c0_317] : memref<4x2x2x64x1xf32, #tpu.memory_space<vmem>>, vector<1x1x1x64x1xf32>
    %367 = vector.shape_cast %366 : vector<1x1x1x64x1xf32> to vector<64x1xf32>
    %368 = vector.broadcast %367 : vector<64x1xf32> to vector<64x128xf32>
    %369 = arith.addf %365, %368 : vector<64x128xf32>
    %cst_318 = arith.constant 0.000000e+00 : f32
    %370 = vector.broadcast %cst_318 : f32 to vector<64x128xf32>
    %371 = arith.cmpf oge, %369, %370 : vector<64x128xf32>
    %cst_319 = arith.constant 0.00999999977 : f32
    %372 = vector.broadcast %cst_319 : f32 to vector<64x128xf32>
    %373 = arith.mulf %372, %369 : vector<64x128xf32>
    %374 = arith.select %371, %369, %373 : vector<64x128xi1>, vector<64x128xf32>
    %c3_320 = arith.constant 3 : index
    %c0_321 = arith.constant 0 : index
    %c1_322 = arith.constant 1 : index
    %c0_323 = arith.constant 0 : index
    %c0_324 = arith.constant 0 : index
    %375 = vector.load %arg14[%c3_320, %c0_321, %c1_322, %c0_323, %c0_324] : memref<4x2x2x64x64xf32, #tpu.memory_space<vmem>>, vector<1x1x1x64x64xf32>
    %376 = vector.shape_cast %375 : vector<1x1x1x64x64xf32> to vector<64x64xf32>
    %cst_325 = arith.constant dense<0.000000e+00> : vector<64x128xf32>
    %377 = tpu.matmul %376, %374, %cst_325 {dimension_numbers = #tpu.dot_dimension_numbers<[1], [0], [0], [1], [0, 0, 1, 1], [], []>} : vector<64x64xf32>, vector<64x128xf32>, vector<64x128xf32> -> vector<64x128xf32>
    %c3_326 = arith.constant 3 : index
    %c0_327 = arith.constant 0 : index
    %c1_328 = arith.constant 1 : index
    %c0_329 = arith.constant 0 : index
    %c0_330 = arith.constant 0 : index
    %378 = vector.load %arg15[%c3_326, %c0_327, %c1_328, %c0_329, %c0_330] : memref<4x2x2x64x1xf32, #tpu.memory_space<vmem>>, vector<1x1x1x64x1xf32>
    %379 = vector.shape_cast %378 : vector<1x1x1x64x1xf32> to vector<64x1xf32>
    %380 = vector.broadcast %379 : vector<64x1xf32> to vector<64x128xf32>
    %381 = arith.addf %377, %380 : vector<64x128xf32>
    %cst_331 = arith.constant 0.000000e+00 : f32
    %382 = vector.broadcast %cst_331 : f32 to vector<64x128xf32>
    %383 = arith.cmpf oge, %381, %382 : vector<64x128xf32>
    %cst_332 = arith.constant 0.00999999977 : f32
    %384 = vector.broadcast %cst_332 : f32 to vector<64x128xf32>
    %385 = arith.mulf %384, %381 : vector<64x128xf32>
    %386 = arith.select %383, %381, %385 : vector<64x128xi1>, vector<64x128xf32>
    %c3_333 = arith.constant 3 : index
    %c0_334 = arith.constant 0 : index
    %c0_335 = arith.constant 0 : index
    %c0_336 = arith.constant 0 : index
    %387 = vector.load %arg16[%c3_333, %c0_334, %c0_335, %c0_336] : memref<4x2x16x64xf32, #tpu.memory_space<vmem>>, vector<1x1x16x64xf32>
    %388 = vector.shape_cast %387 : vector<1x1x16x64xf32> to vector<16x64xf32>
    %cst_337 = arith.constant dense<0.000000e+00> : vector<16x128xf32>
    %389 = tpu.matmul %388, %386, %cst_337 {dimension_numbers = #tpu.dot_dimension_numbers<[1], [0], [0], [1], [0, 0, 1, 1], [], []>} : vector<16x64xf32>, vector<64x128xf32>, vector<16x128xf32> -> vector<16x128xf32>
    %c3_338 = arith.constant 3 : index
    %c0_339 = arith.constant 0 : index
    %c0_340 = arith.constant 0 : index
    %c0_341 = arith.constant 0 : index
    %390 = vector.load %arg17[%c3_338, %c0_339, %c0_340, %c0_341] : memref<4x2x16x1xf32, #tpu.memory_space<vmem>>, vector<1x1x16x1xf32>
    %391 = vector.shape_cast %390 : vector<1x1x16x1xf32> to vector<16x1xf32>
    %392 = vector.broadcast %391 : vector<16x1xf32> to vector<16x128xf32>
    %393 = arith.addf %389, %392 : vector<16x128xf32>
    %394 = vector.extract_strided_slice %393 {offsets = [0, 0], sizes = [8, 128], strides = [1, 1]} : vector<16x128xf32> to vector<8x128xf32>
    %395 = math.tanh %394 : vector<8x128xf32>
    %396 = vector.extract_strided_slice %393 {offsets = [8, 0], sizes = [8, 128], strides = [1, 1]} : vector<16x128xf32> to vector<8x128xf32>
    %397 = math.exp %395 : vector<8x128xf32>
    %398 = arith.mulf %352, %397 : vector<8x128xf32>
    %399 = arith.addf %398, %396 : vector<8x128xf32>
    %400 = arith.addf %344, %395 : vector<8x128xf32>
    %c3_342 = arith.constant 3 : index
    %c1_343 = arith.constant 1 : index
    %c0_344 = arith.constant 0 : index
    %c0_345 = arith.constant 0 : index
    %401 = vector.load %arg11[%c3_342, %c1_343, %c0_344, %c0_345] : memref<4x2x64x8xf32, #tpu.memory_space<vmem>>, vector<1x1x64x8xf32>
    %402 = vector.shape_cast %401 : vector<1x1x64x8xf32> to vector<64x8xf32>
    %cst_346 = arith.constant dense<0.000000e+00> : vector<64x128xf32>
    %403 = tpu.matmul %402, %399, %cst_346 {dimension_numbers = #tpu.dot_dimension_numbers<[1], [0], [0], [1], [0, 0, 1, 1], [], []>} : vector<64x8xf32>, vector<8x128xf32>, vector<64x128xf32> -> vector<64x128xf32>
    %404 = vector.extract_strided_slice %31 {offsets = [448, 0], sizes = [64, 128], strides = [1, 1]} : vector<512x128xf32> to vector<64x128xf32>
    %405 = arith.addf %403, %404 : vector<64x128xf32>
    %cst_347 = arith.constant 0.000000e+00 : f32
    %406 = vector.broadcast %cst_347 : f32 to vector<64x128xf32>
    %407 = arith.cmpf oge, %405, %406 : vector<64x128xf32>
    %cst_348 = arith.constant 0.00999999977 : f32
    %408 = vector.broadcast %cst_348 : f32 to vector<64x128xf32>
    %409 = arith.mulf %408, %405 : vector<64x128xf32>
    %410 = arith.select %407, %405, %409 : vector<64x128xi1>, vector<64x128xf32>
    %c3_349 = arith.constant 3 : index
    %c1_350 = arith.constant 1 : index
    %c0_351 = arith.constant 0 : index
    %c0_352 = arith.constant 0 : index
    %c0_353 = arith.constant 0 : index
    %411 = vector.load %arg14[%c3_349, %c1_350, %c0_351, %c0_352, %c0_353] : memref<4x2x2x64x64xf32, #tpu.memory_space<vmem>>, vector<1x1x1x64x64xf32>
    %412 = vector.shape_cast %411 : vector<1x1x1x64x64xf32> to vector<64x64xf32>
    %cst_354 = arith.constant dense<0.000000e+00> : vector<64x128xf32>
    %413 = tpu.matmul %412, %410, %cst_354 {dimension_numbers = #tpu.dot_dimension_numbers<[1], [0], [0], [1], [0, 0, 1, 1], [], []>} : vector<64x64xf32>, vector<64x128xf32>, vector<64x128xf32> -> vector<64x128xf32>
    %c3_355 = arith.constant 3 : index
    %c1_356 = arith.constant 1 : index
    %c0_357 = arith.constant 0 : index
    %c0_358 = arith.constant 0 : index
    %c0_359 = arith.constant 0 : index
    %414 = vector.load %arg15[%c3_355, %c1_356, %c0_357, %c0_358, %c0_359] : memref<4x2x2x64x1xf32, #tpu.memory_space<vmem>>, vector<1x1x1x64x1xf32>
    %415 = vector.shape_cast %414 : vector<1x1x1x64x1xf32> to vector<64x1xf32>
    %416 = vector.broadcast %415 : vector<64x1xf32> to vector<64x128xf32>
    %417 = arith.addf %413, %416 : vector<64x128xf32>
    %cst_360 = arith.constant 0.000000e+00 : f32
    %418 = vector.broadcast %cst_360 : f32 to vector<64x128xf32>
    %419 = arith.cmpf oge, %417, %418 : vector<64x128xf32>
    %cst_361 = arith.constant 0.00999999977 : f32
    %420 = vector.broadcast %cst_361 : f32 to vector<64x128xf32>
    %421 = arith.mulf %420, %417 : vector<64x128xf32>
    %422 = arith.select %419, %417, %421 : vector<64x128xi1>, vector<64x128xf32>
    %c3_362 = arith.constant 3 : index
    %c1_363 = arith.constant 1 : index
    %c1_364 = arith.constant 1 : index
    %c0_365 = arith.constant 0 : index
    %c0_366 = arith.constant 0 : index
    %423 = vector.load %arg14[%c3_362, %c1_363, %c1_364, %c0_365, %c0_366] : memref<4x2x2x64x64xf32, #tpu.memory_space<vmem>>, vector<1x1x1x64x64xf32>
    %424 = vector.shape_cast %423 : vector<1x1x1x64x64xf32> to vector<64x64xf32>
    %cst_367 = arith.constant dense<0.000000e+00> : vector<64x128xf32>
    %425 = tpu.matmul %424, %422, %cst_367 {dimension_numbers = #tpu.dot_dimension_numbers<[1], [0], [0], [1], [0, 0, 1, 1], [], []>} : vector<64x64xf32>, vector<64x128xf32>, vector<64x128xf32> -> vector<64x128xf32>
    %c3_368 = arith.constant 3 : index
    %c1_369 = arith.constant 1 : index
    %c1_370 = arith.constant 1 : index
    %c0_371 = arith.constant 0 : index
    %c0_372 = arith.constant 0 : index
    %426 = vector.load %arg15[%c3_368, %c1_369, %c1_370, %c0_371, %c0_372] : memref<4x2x2x64x1xf32, #tpu.memory_space<vmem>>, vector<1x1x1x64x1xf32>
    %427 = vector.shape_cast %426 : vector<1x1x1x64x1xf32> to vector<64x1xf32>
    %428 = vector.broadcast %427 : vector<64x1xf32> to vector<64x128xf32>
    %429 = arith.addf %425, %428 : vector<64x128xf32>
    %cst_373 = arith.constant 0.000000e+00 : f32
    %430 = vector.broadcast %cst_373 : f32 to vector<64x128xf32>
    %431 = arith.cmpf oge, %429, %430 : vector<64x128xf32>
    %cst_374 = arith.constant 0.00999999977 : f32
    %432 = vector.broadcast %cst_374 : f32 to vector<64x128xf32>
    %433 = arith.mulf %432, %429 : vector<64x128xf32>
    %434 = arith.select %431, %429, %433 : vector<64x128xi1>, vector<64x128xf32>
    %c3_375 = arith.constant 3 : index
    %c1_376 = arith.constant 1 : index
    %c0_377 = arith.constant 0 : index
    %c0_378 = arith.constant 0 : index
    %435 = vector.load %arg16[%c3_375, %c1_376, %c0_377, %c0_378] : memref<4x2x16x64xf32, #tpu.memory_space<vmem>>, vector<1x1x16x64xf32>
    %436 = vector.shape_cast %435 : vector<1x1x16x64xf32> to vector<16x64xf32>
    %cst_379 = arith.constant dense<0.000000e+00> : vector<16x128xf32>
    %437 = tpu.matmul %436, %434, %cst_379 {dimension_numbers = #tpu.dot_dimension_numbers<[1], [0], [0], [1], [0, 0, 1, 1], [], []>} : vector<16x64xf32>, vector<64x128xf32>, vector<16x128xf32> -> vector<16x128xf32>
    %c3_380 = arith.constant 3 : index
    %c1_381 = arith.constant 1 : index
    %c0_382 = arith.constant 0 : index
    %c0_383 = arith.constant 0 : index
    %438 = vector.load %arg17[%c3_380, %c1_381, %c0_382, %c0_383] : memref<4x2x16x1xf32, #tpu.memory_space<vmem>>, vector<1x1x16x1xf32>
    %439 = vector.shape_cast %438 : vector<1x1x16x1xf32> to vector<16x1xf32>
    %440 = vector.broadcast %439 : vector<16x1xf32> to vector<16x128xf32>
    %441 = arith.addf %437, %440 : vector<16x128xf32>
    %442 = vector.extract_strided_slice %441 {offsets = [0, 0], sizes = [8, 128], strides = [1, 1]} : vector<16x128xf32> to vector<8x128xf32>
    %443 = math.tanh %442 : vector<8x128xf32>
    %444 = vector.extract_strided_slice %441 {offsets = [8, 0], sizes = [8, 128], strides = [1, 1]} : vector<16x128xf32> to vector<8x128xf32>
    %445 = math.exp %443 : vector<8x128xf32>
    %446 = arith.mulf %399, %445 : vector<8x128xf32>
    %447 = arith.addf %446, %444 : vector<8x128xf32>
    %448 = arith.addf %400, %443 : vector<8x128xf32>
    %449 = tpu.concatenate %447, %448 in 0 : vector<8x128xf32>, vector<8x128xf32> -> vector<16x128xf32>
    %c0_384 = arith.constant 0 : index
    %c0_385 = arith.constant 0 : index
    %450 = vector.load %arg18[%c0_384, %c0_385] : memref<16x128xf32, #tpu.memory_space<vmem>>, vector<16x128xf32>
    tpu.vector_store %arg18[%c0_384, %c0_385], %449 {strides = array<i32>} : memref<16x128xf32, #tpu.memory_space<vmem>>, vector<16x128xf32>,
    return
  }
  func.func @transform_0(%arg0: i32) -> (i32, i32) {
    %c0_i32 = arith.constant 0 : i32
    %c0_i32_0 = arith.constant 0 : i32
    return %c0_i32, %arg0 : i32, i32
  }
  func.func @transform_1(%arg0: i32) -> (i32, i32) {
    %c0_i32 = arith.constant 0 : i32
    %c0_i32_0 = arith.constant 0 : i32
    return %c0_i32, %arg0 : i32, i32
  }
  func.func @transform_2(%arg0: i32) -> (i32, i32) {
    %c0_i32 = arith.constant 0 : i32
    %c0_i32_0 = arith.constant 0 : i32
    %c0_i32_1 = arith.constant 0 : i32
    return %c0_i32, %c0_i32_0 : i32, i32
  }
  func.func @transform_3(%arg0: i32) -> (i32, i32) {
    %c0_i32 = arith.constant 0 : i32
    %c0_i32_0 = arith.constant 0 : i32
    %c0_i32_1 = arith.constant 0 : i32
    return %c0_i32, %c0_i32_0 : i32, i32
  }
  func.func @transform_4(%arg0: i32) -> (i32, i32) {
    %c0_i32 = arith.constant 0 : i32
    %c0_i32_0 = arith.constant 0 : i32
    %c0_i32_1 = arith.constant 0 : i32
    return %c0_i32, %c0_i32_0 : i32, i32
  }
  func.func @transform_5(%arg0: i32) -> (i32, i32) {
    %c0_i32 = arith.constant 0 : i32
    %c0_i32_0 = arith.constant 0 : i32
    %c0_i32_1 = arith.constant 0 : i32
    return %c0_i32, %c0_i32_0 : i32, i32
  }
  func.func @transform_6(%arg0: i32) -> (i32, i32) {
    %c0_i32 = arith.constant 0 : i32
    %c0_i32_0 = arith.constant 0 : i32
    %c0_i32_1 = arith.constant 0 : i32
    return %c0_i32, %c0_i32_0 : i32, i32
  }
  func.func @transform_7(%arg0: i32) -> (i32, i32) {
    %c0_i32 = arith.constant 0 : i32
    %c0_i32_0 = arith.constant 0 : i32
    %c0_i32_1 = arith.constant 0 : i32
    return %c0_i32, %c0_i32_0 : i32, i32
  }
  func.func @transform_8(%arg0: i32) -> (i32, i32, i32) {
    %c0_i32 = arith.constant 0 : i32
    %c0_i32_0 = arith.constant 0 : i32
    %c0_i32_1 = arith.constant 0 : i32
    %c0_i32_2 = arith.constant 0 : i32
    return %c0_i32, %c0_i32_0, %c0_i32_1 : i32, i32, i32
  }
  func.func @transform_9(%arg0: i32) -> (i32, i32, i32) {
    %c0_i32 = arith.constant 0 : i32
    %c0_i32_0 = arith.constant 0 : i32
    %c0_i32_1 = arith.constant 0 : i32
    %c0_i32_2 = arith.constant 0 : i32
    return %c0_i32, %c0_i32_0, %c0_i32_1 : i32, i32, i32
  }
  func.func @transform_10(%arg0: i32) -> (i32, i32, i32, i32) {
    %c0_i32 = arith.constant 0 : i32
    %c0_i32_0 = arith.constant 0 : i32
    %c0_i32_1 = arith.constant 0 : i32
    %c0_i32_2 = arith.constant 0 : i32
    %c0_i32_3 = arith.constant 0 : i32
    return %c0_i32, %c0_i32_0, %c0_i32_1, %c0_i32_2 : i32, i32, i32, i32
  }
  func.func @transform_11(%arg0: i32) -> (i32, i32) {
    %c0_i32 = arith.constant 0 : i32
    %c0_i32_0 = arith.constant 0 : i32
    %c0_i32_1 = arith.constant 0 : i32
    return %c0_i32, %c0_i32_0 : i32, i32
  }
  func.func @transform_12(%arg0: i32) -> (i32, i32) {
    %c0_i32 = arith.constant 0 : i32
    %c0_i32_0 = arith.constant 0 : i32
    %c0_i32_1 = arith.constant 0 : i32
    return %c0_i32, %c0_i32_0 : i32, i32
  }
  func.func @transform_13(%arg0: i32) -> (i32, i32, i32, i32, i32) {
    %c0_i32 = arith.constant 0 : i32
    %c0_i32_0 = arith.constant 0 : i32
    %c0_i32_1 = arith.constant 0 : i32
    %c0_i32_2 = arith.constant 0 : i32
    %c0_i32_3 = arith.constant 0 : i32
    %c0_i32_4 = arith.constant 0 : i32
    return %c0_i32, %c0_i32_0, %c0_i32_1, %c0_i32_2, %c0_i32_3 : i32, i32, i32, i32, i32
  }
  func.func @transform_14(%arg0: i32) -> (i32, i32, i32, i32, i32) {
    %c0_i32 = arith.constant 0 : i32
    %c0_i32_0 = arith.constant 0 : i32
    %c0_i32_1 = arith.constant 0 : i32
    %c0_i32_2 = arith.constant 0 : i32
    %c0_i32_3 = arith.constant 0 : i32
    %c0_i32_4 = arith.constant 0 : i32
    return %c0_i32, %c0_i32_0, %c0_i32_1, %c0_i32_2, %c0_i32_3 : i32, i32, i32, i32, i32
  }
  func.func @transform_15(%arg0: i32) -> (i32, i32, i32, i32) {
    %c0_i32 = arith.constant 0 : i32
    %c0_i32_0 = arith.constant 0 : i32
    %c0_i32_1 = arith.constant 0 : i32
    %c0_i32_2 = arith.constant 0 : i32
    %c0_i32_3 = arith.constant 0 : i32
    return %c0_i32, %c0_i32_0, %c0_i32_1, %c0_i32_2 : i32, i32, i32, i32
  }
  func.func @transform_16(%arg0: i32) -> (i32, i32, i32, i32) {
    %c0_i32 = arith.constant 0 : i32
    %c0_i32_0 = arith.constant 0 : i32
    %c0_i32_1 = arith.constant 0 : i32
    %c0_i32_2 = arith.constant 0 : i32
    %c0_i32_3 = arith.constant 0 : i32
    return %c0_i32, %c0_i32_0, %c0_i32_1, %c0_i32_2 : i32, i32, i32, i32
  }
  func.func @transform_17(%arg0: i32) -> (i32, i32) {
    %c0_i32 = arith.constant 0 : i32
    %c0_i32_0 = arith.constant 0 : i32
    return %c0_i32, %arg0 : i32, i32
  }
}

</mosaic_0001>

<llo_original>
// kernel: tpu_custom_call.1
$region0: #{tpu_custom_call.1}
  #allocation0 [shape = 'u32[]', space=smem, size = 0x4, offset = 0x4, fixed_abs, tag = 'smem constant byte address 0x4 - core index']
  #allocation1 [shape = 'u32[72,128]{1,0:T(1,128)}', space=vmem, size = 0x9000, scoped, tag = 'internal scratch']
  %s0 = inlined_call_operand.vmem [shape: f32[8,384], index: 0, kind: input, shape index: {}]
  %s1 = inlined_call_operand.vmem [shape: f32[16,384], index: 1, kind: input, shape index: {}]
  %s2 = inlined_call_operand.vmem [shape: f32[32,16], index: 2, kind: input, shape index: {}]
  %s3 = inlined_call_operand.vmem [shape: f32[32,1], index: 3, kind: input, shape index: {}]
  %s4 = inlined_call_operand.vmem [shape: f32[32,32], index: 4, kind: input, shape index: {}]
  %s5 = inlined_call_operand.vmem [shape: f32[32,1], index: 5, kind: input, shape index: {}]
  %s6 = inlined_call_operand.vmem [shape: f32[8,32], index: 6, kind: input, shape index: {}]
  %s7 = inlined_call_operand.vmem [shape: f32[8,1], index: 7, kind: input, shape index: {}]
  %s8 = inlined_call_operand.vmem [shape: f32[4,8,1], index: 8, kind: input, shape index: {}]
  %s9 = inlined_call_operand.vmem [shape: f32[4,8,1], index: 9, kind: input, shape index: {}]
  %s10 = inlined_call_operand.vmem [shape: f32[4,2,64,8], index: 10, kind: input, shape index: {}]
  %s11 = inlined_call_operand.vmem [shape: f32[512,8], index: 11, kind: input, shape index: {}]
  %s12 = inlined_call_operand.vmem [shape: f32[512,1], index: 12, kind: input, shape index: {}]
  %s13 = inlined_call_operand.vmem [shape: f32[4,2,2,64,64], index: 13, kind: input, shape index: {}]
  %s14 = inlined_call_operand.vmem [shape: f32[4,2,2,64,1], index: 14, kind: input, shape index: {}]
  %s15 = inlined_call_operand.vmem [shape: f32[4,2,16,64], index: 15, kind: input, shape index: {}]
  %s16 = inlined_call_operand.vmem [shape: f32[4,2,16,1], index: 16, kind: input, shape index: {}]
  %s17 = inlined_call_operand.hbm [shape: f32[16,384], index: 17, kind: output, shape index: {}]
  %s18 = sld [smem:[#allocation0]]
  $region139: #{tpu_custom_call.1} parent=0
    _
  %s20 = ssub.s32 1, %s18
  %s21 = scalar_select 0, %s20, %s18
  $region1: #{tpu_custom_call.1} parent=0
    #allocation2 [shape = 'u8[16384]{0}', space=vmem, size = 0x4000, scoped, tag = 'input window, operand 1']
    #allocation3 [shape = 'u8[16384]{0}', space=vmem, size = 0x4000, scoped, tag = 'output window, operand 0']
    #allocation4 [shape = 's32[2]{0}', space=sflag, size = 0x8, scoped, tag = 'scoped memory for tpu_custom_call.1']
    %22 = vsyncpa [#allocation4], 0
    %s23 = scalar_lea.sflag [#allocation4], 1
    %24 = vsyncpa %s23, 0
    loop: start=0, step=1, limit=5
    $region2: #{tpu_custom_call.1} parent=1 // loop_pre_header
      _
    $region3: #{tpu_custom_call.1} parent=1 // loop_header
      %s26 = sphi 0, %s30
      %p27 = scmp.ge.s32.totalorder %s26, 5
      %s36 = sphi 0, %s38
      %s39 = sphi 0, %s36
      %s40 = sphi 0, %s39
      %s56 = sphi 0, %s40
      %s62 = sphi 0, %s64
      %s65 = sphi 0, %s62
      %s66 = sphi 0, %s65
      %s82 = sphi 0, %s66
      %s86 = sphi 0, %s86
      %s88 = sphi 0, %s86
      %s89 = sphi 0, %s88
      %s103 = sphi 0, %s89
      %s107 = sphi 0, %s107
      %s109 = sphi 0, %s107
      %s110 = sphi 0, %s109
      %s124 = sphi 0, %s110
      %s128 = sphi 0, %s128
      %s130 = sphi 0, %s128
      %s131 = sphi 0, %s130
      %s145 = sphi 0, %s131
      %s149 = sphi 0, %s149
      %s151 = sphi 0, %s149
      %s152 = sphi 0, %s151
      %s166 = sphi 0, %s152
      %s170 = sphi 0, %s170
      %s172 = sphi 0, %s170
      %s173 = sphi 0, %s172
      %s187 = sphi 0, %s173
      %s191 = sphi 0, %s191
      %s193 = sphi 0, %s191
      %s194 = sphi 0, %s193
      %s208 = sphi 0, %s194
      %s212 = sphi 0, %s212
      %s214 = sphi 0, %s212
      %s215 = sphi 0, %s214
      %s229 = sphi 0, %s215
      %s233 = sphi 0, %s233
      %s235 = sphi 0, %s233
      %s236 = sphi 0, %s235
      %s250 = sphi 0, %s236
      %s254 = sphi 0, %s254
      %s256 = sphi 0, %s254
      %s257 = sphi 0, %s256
      %s271 = sphi 0, %s257
      %s275 = sphi 0, %s275
      %s277 = sphi 0, %s275
      %s278 = sphi 0, %s277
      %s292 = sphi 0, %s278
      %s296 = sphi 0, %s296
      %s298 = sphi 0, %s296
      %s299 = sphi 0, %s298
      %s313 = sphi 0, %s299
      %s317 = sphi 0, %s317
      %s319 = sphi 0, %s317
      %s320 = sphi 0, %s319
      %s334 = sphi 0, %s320
      %s338 = sphi 0, %s338
      %s340 = sphi 0, %s338
      %s341 = sphi 0, %s340
      %s355 = sphi 0, %s341
      %s359 = sphi 0, %s359
      %s361 = sphi 0, %s359
      %s362 = sphi 0, %s361
      %s376 = sphi 0, %s362
      %s380 = sphi 0, %s380
      %s382 = sphi 0, %s380
      %s383 = sphi 0, %s382
      %s397 = sphi 0, %s383
      %s403 = sphi 0, %s405
      %s406 = sphi 0, %s403
      %s407 = sphi 0, %s406
      %s423 = sphi 0, %s407
    $region4: #{tpu_custom_call.1} parent=1 // loop_header_branch
      %29 = sbr.rel (%p27) target = $region8
    $region5: #{tpu_custom_call.1} parent=1 // loop_body
      %s31 = ssub.s32 %s26, 1
      %s32 = ssub.s32 %s26, 2
      %s33 = sadd.s32 %s26, 1
      %s34 = ssub.s32 %s26, %s33
      %p35 = scmp.eq.s32.totalorder %s34, 0
      %s37 = sadd.s32 %s36, 1
      %s38 = scalar_select %p35, %s36, %s37
      %p41 = pneg %p35
      %p42 = scmp.eq.s32.totalorder %s26, 2
      %p43 = por %p41, %p42
      %p44 = scmp.ne.s32.totalorder %s36, %s39
      %p45 = scmp.eq.s32.totalorder %s26, 0
      %p46 = por %p44, %p45
      %p47 = scmp.ne.s32.totalorder %s36, %s39
      %p48 = scmp.eq.s32.totalorder %s31, 2
      %p49 = por %p47, %p48
      %p50 = scmp.ne.s32.totalorder %s39, %s40
      %p51 = scmp.eq.s32.totalorder %s31, 0
      %p52 = por %p50, %p51
      %p53 = scmp.ne.s32.totalorder %s39, %s40
      %p54 = scmp.eq.s32.totalorder %s32, 2
      %p55 = por %p53, %p54
      %p57 = scmp.ne.s32.totalorder %s40, %s56
      %p58 = scmp.eq.s32.totalorder %s32, 0
      %p59 = por %p57, %p58
      %s60 = ssub.s32 %s26, %s33
      %p61 = scmp.eq.s32.totalorder %s60, 0
      %s63 = sadd.s32 %s62, 1
      %s64 = scalar_select %p61, %s62, %s63
      %p67 = pneg %p61
      %p68 = scmp.eq.s32.totalorder %s26, 2
      %p69 = por %p67, %p68
      %p70 = scmp.ne.s32.totalorder %s62, %s65
      %p71 = scmp.eq.s32.totalorder %s26, 0
      %p72 = por %p70, %p71
      %p73 = scmp.ne.s32.totalorder %s62, %s65
      %p74 = scmp.eq.s32.totalorder %s31, 2
      %p75 = por %p73, %p74
      %p76 = scmp.ne.s32.totalorder %s65, %s66
      %p77 = scmp.eq.s32.totalorder %s31, 0
      %p78 = por %p76, %p77
      %p79 = scmp.ne.s32.totalorder %s65, %s66
      %p80 = scmp.eq.s32.totalorder %s32, 2
      %p81 = por %p79, %p80
      %p83 = scmp.ne.s32.totalorder %s66, %s82
      %p84 = scmp.eq.s32.totalorder %s32, 0
      %p85 = por %p83, %p84
      %s87 = sadd.s32 %s86, 1
      %p90 = scmp.eq.s32.totalorder %s26, 2
      %p91 = scmp.ne.s32.totalorder %s86, %s88
      %p92 = scmp.eq.s32.totalorder %s26, 0
      %p93 = por %p91, %p92
      %p94 = scmp.ne.s32.totalorder %s86, %s88
      %p95 = scmp.eq.s32.totalorder %s31, 2
      %p96 = por %p94, %p95
      %p97 = scmp.ne.s32.totalorder %s88, %s89
      %p98 = scmp.eq.s32.totalorder %s31, 0
      %p99 = por %p97, %p98
      %p100 = scmp.ne.s32.totalorder %s88, %s89
      %p101 = scmp.eq.s32.totalorder %s32, 2
      %p102 = por %p100, %p101
      %p104 = scmp.ne.s32.totalorder %s89, %s103
      %p105 = scmp.eq.s32.totalorder %s32, 0
      %p106 = por %p104, %p105
      %s108 = sadd.s32 %s107, 1
      %p111 = scmp.eq.s32.totalorder %s26, 2
      %p112 = scmp.ne.s32.totalorder %s107, %s109
      %p113 = scmp.eq.s32.totalorder %s26, 0
      %p114 = por %p112, %p113
      %p115 = scmp.ne.s32.totalorder %s107, %s109
      %p116 = scmp.eq.s32.totalorder %s31, 2
      %p117 = por %p115, %p116
      %p118 = scmp.ne.s32.totalorder %s109, %s110
      %p119 = scmp.eq.s32.totalorder %s31, 0
      %p120 = por %p118, %p119
      %p121 = scmp.ne.s32.totalorder %s109, %s110
      %p122 = scmp.eq.s32.totalorder %s32, 2
      %p123 = por %p121, %p122
      %p125 = scmp.ne.s32.totalorder %s110, %s124
      %p126 = scmp.eq.s32.totalorder %s32, 0
      %p127 = por %p125, %p126
      %s129 = sadd.s32 %s128, 1
      %p132 = scmp.eq.s32.totalorder %s26, 2
      %p133 = scmp.ne.s32.totalorder %s128, %s130
      %p134 = scmp.eq.s32.totalorder %s26, 0
      %p135 = por %p133, %p134
      %p136 = scmp.ne.s32.totalorder %s128, %s130
      %p137 = scmp.eq.s32.totalorder %s31, 2
      %p138 = por %p136, %p137
      %p139 = scmp.ne.s32.totalorder %s130, %s131
      %p140 = scmp.eq.s32.totalorder %s31, 0
      %p141 = por %p139, %p140
      %p142 = scmp.ne.s32.totalorder %s130, %s131
      %p143 = scmp.eq.s32.totalorder %s32, 2
      %p144 = por %p142, %p143
      %p146 = scmp.ne.s32.totalorder %s131, %s145
      %p147 = scmp.eq.s32.totalorder %s32, 0
      %p148 = por %p146, %p147
      %s150 = sadd.s32 %s149, 1
      %p153 = scmp.eq.s32.totalorder %s26, 2
      %p154 = scmp.ne.s32.totalorder %s149, %s151
      %p155 = scmp.eq.s32.totalorder %s26, 0
      %p156 = por %p154, %p155
      %p157 = scmp.ne.s32.totalorder %s149, %s151
      %p158 = scmp.eq.s32.totalorder %s31, 2
      %p159 = por %p157, %p158
      %p160 = scmp.ne.s32.totalorder %s151, %s152
      %p161 = scmp.eq.s32.totalorder %s31, 0
      %p162 = por %p160, %p161
      %p163 = scmp.ne.s32.totalorder %s151, %s152
      %p164 = scmp.eq.s32.totalorder %s32, 2
      %p165 = por %p163, %p164
      %p167 = scmp.ne.s32.totalorder %s152, %s166
      %p168 = scmp.eq.s32.totalorder %s32, 0
      %p169 = por %p167, %p168
      %s171 = sadd.s32 %s170, 1
      %p174 = scmp.eq.s32.totalorder %s26, 2
      %p175 = scmp.ne.s32.totalorder %s170, %s172
      %p176 = scmp.eq.s32.totalorder %s26, 0
      %p177 = por %p175, %p176
      %p178 = scmp.ne.s32.totalorder %s170, %s172
      %p179 = scmp.eq.s32.totalorder %s31, 2
      %p180 = por %p178, %p179
      %p181 = scmp.ne.s32.totalorder %s172, %s173
      %p182 = scmp.eq.s32.totalorder %s31, 0
      %p183 = por %p181, %p182
      %p184 = scmp.ne.s32.totalorder %s172, %s173
      %p185 = scmp.eq.s32.totalorder %s32, 2
      %p186 = por %p184, %p185
      %p188 = scmp.ne.s32.totalorder %s173, %s187
      %p189 = scmp.eq.s32.totalorder %s32, 0
      %p190 = por %p188, %p189
      %s192 = sadd.s32 %s191, 1
      %p195 = scmp.eq.s32.totalorder %s26, 2
      %p196 = scmp.ne.s32.totalorder %s191, %s193
      %p197 = scmp.eq.s32.totalorder %s26, 0
      %p198 = por %p196, %p197
      %p199 = scmp.ne.s32.totalorder %s191, %s193
      %p200 = scmp.eq.s32.totalorder %s31, 2
      %p201 = por %p199, %p200
      %p202 = scmp.ne.s32.totalorder %s193, %s194
      %p203 = scmp.eq.s32.totalorder %s31, 0
      %p204 = por %p202, %p203
      %p205 = scmp.ne.s32.totalorder %s193, %s194
      %p206 = scmp.eq.s32.totalorder %s32, 2
      %p207 = por %p205, %p206
      %p209 = scmp.ne.s32.totalorder %s194, %s208
      %p210 = scmp.eq.s32.totalorder %s32, 0
      %p211 = por %p209, %p210
      %s213 = sadd.s32 %s212, 1
      %p216 = scmp.eq.s32.totalorder %s26, 2
      %p217 = scmp.ne.s32.totalorder %s212, %s214
      %p218 = scmp.eq.s32.totalorder %s26, 0
      %p219 = por %p217, %p218
      %p220 = scmp.ne.s32.totalorder %s212, %s214
      %p221 = scmp.eq.s32.totalorder %s31, 2
      %p222 = por %p220, %p221
      %p223 = scmp.ne.s32.totalorder %s214, %s215
      %p224 = scmp.eq.s32.totalorder %s31, 0
      %p225 = por %p223, %p224
      %p226 = scmp.ne.s32.totalorder %s214, %s215
      %p227 = scmp.eq.s32.totalorder %s32, 2
      %p228 = por %p226, %p227
      %p230 = scmp.ne.s32.totalorder %s215, %s229
      %p231 = scmp.eq.s32.totalorder %s32, 0
      %p232 = por %p230, %p231
      %s234 = sadd.s32 %s233, 1
      %p237 = scmp.eq.s32.totalorder %s26, 2
      %p238 = scmp.ne.s32.totalorder %s233, %s235
      %p239 = scmp.eq.s32.totalorder %s26, 0
      %p240 = por %p238, %p239
      %p241 = scmp.ne.s32.totalorder %s233, %s235
      %p242 = scmp.eq.s32.totalorder %s31, 2
      %p243 = por %p241, %p242
      %p244 = scmp.ne.s32.totalorder %s235, %s236
      %p245 = scmp.eq.s32.totalorder %s31, 0
      %p246 = por %p244, %p245
      %p247 = scmp.ne.s32.totalorder %s235, %s236
      %p248 = scmp.eq.s32.totalorder %s32, 2
      %p249 = por %p247, %p248
      %p251 = scmp.ne.s32.totalorder %s236, %s250
      %p252 = scmp.eq.s32.totalorder %s32, 0
      %p253 = por %p251, %p252
      %s255 = sadd.s32 %s254, 1
      %p258 = scmp.eq.s32.totalorder %s26, 2
      %p259 = scmp.ne.s32.totalorder %s254, %s256
      %p260 = scmp.eq.s32.totalorder %s26, 0
      %p261 = por %p259, %p260
      %p262 = scmp.ne.s32.totalorder %s254, %s256
      %p263 = scmp.eq.s32.totalorder %s31, 2
      %p264 = por %p262, %p263
      %p265 = scmp.ne.s32.totalorder %s256, %s257
      %p266 = scmp.eq.s32.totalorder %s31, 0
      %p267 = por %p265, %p266
      %p268 = scmp.ne.s32.totalorder %s256, %s257
      %p269 = scmp.eq.s32.totalorder %s32, 2
      %p270 = por %p268, %p269
      %p272 = scmp.ne.s32.totalorder %s257, %s271
      %p273 = scmp.eq.s32.totalorder %s32, 0
      %p274 = por %p272, %p273
      %s276 = sadd.s32 %s275, 1
      %p279 = scmp.eq.s32.totalorder %s26, 2
      %p280 = scmp.ne.s32.totalorder %s275, %s277
      %p281 = scmp.eq.s32.totalorder %s26, 0
      %p282 = por %p280, %p281
      %p283 = scmp.ne.s32.totalorder %s275, %s277
      %p284 = scmp.eq.s32.totalorder %s31, 2
      %p285 = por %p283, %p284
      %p286 = scmp.ne.s32.totalorder %s277, %s278
      %p287 = scmp.eq.s32.totalorder %s31, 0
      %p288 = por %p286, %p287
      %p289 = scmp.ne.s32.totalorder %s277, %s278
      %p290 = scmp.eq.s32.totalorder %s32, 2
      %p291 = por %p289, %p290
      %p293 = scmp.ne.s32.totalorder %s278, %s292
      %p294 = scmp.eq.s32.totalorder %s32, 0
      %p295 = por %p293, %p294
      %s297 = sadd.s32 %s296, 1
      %p300 = scmp.eq.s32.totalorder %s26, 2
      %p301 = scmp.ne.s32.totalorder %s296, %s298
      %p302 = scmp.eq.s32.totalorder %s26, 0
      %p303 = por %p301, %p302
      %p304 = scmp.ne.s32.totalorder %s296, %s298
      %p305 = scmp.eq.s32.totalorder %s31, 2
      %p306 = por %p304, %p305
      %p307 = scmp.ne.s32.totalorder %s298, %s299
      %p308 = scmp.eq.s32.totalorder %s31, 0
      %p309 = por %p307, %p308
      %p310 = scmp.ne.s32.totalorder %s298, %s299
      %p311 = scmp.eq.s32.totalorder %s32, 2
      %p312 = por %p310, %p311
      %p314 = scmp.ne.s32.totalorder %s299, %s313
      %p315 = scmp.eq.s32.totalorder %s32, 0
      %p316 = por %p314, %p315
      %s318 = sadd.s32 %s317, 1
      %p321 = scmp.eq.s32.totalorder %s26, 2
      %p322 = scmp.ne.s32.totalorder %s317, %s319
      %p323 = scmp.eq.s32.totalorder %s26, 0
      %p324 = por %p322, %p323
      %p325 = scmp.ne.s32.totalorder %s317, %s319
      %p326 = scmp.eq.s32.totalorder %s31, 2
      %p327 = por %p325, %p326
      %p328 = scmp.ne.s32.totalorder %s319, %s320
      %p329 = scmp.eq.s32.totalorder %s31, 0
      %p330 = por %p328, %p329
      %p331 = scmp.ne.s32.totalorder %s319, %s320
      %p332 = scmp.eq.s32.totalorder %s32, 2
      %p333 = por %p331, %p332
      %p335 = scmp.ne.s32.totalorder %s320, %s334
      %p336 = scmp.eq.s32.totalorder %s32, 0
      %p337 = por %p335, %p336
      %s339 = sadd.s32 %s338, 1
      %p342 = scmp.eq.s32.totalorder %s26, 2
      %p343 = scmp.ne.s32.totalorder %s338, %s340
      %p344 = scmp.eq.s32.totalorder %s26, 0
      %p345 = por %p343, %p344
      %p346 = scmp.ne.s32.totalorder %s338, %s340
      %p347 = scmp.eq.s32.totalorder %s31, 2
      %p348 = por %p346, %p347
      %p349 = scmp.ne.s32.totalorder %s340, %s341
      %p350 = scmp.eq.s32.totalorder %s31, 0
      %p351 = por %p349, %p350
      %p352 = scmp.ne.s32.totalorder %s340, %s341
      %p353 = scmp.eq.s32.totalorder %s32, 2
      %p354 = por %p352, %p353
      %p356 = scmp.ne.s32.totalorder %s341, %s355
      %p357 = scmp.eq.s32.totalorder %s32, 0
      %p358 = por %p356, %p357
      %s360 = sadd.s32 %s359, 1
      %p363 = scmp.eq.s32.totalorder %s26, 2
      %p364 = scmp.ne.s32.totalorder %s359, %s361
      %p365 = scmp.eq.s32.totalorder %s26, 0
      %p366 = por %p364, %p365
      %p367 = scmp.ne.s32.totalorder %s359, %s361
      %p368 = scmp.eq.s32.totalorder %s31, 2
      %p369 = por %p367, %p368
      %p370 = scmp.ne.s32.totalorder %s361, %s362
      %p371 = scmp.eq.s32.totalorder %s31, 0
      %p372 = por %p370, %p371
      %p373 = scmp.ne.s32.totalorder %s361, %s362
      %p374 = scmp.eq.s32.totalorder %s32, 2
      %p375 = por %p373, %p374
      %p377 = scmp.ne.s32.totalorder %s362, %s376
      %p378 = scmp.eq.s32.totalorder %s32, 0
      %p379 = por %p377, %p378
      %s381 = sadd.s32 %s380, 1
      %p384 = scmp.eq.s32.totalorder %s26, 2
      %p385 = scmp.ne.s32.totalorder %s380, %s382
      %p386 = scmp.eq.s32.totalorder %s26, 0
      %p387 = por %p385, %p386
      %p388 = scmp.ne.s32.totalorder %s380, %s382
      %p389 = scmp.eq.s32.totalorder %s31, 2
      %p390 = por %p388, %p389
      %p391 = scmp.ne.s32.totalorder %s382, %s383
      %p392 = scmp.eq.s32.totalorder %s31, 0
      %p393 = por %p391, %p392
      %p394 = scmp.ne.s32.totalorder %s382, %s383
      %p395 = scmp.eq.s32.totalorder %s32, 2
      %p396 = por %p394, %p395
      %p398 = scmp.ne.s32.totalorder %s383, %s397
      %p399 = scmp.eq.s32.totalorder %s32, 0
      %p400 = por %p398, %p399
      %s401 = ssub.s32 %s26, %s33
      %p402 = scmp.eq.s32.totalorder %s401, 0
      %s404 = sadd.s32 %s403, 1
      %s405 = scalar_select %p402, %s403, %s404
      %p408 = pneg %p402
      %p409 = scmp.eq.s32.totalorder %s26, 2
      %p410 = por %p408, %p409
      %p411 = scmp.ne.s32.totalorder %s403, %s406
      %p412 = scmp.eq.s32.totalorder %s26, 0
      %p413 = por %p411, %p412
      %p414 = scmp.ne.s32.totalorder %s403, %s406
      %p415 = scmp.eq.s32.totalorder %s31, 2
      %p416 = por %p414, %p415
      %p417 = scmp.ne.s32.totalorder %s406, %s407
      %p418 = scmp.eq.s32.totalorder %s31, 0
      %p419 = por %p417, %p418
      %p420 = scmp.ne.s32.totalorder %s406, %s407
      %p421 = scmp.eq.s32.totalorder %s32, 2
      %p422 = por %p420, %p421
      %p424 = scmp.ne.s32.totalorder %s407, %s423
      %p425 = scmp.eq.s32.totalorder %s32, 0
      %p426 = por %p424, %p425
      %p427 = scmp.le.s32.totalorder 1, %s26
      %p428 = scmp.lt.s32.totalorder %s26, 4
      %p429 = pnand %p427, %p428
      %p430 = pneg %p429
      // Predicated region
      $region9: #{tpu_custom_call.1} parent=5 // pred_check
        _
      $region10: #{tpu_custom_call.1} parent=5 // pred_check_branch
        %432 = sbr.rel (%p429) target = $region12
      $region11: #{tpu_custom_call.1} parent=5 // pred_region
        %s433 = ssub.s32 %s26, 1
        // Predicated region
        $region13: #{tpu_custom_call.1} parent=11 // pred_check
          %p434 = pneg %p99
        $region14: #{tpu_custom_call.1} parent=11 // pred_check_branch
          %436 = sbr.rel (%p434) target = $region16
        $region15: #{tpu_custom_call.1} parent=11 // pred_region
          _
        $region16: #{tpu_custom_call.1} parent=11 // pred_fallthru
          _
        // Predicated region
        $region17: #{tpu_custom_call.1} parent=11 // pred_check
          %p437 = pneg %p120
        $region18: #{tpu_custom_call.1} parent=11 // pred_check_branch
          %439 = sbr.rel (%p437) target = $region20
        $region19: #{tpu_custom_call.1} parent=11 // pred_region
          _
        $region20: #{tpu_custom_call.1} parent=11 // pred_fallthru
          _
        // Predicated region
        $region21: #{tpu_custom_call.1} parent=11 // pred_check
          %p440 = pneg %p141
        $region22: #{tpu_custom_call.1} parent=11 // pred_check_branch
          %442 = sbr.rel (%p440) target = $region24
        $region23: #{tpu_custom_call.1} parent=11 // pred_region
          _
        $region24: #{tpu_custom_call.1} parent=11 // pred_fallthru
          _
        // Predicated region
        $region25: #{tpu_custom_call.1} parent=11 // pred_check
          %p443 = pneg %p162
        $region26: #{tpu_custom_call.1} parent=11 // pred_check_branch
          %445 = sbr.rel (%p443) target = $region28
        $region27: #{tpu_custom_call.1} parent=11 // pred_region
          _
        $region28: #{tpu_custom_call.1} parent=11 // pred_fallthru
          _
        // Predicated region
        $region29: #{tpu_custom_call.1} parent=11 // pred_check
          %p446 = pneg %p183
        $region30: #{tpu_custom_call.1} parent=11 // pred_check_branch
          %448 = sbr.rel (%p446) target = $region32
        $region31: #{tpu_custom_call.1} parent=11 // pred_region
          _
        $region32: #{tpu_custom_call.1} parent=11 // pred_fallthru
          _
        // Predicated region
        $region33: #{tpu_custom_call.1} parent=11 // pred_check
          %p449 = pneg %p204
        $region34: #{tpu_custom_call.1} parent=11 // pred_check_branch
          %451 = sbr.rel (%p449) target = $region36
        $region35: #{tpu_custom_call.1} parent=11 // pred_region
          _
        $region36: #{tpu_custom_call.1} parent=11 // pred_fallthru
          _
        // Predicated region
        $region37: #{tpu_custom_call.1} parent=11 // pred_check
          %p452 = pneg %p225
        $region38: #{tpu_custom_call.1} parent=11 // pred_check_branch
          %454 = sbr.rel (%p452) target = $region40
        $region39: #{tpu_custom_call.1} parent=11 // pred_region
          _
        $region40: #{tpu_custom_call.1} parent=11 // pred_fallthru
          _
        // Predicated region
        $region41: #{tpu_custom_call.1} parent=11 // pred_check
          %p455 = pneg %p246
        $region42: #{tpu_custom_call.1} parent=11 // pred_check_branch
          %457 = sbr.rel (%p455) target = $region44
        $region43: #{tpu_custom_call.1} parent=11 // pred_region
          _
        $region44: #{tpu_custom_call.1} parent=11 // pred_fallthru
          _
        // Predicated region
        $region45: #{tpu_custom_call.1} parent=11 // pred_check
          %p458 = pneg %p267
        $region46: #{tpu_custom_call.1} parent=11 // pred_check_branch
          %460 = sbr.rel (%p458) target = $region48
        $region47: #{tpu_custom_call.1} parent=11 // pred_region
          _
        $region48: #{tpu_custom_call.1} parent=11 // pred_fallthru
          _
        // Predicated region
        $region49: #{tpu_custom_call.1} parent=11 // pred_check
          %p461 = pneg %p288
        $region50: #{tpu_custom_call.1} parent=11 // pred_check_branch
          %463 = sbr.rel (%p461) target = $region52
        $region51: #{tpu_custom_call.1} parent=11 // pred_region
          _
        $region52: #{tpu_custom_call.1} parent=11 // pred_fallthru
          _
        // Predicated region
        $region53: #{tpu_custom_call.1} parent=11 // pred_check
          %p464 = pneg %p309
        $region54: #{tpu_custom_call.1} parent=11 // pred_check_branch
          %466 = sbr.rel (%p464) target = $region56
        $region55: #{tpu_custom_call.1} parent=11 // pred_region
          _
        $region56: #{tpu_custom_call.1} parent=11 // pred_fallthru
          _
        // Predicated region
        $region57: #{tpu_custom_call.1} parent=11 // pred_check
          %p467 = pneg %p330
        $region58: #{tpu_custom_call.1} parent=11 // pred_check_branch
          %469 = sbr.rel (%p467) target = $region60
        $region59: #{tpu_custom_call.1} parent=11 // pred_region
          _
        $region60: #{tpu_custom_call.1} parent=11 // pred_fallthru
          _
        // Predicated region
        $region61: #{tpu_custom_call.1} parent=11 // pred_check
          %p470 = pneg %p351
        $region62: #{tpu_custom_call.1} parent=11 // pred_check_branch
          %472 = sbr.rel (%p470) target = $region64
        $region63: #{tpu_custom_call.1} parent=11 // pred_region
          _
        $region64: #{tpu_custom_call.1} parent=11 // pred_fallthru
          _
        // Predicated region
        $region65: #{tpu_custom_call.1} parent=11 // pred_check
          %p473 = pneg %p372
        $region66: #{tpu_custom_call.1} parent=11 // pred_check_branch
          %475 = sbr.rel (%p473) target = $region68
        $region67: #{tpu_custom_call.1} parent=11 // pred_region
          _
        $region68: #{tpu_custom_call.1} parent=11 // pred_fallthru
          _
        // Predicated region
        $region69: #{tpu_custom_call.1} parent=11 // pred_check
          %p476 = pneg %p393
        $region70: #{tpu_custom_call.1} parent=11 // pred_check_branch
          %478 = sbr.rel (%p476) target = $region72
        $region71: #{tpu_custom_call.1} parent=11 // pred_region
          _
        $region72: #{tpu_custom_call.1} parent=11 // pred_fallthru
          _
      $region12: #{tpu_custom_call.1} parent=5 // pred_fallthru
        _
      %p479 = scmp.lt.s32.totalorder %s26, 3
      // Predicated region
      $region73: #{tpu_custom_call.1} parent=5 // pred_check
        %p480 = pneg %p479
      $region74: #{tpu_custom_call.1} parent=5 // pred_check_branch
        %482 = sbr.rel (%p480) target = $region76
      $region75: #{tpu_custom_call.1} parent=5 // pred_region
        // Predicated region
        $region77: #{tpu_custom_call.1} parent=75 // pred_check
          %p483 = pneg %p46
        $region78: #{tpu_custom_call.1} parent=75 // pred_check_branch
          %485 = sbr.rel (%p483) target = $region80
        $region79: #{tpu_custom_call.1} parent=75 // pred_region
          %p486 = scmp.lt.s32.totalorder %s26, 2
          %s487 = scalar_select %p486, %s26, 2
          %s488 = smul.addr %s487, 8
          %s489 = scalar_lea.vmem %s0, %s488
        $region80: #{tpu_custom_call.1} parent=75 // pred_fallthru
          _
        // Predicated region
        $region81: #{tpu_custom_call.1} parent=75 // pred_check
          %p490 = pneg %p72
        $region82: #{tpu_custom_call.1} parent=75 // pred_check_branch
          %492 = sbr.rel (%p490) target = $region84
        $region83: #{tpu_custom_call.1} parent=75 // pred_region
          %s493 = sand.u32 %s62, 1
          %s494 = sand.u32 %s62, 1
          %s495 = smul.addr %s494, 16
          %s496 = scalar_lea.vmem [#allocation2], %s495
          %s497 = smul.addr %s26, 8
          %s498 = scalar_lea.vmem %s1, %s497
          // Predicated region
          $region85: #{tpu_custom_call.1} parent=83 // pred_check
            _
          $region86: #{tpu_custom_call.1} parent=83 // pred_check_branch
            %500 = sbr.rel (0) target = $region88
          $region87: #{tpu_custom_call.1} parent=83 // pred_region
            // Predicated region
            $region89: #{tpu_custom_call.1} parent=87 // pred_check
              _
            $region90: #{tpu_custom_call.1} parent=87 // pred_check_branch
              %502 = sbr.rel (0) target = $region92
            $region91: #{tpu_custom_call.1} parent=87 // pred_region
              // Predicated region
              $region104: #{tpu_custom_call.1} parent=91 // pred_check
                _
              $region105: #{tpu_custom_call.1} parent=91 // pred_check_branch
                %520 = sbr.rel (0) target = $region107
              $region106: #{tpu_custom_call.1} parent=91 // pred_region
                loop: start=0, step=1, limit=1
                $region108: #{tpu_custom_call.1} parent=106 // loop_pre_header
                  _
                $region109: #{tpu_custom_call.1} parent=106 // loop_header
                  %s522 = sphi 0, %s526
                  %p523 = scmp.ge.s32.totalorder %s522, 1
                  %s527 = sphi %s498, %s498
                  %s528 = sphi %s496, %s496
                $region110: #{tpu_custom_call.1} parent=106 // loop_header_branch
                  %525 = sbr.rel (%p523) target = $region114
                $region111: #{tpu_custom_call.1} parent=106 // loop_body
                  %v529 = vld [vmem:[%s527] sm:$0xff]
                  %530 = vst [vmem:[%s528] sm:$0xff] %v529
                  %v531 = vld [vmem:[%s527 + $0x18] sm:$0xff]
                  %532 = vst [vmem:[%s528 + $0x8] sm:$0xff] %v531
                $region112: #{tpu_custom_call.1} parent=106 // loop_footer
                  %s526 = sadd.s32 1, %s522
                $region113: #{tpu_custom_call.1} parent=106 // loop_footer_branch
                  %521 = sbr.rel target = $region109
                $region114: #{tpu_custom_call.1} parent=106 // loop_exit
                  _
              $region107: #{tpu_custom_call.1} parent=91 // pred_fallthru
                _
              // Predicated region
              $region115: #{tpu_custom_call.1} parent=91 // pred_check
                _
              $region116: #{tpu_custom_call.1} parent=91 // pred_check_branch
                %534 = sbr.rel target = $region118
              $region117: #{tpu_custom_call.1} parent=91 // pred_region
                _
              $region118: #{tpu_custom_call.1} parent=91 // pred_fallthru
                _
            $region92: #{tpu_custom_call.1} parent=87 // pred_fallthru
              _
            // Predicated region
            $region93: #{tpu_custom_call.1} parent=87 // pred_check
              _
            $region94: #{tpu_custom_call.1} parent=87 // pred_check_branch
              %504 = sbr.rel target = $region96
            $region95: #{tpu_custom_call.1} parent=87 // pred_region
              %s506 = ssub.s32 256, 1
              loop: start=0, step=1, limit=1
              $region97: #{tpu_custom_call.1} parent=95 // loop_pre_header
                _
              $region98: #{tpu_custom_call.1} parent=95 // loop_header
                %s508 = sphi 0, %s512
                %p509 = scmp.ge.s32.totalorder %s508, 1
                %s513 = sphi %s498, %s498
                %s514 = sphi %s496, %s496
              $region99: #{tpu_custom_call.1} parent=95 // loop_header_branch
                %511 = sbr.rel (%p509) target = $region103
              $region100: #{tpu_custom_call.1} parent=95 // loop_body
                %v515 = vld [vmem:[%s513] sm:%s506]
                %516 = vst [vmem:[%s514] sm:%s506] %v515
                %v517 = vld [vmem:[%s513 + $0x18] sm:%s506]
                %518 = vst [vmem:[%s514 + $0x8] sm:%s506] %v517
              $region101: #{tpu_custom_call.1} parent=95 // loop_footer
                %s512 = sadd.s32 1, %s508
              $region102: #{tpu_custom_call.1} parent=95 // loop_footer_branch
                %507 = sbr.rel target = $region98
              $region103: #{tpu_custom_call.1} parent=95 // loop_exit
                _
            $region96: #{tpu_custom_call.1} parent=87 // pred_fallthru
              _
          $region88: #{tpu_custom_call.1} parent=83 // pred_fallthru
            _
          %535 = vnop
        $region84: #{tpu_custom_call.1} parent=75 // pred_fallthru
          _
      $region76: #{tpu_custom_call.1} parent=5 // pred_fallthru
        _
      %p536 = scmp.le.s32.totalorder 1, %s26
      %p537 = scmp.lt.s32.totalorder %s26, 4
      %p538 = pnand %p536, %p537
      %p539 = pneg %p538
      // Predicated region
      $region119: #{tpu_custom_call.1} parent=5 // pred_check
        _
      $region120: #{tpu_custom_call.1} parent=5 // pred_check_branch
        %541 = sbr.rel (%p538) target = $region122
      $region121: #{tpu_custom_call.1} parent=5 // pred_region
        %s542 = ssub.s32 %s26, 1
        %s543 = sand.u32 %s65, 1
        %s544 = sand.u32 %s65, 1
        %s545 = smul.addr %s544, 16
        %s546 = scalar_lea.vmem [#allocation2], %s545
        // Predicated region
        $region123: #{tpu_custom_call.1} parent=121 // pred_check
          %p547 = pneg %p78
        $region124: #{tpu_custom_call.1} parent=121 // pred_check_branch
          %549 = sbr.rel (%p547) target = $region126
        $region125: #{tpu_custom_call.1} parent=121 // pred_region
          _
        $region126: #{tpu_custom_call.1} parent=121 // pred_fallthru
          _
        %p550 = scmp.lt.s32.totalorder %s31, 2
        %s551 = scalar_select %p550, %s31, 2
        %s552 = smul.addr %s551, 8
        %s553 = scalar_lea.vmem %s0, %s552
        %p554 = pneg %p52
        %p555 = pneg %p49
        %s556 = sand.u32 %s65, 1
        %s557 = sand.u32 %s65, 1
        %s558 = smul.addr %s557, 16
        %s559 = scalar_lea.vmem [#allocation2], %s558
        %p560 = pneg %p78
        %p561 = pneg %p75
        %p562 = pneg %p99
        %p563 = pneg %p96
        %p564 = pneg %p120
        %p565 = pneg %p117
        %p566 = pneg %p141
        %p567 = pneg %p138
        %p568 = pneg %p162
        %p569 = pneg %p159
        %p570 = pneg %p183
        %p571 = pneg %p180
        %p572 = pneg %p204
        %p573 = pneg %p201
        %p574 = pneg %p225
        %p575 = pneg %p222
        %p576 = pneg %p246
        %p577 = pneg %p243
        %p578 = pneg %p267
        %p579 = pneg %p264
        %p580 = pneg %p288
        %p581 = pneg %p285
        %p582 = pneg %p309
        %p583 = pneg %p306
        %p584 = pneg %p330
        %p585 = pneg %p327
        %p586 = pneg %p351
        %p587 = pneg %p348
        %p588 = pneg %p372
        %p589 = pneg %p369
        %p590 = pneg %p393
        %p591 = pneg %p390
        %p592 = pneg %p419
        %p593 = pneg %p416
        %s594 = sand.u32 %s406, 1
        %s595 = scalar_lea.sflag [#allocation4], %s594
        %s596 = sand.u32 %s406, 1
        %s597 = smul.addr %s596, 16
        %s598 = scalar_lea.vmem [#allocation3], %s597
        %p599 = scmp.lt.s32.totalorder %s31, 2
        %s600 = scalar_select %p599, %s31, 2
        %s601 = smul.addr %s600, 8
        %s602 = scalar_lea.vmem %s0, %s601
        %v603 = vld [vmem:[%s602] sm:$0xff]
        %v604 = vld [vmem:[%s546] sm:$0xff]
        %v605 = vld [vmem:[%s546 + $0x8] sm:$0xff]
        %v606 = vld [vmem:[%s2] sm:$0xff]
        %v607 = vld [vmem:[%s2 + $0x8] sm:$0xff]
        %v608 = vld [vmem:[%s2 + $0x10] sm:$0xff]
        %v609 = vld [vmem:[%s2 + $0x18] sm:$0xff]
        %v610 = vld [vmem:[%s3] sm:$0xff]
        %v611 = vld [vmem:[%s3 + $0x8] sm:$0xff]
        %v612 = vld [vmem:[%s3 + $0x10] sm:$0xff]
        %v613 = vld [vmem:[%s3 + $0x18] sm:$0xff]
        %615 = vset.pattern.permute.xlu0 0
        %616 = vperm.xlu0 %615, %v610
        %v617 = vpop.permute.xlu0 %616
        %620 = vset.pattern.permute.xlu0 0
        %621 = vperm.xlu0 %620, %v611
        %v622 = vpop.permute.xlu0 %621
        %625 = vset.pattern.permute.xlu0 0
        %626 = vperm.xlu0 %625, %v612
        %v627 = vpop.permute.xlu0 %626
        %630 = vset.pattern.permute.xlu0 0
        %631 = vperm.xlu0 %630, %v613
        %v632 = vpop.permute.xlu0 %631
        %vm634 = vcmask 130048
        %v636 = vsel %vm634, %v606, 0
        %v639 = vsel %vm634, %v607, 0
        %v642 = vsel %vm634, %v608, 0
        %v645 = vsel %vm634, %v609, 0
        %647 = vmatpush.msra.mxu0 0.0
        %648 = vmatpush.msra.mxu0 0.0
        %649 = vmatpush.msra.mxu0 0.0
        %650 = vmatpush.msra.mxu0 0.0
        %651 = vmatpush.msra.mxu0 0.0
        %652 = vmatpush.msra.mxu0 0.0
        %653 = vmatpush.msra.mxu0 0.0
        %654 = vmatpush.msra.mxu0 0.0
        %655 = vmatpush.msra.mxu0 0.0
        %656 = vmatpush.msra.mxu0 0.0
        %657 = vmatpush.msra.mxu0 0.0
        %658 = vmatpush.msra.mxu0 0.0
        %659 = vmatpush.msra.mxu0 0.0
        %660 = vmatpush.msra.mxu0 0.0
        %661 = vmatpush.msra.mxu0 %v605
        %662 = vmatpush.msra.mxu0 %v604
        %663 = vmatmul.f32.gmra.mxu0 %v636
        %v664 = vpop.f32.mrf.mxu0
        %v665 = vadd.f32 %v617, %v664
        %666 = vmatmul.f32.gmra.mxu0 %v639
        %v667 = vpop.f32.mrf.mxu0
        %v668 = vadd.f32 %v622, %v667
        %669 = vmatmul.f32.gmra.mxu0 %v642
        %v670 = vpop.f32.mrf.mxu0
        %v671 = vadd.f32 %v627, %v670
        %672 = vmatmul.f32.gmra.mxu0 %v645
        %v673 = vpop.f32.mrf.mxu0
        %v674 = vadd.f32 %v632, %v673
        %675 = vdwg.mxu0
        %vm676 = vcmp.ge.f32.partialorder %v665, 0.0
        %vm677 = vcmp.ge.f32.partialorder %v668, 0.0
        %vm678 = vcmp.ge.f32.partialorder %v671, 0.0
        %vm679 = vcmp.ge.f32.partialorder %v674, 0.0
        %v680 = vmul.f32 %v665, 0.2
        %v681 = vmul.f32 %v668, 0.2
        %v682 = vmul.f32 %v671, 0.2
        %v683 = vmul.f32 %v674, 0.2
        %v684 = vsel %vm676, %v665, %v680
        %v685 = vsel %vm677, %v668, %v681
        %v686 = vsel %vm678, %v671, %v682
        %v687 = vsel %vm679, %v674, %v683
        %v688 = vld [vmem:[%s4] sm:$0xff]
        %v689 = vld [vmem:[%s4 + $0x8] sm:$0xff]
        %v690 = vld [vmem:[%s4 + $0x10] sm:$0xff]
        %v691 = vld [vmem:[%s4 + $0x18] sm:$0xff]
        %v692 = vld [vmem:[%s5] sm:$0xff]
        %v693 = vld [vmem:[%s5 + $0x8] sm:$0xff]
        %v694 = vld [vmem:[%s5 + $0x10] sm:$0xff]
        %v695 = vld [vmem:[%s5 + $0x18] sm:$0xff]
        %697 = vset.pattern.permute.xlu0 0
        %698 = vperm.xlu0 %697, %v692
        %v699 = vpop.permute.xlu0 %698
        %702 = vset.pattern.permute.xlu0 0
        %703 = vperm.xlu0 %702, %v693
        %v704 = vpop.permute.xlu0 %703
        %707 = vset.pattern.permute.xlu0 0
        %708 = vperm.xlu0 %707, %v694
        %v709 = vpop.permute.xlu0 %708
        %712 = vset.pattern.permute.xlu0 0
        %713 = vperm.xlu0 %712, %v695
        %v714 = vpop.permute.xlu0 %713
        %vm716 = vcmask 261120
        %v718 = vsel %vm716, %v688, 0
        %v721 = vsel %vm716, %v689, 0
        %v724 = vsel %vm716, %v690, 0
        %v727 = vsel %vm716, %v691, 0
        %729 = vmatpush.msra.mxu0 0.0
        %730 = vmatpush.msra.mxu0 0.0
        %731 = vmatpush.msra.mxu0 0.0
        %732 = vmatpush.msra.mxu0 0.0
        %733 = vmatpush.msra.mxu0 0.0
        %734 = vmatpush.msra.mxu0 0.0
        %735 = vmatpush.msra.mxu0 0.0
        %736 = vmatpush.msra.mxu0 0.0
        %737 = vmatpush.msra.mxu0 0.0
        %738 = vmatpush.msra.mxu0 0.0
        %739 = vmatpush.msra.mxu0 0.0
        %740 = vmatpush.msra.mxu0 0.0
        %741 = vmatpush.msra.mxu0 %v687
        %742 = vmatpush.msra.mxu0 %v686
        %743 = vmatpush.msra.mxu0 %v685
        %744 = vmatpush.msra.mxu0 %v684
        %745 = vmatmul.f32.gmra.mxu0 %v718
        %v746 = vpop.f32.mrf.mxu0
        %v747 = vadd.f32 %v699, %v746
        %748 = vmatmul.f32.gmra.mxu0 %v721
        %v749 = vpop.f32.mrf.mxu0
        %v750 = vadd.f32 %v704, %v749
        %751 = vmatmul.f32.gmra.mxu0 %v724
        %v752 = vpop.f32.mrf.mxu0
        %v753 = vadd.f32 %v709, %v752
        %754 = vmatmul.f32.gmra.mxu0 %v727
        %v755 = vpop.f32.mrf.mxu0
        %v756 = vadd.f32 %v714, %v755
        %757 = vdwg.mxu0
        %vm758 = vcmp.ge.f32.partialorder %v747, 0.0
        %vm759 = vcmp.ge.f32.partialorder %v750, 0.0
        %vm760 = vcmp.ge.f32.partialorder %v753, 0.0
        %vm761 = vcmp.ge.f32.partialorder %v756, 0.0
        %v762 = vmul.f32 %v747, 0.2
        %v763 = vmul.f32 %v750, 0.2
        %v764 = vmul.f32 %v753, 0.2
        %v765 = vmul.f32 %v756, 0.2
        %v766 = vsel %vm758, %v747, %v762
        %v767 = vsel %vm759, %v750, %v763
        %v768 = vsel %vm760, %v753, %v764
        %v769 = vsel %vm761, %v756, %v765
        %v770 = vld [vmem:[%s6] sm:$0xff]
        %v771 = vld [vmem:[%s7] sm:$0xff]
        %773 = vset.pattern.permute.xlu0 0
        %774 = vperm.xlu0 %773, %v771
        %v775 = vpop.permute.xlu0 %774
        %v778 = vsel %vm716, %v770, 0
        %780 = vmatpush.msra.mxu0 0.0
        %781 = vmatpush.msra.mxu0 0.0
        %782 = vmatpush.msra.mxu0 0.0
        %783 = vmatpush.msra.mxu0 0.0
        %784 = vmatpush.msra.mxu0 0.0
        %785 = vmatpush.msra.mxu0 0.0
        %786 = vmatpush.msra.mxu0 0.0
        %787 = vmatpush.msra.mxu0 0.0
        %788 = vmatpush.msra.mxu0 0.0
        %789 = vmatpush.msra.mxu0 0.0
        %790 = vmatpush.msra.mxu0 0.0
        %791 = vmatpush.msra.mxu0 0.0
        %792 = vmatpush.msra.mxu0 %v769
        %793 = vmatpush.msra.mxu0 %v768
        %794 = vmatpush.msra.mxu0 %v767
        %795 = vmatpush.msra.mxu0 %v766
        %796 = vmatmul.f32.gmra.mxu0 %v778
        %v797 = vpop.f32.mrf.mxu0
        %v798 = vadd.f32 %v775, %v797
        %799 = vdwg.mxu0
        %v800 = vld [vmem:[%s11] sm:$0xff]
        %v801 = vld [vmem:[%s11 + $0x8] sm:$0xff]
        %v802 = vld [vmem:[%s11 + $0x10] sm:$0xff]
        %v803 = vld [vmem:[%s11 + $0x18] sm:$0xff]
        %v804 = vld [vmem:[%s11 + $0x20] sm:$0xff]
        %v805 = vld [vmem:[%s11 + $0x28] sm:$0xff]
        %v806 = vld [vmem:[%s11 + $0x30] sm:$0xff]
        %v807 = vld [vmem:[%s11 + $0x38] sm:$0xff]
        %v808 = vld [vmem:[%s11 + $0x40] sm:$0xff]
        %v809 = vld [vmem:[%s11 + $0x48] sm:$0xff]
        %v810 = vld [vmem:[%s11 + $0x50] sm:$0xff]
        %v811 = vld [vmem:[%s11 + $0x58] sm:$0xff]
        %v812 = vld [vmem:[%s11 + $0x60] sm:$0xff]
        %v813 = vld [vmem:[%s11 + $0x68] sm:$0xff]
        %v814 = vld [vmem:[%s11 + $0x70] sm:$0xff]
        %v815 = vld [vmem:[%s11 + $0x78] sm:$0xff]
        %v816 = vld [vmem:[%s11 + $0x80] sm:$0xff]
        %v817 = vld [vmem:[%s11 + $0x88] sm:$0xff]
        %v818 = vld [vmem:[%s11 + $0x90] sm:$0xff]
        %v819 = vld [vmem:[%s11 + $0x98] sm:$0xff]
        %v820 = vld [vmem:[%s11 + $0xa0] sm:$0xff]
        %v821 = vld [vmem:[%s11 + $0xa8] sm:$0xff]
        %v822 = vld [vmem:[%s11 + $0xb0] sm:$0xff]
        %v823 = vld [vmem:[%s11 + $0xb8] sm:$0xff]
        %v824 = vld [vmem:[%s11 + $0xc0] sm:$0xff]
        %v825 = vld [vmem:[%s11 + $0xc8] sm:$0xff]
        %v826 = vld [vmem:[%s11 + $0xd0] sm:$0xff]
        %v827 = vld [vmem:[%s11 + $0xd8] sm:$0xff]
        %v828 = vld [vmem:[%s11 + $0xe0] sm:$0xff]
        %v829 = vld [vmem:[%s11 + $0xe8] sm:$0xff]
        %v830 = vld [vmem:[%s11 + $0xf0] sm:$0xff]
        %v831 = vld [vmem:[%s11 + $0xf8] sm:$0xff]
        %v832 = vld [vmem:[%s11 + $0x100] sm:$0xff]
        %v833 = vld [vmem:[%s11 + $0x108] sm:$0xff]
        %v834 = vld [vmem:[%s11 + $0x110] sm:$0xff]
        %v835 = vld [vmem:[%s11 + $0x118] sm:$0xff]
        %v836 = vld [vmem:[%s11 + $0x120] sm:$0xff]
        %v837 = vld [vmem:[%s11 + $0x128] sm:$0xff]
        %v838 = vld [vmem:[%s11 + $0x130] sm:$0xff]
        %v839 = vld [vmem:[%s11 + $0x138] sm:$0xff]
        %v840 = vld [vmem:[%s11 + $0x140] sm:$0xff]
        %v841 = vld [vmem:[%s11 + $0x148] sm:$0xff]
        %v842 = vld [vmem:[%s11 + $0x150] sm:$0xff]
        %v843 = vld [vmem:[%s11 + $0x158] sm:$0xff]
        %v844 = vld [vmem:[%s11 + $0x160] sm:$0xff]
        %v845 = vld [vmem:[%s11 + $0x168] sm:$0xff]
        %v846 = vld [vmem:[%s11 + $0x170] sm:$0xff]
        %v847 = vld [vmem:[%s11 + $0x178] sm:$0xff]
        %v848 = vld [vmem:[%s11 + $0x180] sm:$0xff]
        %v849 = vld [vmem:[%s11 + $0x188] sm:$0xff]
        %v850 = vld [vmem:[%s11 + $0x190] sm:$0xff]
        %v851 = vld [vmem:[%s11 + $0x198] sm:$0xff]
        %v852 = vld [vmem:[%s11 + $0x1a0] sm:$0xff]
        %v853 = vld [vmem:[%s11 + $0x1a8] sm:$0xff]
        %v854 = vld [vmem:[%s11 + $0x1b0] sm:$0xff]
        %v855 = vld [vmem:[%s11 + $0x1b8] sm:$0xff]
        %v856 = vld [vmem:[%s11 + $0x1c0] sm:$0xff]
        %v857 = vld [vmem:[%s11 + $0x1c8] sm:$0xff]
        %v858 = vld [vmem:[%s11 + $0x1d0] sm:$0xff]
        %v859 = vld [vmem:[%s11 + $0x1d8] sm:$0xff]
        %v860 = vld [vmem:[%s11 + $0x1e0] sm:$0xff]
        %v861 = vld [vmem:[%s11 + $0x1e8] sm:$0xff]
        %v862 = vld [vmem:[%s11 + $0x1f0] sm:$0xff]
        %v863 = vld [vmem:[%s11 + $0x1f8] sm:$0xff]
        %v864 = vld [vmem:[%s12] sm:$0xff]
        %v865 = vld [vmem:[%s12 + $0x8] sm:$0xff]
        %v866 = vld [vmem:[%s12 + $0x10] sm:$0xff]
        %v867 = vld [vmem:[%s12 + $0x18] sm:$0xff]
        %v868 = vld [vmem:[%s12 + $0x20] sm:$0xff]
        %v869 = vld [vmem:[%s12 + $0x28] sm:$0xff]
        %v870 = vld [vmem:[%s12 + $0x30] sm:$0xff]
        %v871 = vld [vmem:[%s12 + $0x38] sm:$0xff]
        %v872 = vld [vmem:[%s12 + $0x40] sm:$0xff]
        %v873 = vld [vmem:[%s12 + $0x48] sm:$0xff]
        %v874 = vld [vmem:[%s12 + $0x50] sm:$0xff]
        %v875 = vld [vmem:[%s12 + $0x58] sm:$0xff]
        %v876 = vld [vmem:[%s12 + $0x60] sm:$0xff]
        %v877 = vld [vmem:[%s12 + $0x68] sm:$0xff]
        %v878 = vld [vmem:[%s12 + $0x70] sm:$0xff]
        %v879 = vld [vmem:[%s12 + $0x78] sm:$0xff]
        %v880 = vld [vmem:[%s12 + $0x80] sm:$0xff]
        %v881 = vld [vmem:[%s12 + $0x88] sm:$0xff]
        %v882 = vld [vmem:[%s12 + $0x90] sm:$0xff]
        %v883 = vld [vmem:[%s12 + $0x98] sm:$0xff]
        %v884 = vld [vmem:[%s12 + $0xa0] sm:$0xff]
        %v885 = vld [vmem:[%s12 + $0xa8] sm:$0xff]
        %v886 = vld [vmem:[%s12 + $0xb0] sm:$0xff]
        %v887 = vld [vmem:[%s12 + $0xb8] sm:$0xff]
        %v888 = vld [vmem:[%s12 + $0xc0] sm:$0xff]
        %v889 = vld [vmem:[%s12 + $0xc8] sm:$0xff]
        %v890 = vld [vmem:[%s12 + $0xd0] sm:$0xff]
        %v891 = vld [vmem:[%s12 + $0xd8] sm:$0xff]
        %v892 = vld [vmem:[%s12 + $0xe0] sm:$0xff]
        %v893 = vld [vmem:[%s12 + $0xe8] sm:$0xff]
        %v894 = vld [vmem:[%s12 + $0xf0] sm:$0xff]
        %v895 = vld [vmem:[%s12 + $0xf8] sm:$0xff]
        %v896 = vld [vmem:[%s12 + $0x100] sm:$0xff]
        %v897 = vld [vmem:[%s12 + $0x108] sm:$0xff]
        %v898 = vld [vmem:[%s12 + $0x110] sm:$0xff]
        %v899 = vld [vmem:[%s12 + $0x118] sm:$0xff]
        %v900 = vld [vmem:[%s12 + $0x120] sm:$0xff]
        %v901 = vld [vmem:[%s12 + $0x128] sm:$0xff]
        %v902 = vld [vmem:[%s12 + $0x130] sm:$0xff]
        %v903 = vld [vmem:[%s12 + $0x138] sm:$0xff]
        %v904 = vld [vmem:[%s12 + $0x140] sm:$0xff]
        %v905 = vld [vmem:[%s12 + $0x148] sm:$0xff]
        %v906 = vld [vmem:[%s12 + $0x150] sm:$0xff]
        %v907 = vld [vmem:[%s12 + $0x158] sm:$0xff]
        %v908 = vld [vmem:[%s12 + $0x160] sm:$0xff]
        %v909 = vld [vmem:[%s12 + $0x168] sm:$0xff]
        %v910 = vld [vmem:[%s12 + $0x170] sm:$0xff]
        %v911 = vld [vmem:[%s12 + $0x178] sm:$0xff]
        %v912 = vld [vmem:[%s12 + $0x180] sm:$0xff]
        %v913 = vld [vmem:[%s12 + $0x188] sm:$0xff]
        %v914 = vld [vmem:[%s12 + $0x190] sm:$0xff]
        %v915 = vld [vmem:[%s12 + $0x198] sm:$0xff]
        %v916 = vld [vmem:[%s12 + $0x1a0] sm:$0xff]
        %v917 = vld [vmem:[%s12 + $0x1a8] sm:$0xff]
        %v918 = vld [vmem:[%s12 + $0x1b0] sm:$0xff]
        %v919 = vld [vmem:[%s12 + $0x1b8] sm:$0xff]
        %v920 = vld [vmem:[%s12 + $0x1c0] sm:$0xff]
        %v921 = vld [vmem:[%s12 + $0x1c8] sm:$0xff]
        %v922 = vld [vmem:[%s12 + $0x1d0] sm:$0xff]
        %v923 = vld [vmem:[%s12 + $0x1d8] sm:$0xff]
        %v924 = vld [vmem:[%s12 + $0x1e0] sm:$0xff]
        %v925 = vld [vmem:[%s12 + $0x1e8] sm:$0xff]
        %v926 = vld [vmem:[%s12 + $0x1f0] sm:$0xff]
        %v927 = vld [vmem:[%s12 + $0x1f8] sm:$0xff]
        %929 = vset.pattern.permute.xlu0 0
        %930 = vperm.xlu0 %929, %v864
        %v931 = vpop.permute.xlu0 %930
        %934 = vset.pattern.permute.xlu0 0
        %935 = vperm.xlu0 %934, %v865
        %v936 = vpop.permute.xlu0 %935
        %939 = vset.pattern.permute.xlu0 0
        %940 = vperm.xlu0 %939, %v866
        %v941 = vpop.permute.xlu0 %940
        %944 = vset.pattern.permute.xlu0 0
        %945 = vperm.xlu0 %944, %v867
        %v946 = vpop.permute.xlu0 %945
        %949 = vset.pattern.permute.xlu0 0
        %950 = vperm.xlu0 %949, %v868
        %v951 = vpop.permute.xlu0 %950
        %954 = vset.pattern.permute.xlu0 0
        %955 = vperm.xlu0 %954, %v869
        %v956 = vpop.permute.xlu0 %955
        %959 = vset.pattern.permute.xlu0 0
        %960 = vperm.xlu0 %959, %v870
        %v961 = vpop.permute.xlu0 %960
        %964 = vset.pattern.permute.xlu0 0
        %965 = vperm.xlu0 %964, %v871
        %v966 = vpop.permute.xlu0 %965
        %969 = vset.pattern.permute.xlu0 0
        %970 = vperm.xlu0 %969, %v872
        %v971 = vpop.permute.xlu0 %970
        %974 = vset.pattern.permute.xlu0 0
        %975 = vperm.xlu0 %974, %v873
        %v976 = vpop.permute.xlu0 %975
        %979 = vset.pattern.permute.xlu0 0
        %980 = vperm.xlu0 %979, %v874
        %v981 = vpop.permute.xlu0 %980
        %984 = vset.pattern.permute.xlu0 0
        %985 = vperm.xlu0 %984, %v875
        %v986 = vpop.permute.xlu0 %985
        %989 = vset.pattern.permute.xlu0 0
        %990 = vperm.xlu0 %989, %v876
        %v991 = vpop.permute.xlu0 %990
        %994 = vset.pattern.permute.xlu0 0
        %995 = vperm.xlu0 %994, %v877
        %v996 = vpop.permute.xlu0 %995
        %999 = vset.pattern.permute.xlu0 0
        %1000 = vperm.xlu0 %999, %v878
        %v1001 = vpop.permute.xlu0 %1000
        %1004 = vset.pattern.permute.xlu0 0
        %1005 = vperm.xlu0 %1004, %v879
        %v1006 = vpop.permute.xlu0 %1005
        %1009 = vset.pattern.permute.xlu0 0
        %1010 = vperm.xlu0 %1009, %v880
        %v1011 = vpop.permute.xlu0 %1010
        %1014 = vset.pattern.permute.xlu0 0
        %1015 = vperm.xlu0 %1014, %v881
        %v1016 = vpop.permute.xlu0 %1015
        %1019 = vset.pattern.permute.xlu0 0
        %1020 = vperm.xlu0 %1019, %v882
        %v1021 = vpop.permute.xlu0 %1020
        %1024 = vset.pattern.permute.xlu0 0
        %1025 = vperm.xlu0 %1024, %v883
        %v1026 = vpop.permute.xlu0 %1025
        %1029 = vset.pattern.permute.xlu0 0
        %1030 = vperm.xlu0 %1029, %v884
        %v1031 = vpop.permute.xlu0 %1030
        %1034 = vset.pattern.permute.xlu0 0
        %1035 = vperm.xlu0 %1034, %v885
        %v1036 = vpop.permute.xlu0 %1035
        %1039 = vset.pattern.permute.xlu0 0
        %1040 = vperm.xlu0 %1039, %v886
        %v1041 = vpop.permute.xlu0 %1040
        %1044 = vset.pattern.permute.xlu0 0
        %1045 = vperm.xlu0 %1044, %v887
        %v1046 = vpop.permute.xlu0 %1045
        %1049 = vset.pattern.permute.xlu0 0
        %1050 = vperm.xlu0 %1049, %v888
        %v1051 = vpop.permute.xlu0 %1050
        %1054 = vset.pattern.permute.xlu0 0
        %1055 = vperm.xlu0 %1054, %v889
        %v1056 = vpop.permute.xlu0 %1055
        %1059 = vset.pattern.permute.xlu0 0
        %1060 = vperm.xlu0 %1059, %v890
        %v1061 = vpop.permute.xlu0 %1060
        %1064 = vset.pattern.permute.xlu0 0
        %1065 = vperm.xlu0 %1064, %v891
        %v1066 = vpop.permute.xlu0 %1065
        %1069 = vset.pattern.permute.xlu0 0
        %1070 = vperm.xlu0 %1069, %v892
        %v1071 = vpop.permute.xlu0 %1070
        %1074 = vset.pattern.permute.xlu0 0
        %1075 = vperm.xlu0 %1074, %v893
        %v1076 = vpop.permute.xlu0 %1075
        %1079 = vset.pattern.permute.xlu0 0
        %1080 = vperm.xlu0 %1079, %v894
        %v1081 = vpop.permute.xlu0 %1080
        %1084 = vset.pattern.permute.xlu0 0
        %1085 = vperm.xlu0 %1084, %v895
        %v1086 = vpop.permute.xlu0 %1085
        %1089 = vset.pattern.permute.xlu0 0
        %1090 = vperm.xlu0 %1089, %v896
        %v1091 = vpop.permute.xlu0 %1090
        %1094 = vset.pattern.permute.xlu0 0
        %1095 = vperm.xlu0 %1094, %v897
        %v1096 = vpop.permute.xlu0 %1095
        %1099 = vset.pattern.permute.xlu0 0
        %1100 = vperm.xlu0 %1099, %v898
        %v1101 = vpop.permute.xlu0 %1100
        %1104 = vset.pattern.permute.xlu0 0
        %1105 = vperm.xlu0 %1104, %v899
        %v1106 = vpop.permute.xlu0 %1105
        %1109 = vset.pattern.permute.xlu0 0
        %1110 = vperm.xlu0 %1109, %v900
        %v1111 = vpop.permute.xlu0 %1110
        %1114 = vset.pattern.permute.xlu0 0
        %1115 = vperm.xlu0 %1114, %v901
        %v1116 = vpop.permute.xlu0 %1115
        %1119 = vset.pattern.permute.xlu0 0
        %1120 = vperm.xlu0 %1119, %v902
        %v1121 = vpop.permute.xlu0 %1120
        %1124 = vset.pattern.permute.xlu0 0
        %1125 = vperm.xlu0 %1124, %v903
        %v1126 = vpop.permute.xlu0 %1125
        %1129 = vset.pattern.permute.xlu0 0
        %1130 = vperm.xlu0 %1129, %v904
        %v1131 = vpop.permute.xlu0 %1130
        %1134 = vset.pattern.permute.xlu0 0
        %1135 = vperm.xlu0 %1134, %v905
        %v1136 = vpop.permute.xlu0 %1135
        %1139 = vset.pattern.permute.xlu0 0
        %1140 = vperm.xlu0 %1139, %v906
        %v1141 = vpop.permute.xlu0 %1140
        %1144 = vset.pattern.permute.xlu0 0
        %1145 = vperm.xlu0 %1144, %v907
        %v1146 = vpop.permute.xlu0 %1145
        %1149 = vset.pattern.permute.xlu0 0
        %1150 = vperm.xlu0 %1149, %v908
        %v1151 = vpop.permute.xlu0 %1150
        %1154 = vset.pattern.permute.xlu0 0
        %1155 = vperm.xlu0 %1154, %v909
        %v1156 = vpop.permute.xlu0 %1155
        %1159 = vset.pattern.permute.xlu0 0
        %1160 = vperm.xlu0 %1159, %v910
        %v1161 = vpop.permute.xlu0 %1160
        %1164 = vset.pattern.permute.xlu0 0
        %1165 = vperm.xlu0 %1164, %v911
        %v1166 = vpop.permute.xlu0 %1165
        %1169 = vset.pattern.permute.xlu0 0
        %1170 = vperm.xlu0 %1169, %v912
        %v1171 = vpop.permute.xlu0 %1170
        %1174 = vset.pattern.permute.xlu0 0
        %1175 = vperm.xlu0 %1174, %v913
        %v1176 = vpop.permute.xlu0 %1175
        %1179 = vset.pattern.permute.xlu0 0
        %1180 = vperm.xlu0 %1179, %v914
        %v1181 = vpop.permute.xlu0 %1180
        %1184 = vset.pattern.permute.xlu0 0
        %1185 = vperm.xlu0 %1184, %v915
        %v1186 = vpop.permute.xlu0 %1185
        %1189 = vset.pattern.permute.xlu0 0
        %1190 = vperm.xlu0 %1189, %v916
        %v1191 = vpop.permute.xlu0 %1190
        %1194 = vset.pattern.permute.xlu0 0
        %1195 = vperm.xlu0 %1194, %v917
        %v1196 = vpop.permute.xlu0 %1195
        %1199 = vset.pattern.permute.xlu0 0
        %1200 = vperm.xlu0 %1199, %v918
        %v1201 = vpop.permute.xlu0 %1200
        %1204 = vset.pattern.permute.xlu0 0
        %1205 = vperm.xlu0 %1204, %v919
        %v1206 = vpop.permute.xlu0 %1205
        %1209 = vset.pattern.permute.xlu0 0
        %1210 = vperm.xlu0 %1209, %v920
        %v1211 = vpop.permute.xlu0 %1210
        %1214 = vset.pattern.permute.xlu0 0
        %1215 = vperm.xlu0 %1214, %v921
        %v1216 = vpop.permute.xlu0 %1215
        %1219 = vset.pattern.permute.xlu0 0
        %1220 = vperm.xlu0 %1219, %v922
        %v1221 = vpop.permute.xlu0 %1220
        %1224 = vset.pattern.permute.xlu0 0
        %1225 = vperm.xlu0 %1224, %v923
        %v1226 = vpop.permute.xlu0 %1225
        %1229 = vset.pattern.permute.xlu0 0
        %1230 = vperm.xlu0 %1229, %v924
        %v1231 = vpop.permute.xlu0 %1230
        %1234 = vset.pattern.permute.xlu0 0
        %1235 = vperm.xlu0 %1234, %v925
        %v1236 = vpop.permute.xlu0 %1235
        %1239 = vset.pattern.permute.xlu0 0
        %1240 = vperm.xlu0 %1239, %v926
        %v1241 = vpop.permute.xlu0 %1240
        %1244 = vset.pattern.permute.xlu0 0
        %1245 = vperm.xlu0 %1244, %v927
        %v1246 = vpop.permute.xlu0 %1245
        %vm1248 = vcmask 64512
        %v1250 = vsel %vm1248, %v800, 0
        %v1253 = vsel %vm1248, %v801, 0
        %v1256 = vsel %vm1248, %v802, 0
        %v1259 = vsel %vm1248, %v803, 0
        %v1262 = vsel %vm1248, %v804, 0
        %v1265 = vsel %vm1248, %v805, 0
        %v1268 = vsel %vm1248, %v806, 0
        %v1271 = vsel %vm1248, %v807, 0
        %v1274 = vsel %vm1248, %v808, 0
        %v1277 = vsel %vm1248, %v809, 0
        %v1280 = vsel %vm1248, %v810, 0
        %v1283 = vsel %vm1248, %v811, 0
        %v1286 = vsel %vm1248, %v812, 0
        %v1289 = vsel %vm1248, %v813, 0
        %v1292 = vsel %vm1248, %v814, 0
        %v1295 = vsel %vm1248, %v815, 0
        %v1298 = vsel %vm1248, %v816, 0
        %v1301 = vsel %vm1248, %v817, 0
        %v1304 = vsel %vm1248, %v818, 0
        %v1307 = vsel %vm1248, %v819, 0
        %v1310 = vsel %vm1248, %v820, 0
        %v1313 = vsel %vm1248, %v821, 0
        %v1316 = vsel %vm1248, %v822, 0
        %v1319 = vsel %vm1248, %v823, 0
        %v1322 = vsel %vm1248, %v824, 0
        %v1325 = vsel %vm1248, %v825, 0
        %v1328 = vsel %vm1248, %v826, 0
        %v1331 = vsel %vm1248, %v827, 0
        %v1334 = vsel %vm1248, %v828, 0
        %v1337 = vsel %vm1248, %v829, 0
        %v1340 = vsel %vm1248, %v830, 0
        %v1343 = vsel %vm1248, %v831, 0
        %v1346 = vsel %vm1248, %v832, 0
        %v1349 = vsel %vm1248, %v833, 0
        %v1352 = vsel %vm1248, %v834, 0
        %v1355 = vsel %vm1248, %v835, 0
        %v1358 = vsel %vm1248, %v836, 0
        %v1361 = vsel %vm1248, %v837, 0
        %v1364 = vsel %vm1248, %v838, 0
        %v1367 = vsel %vm1248, %v839, 0
        %v1370 = vsel %vm1248, %v840, 0
        %v1373 = vsel %vm1248, %v841, 0
        %v1376 = vsel %vm1248, %v842, 0
        %v1379 = vsel %vm1248, %v843, 0
        %v1382 = vsel %vm1248, %v844, 0
        %v1385 = vsel %vm1248, %v845, 0
        %v1388 = vsel %vm1248, %v846, 0
        %v1391 = vsel %vm1248, %v847, 0
        %v1394 = vsel %vm1248, %v848, 0
        %v1397 = vsel %vm1248, %v849, 0
        %v1400 = vsel %vm1248, %v850, 0
        %v1403 = vsel %vm1248, %v851, 0
        %v1406 = vsel %vm1248, %v852, 0
        %v1409 = vsel %vm1248, %v853, 0
        %v1412 = vsel %vm1248, %v854, 0
        %v1415 = vsel %vm1248, %v855, 0
        %v1418 = vsel %vm1248, %v856, 0
        %v1421 = vsel %vm1248, %v857, 0
        %v1424 = vsel %vm1248, %v858, 0
        %v1427 = vsel %vm1248, %v859, 0
        %v1430 = vsel %vm1248, %v860, 0
        %v1433 = vsel %vm1248, %v861, 0
        %v1436 = vsel %vm1248, %v862, 0
        %v1439 = vsel %vm1248, %v863, 0
        %1441 = vmatpush.msra.mxu0 0.0
        %1442 = vmatpush.msra.mxu0 0.0
        %1443 = vmatpush.msra.mxu0 0.0
        %1444 = vmatpush.msra.mxu0 0.0
        %1445 = vmatpush.msra.mxu0 0.0
        %1446 = vmatpush.msra.mxu0 0.0
        %1447 = vmatpush.msra.mxu0 0.0
        %1448 = vmatpush.msra.mxu0 0.0
        %1449 = vmatpush.msra.mxu0 0.0
        %1450 = vmatpush.msra.mxu0 0.0
        %1451 = vmatpush.msra.mxu0 0.0
        %1452 = vmatpush.msra.mxu0 0.0
        %1453 = vmatpush.msra.mxu0 0.0
        %1454 = vmatpush.msra.mxu0 0.0
        %1455 = vmatpush.msra.mxu0 0.0
        %1456 = vmatpush.msra.mxu0 %v798
        %1457 = vmatmul.f32.gmra.mxu0 %v1250
        %v1458 = vpop.f32.mrf.mxu0
        %v1459 = vadd.f32 %v931, %v1458
        %1460 = vmatmul.f32.gmra.mxu0 %v1253
        %v1461 = vpop.f32.mrf.mxu0
        %v1462 = vadd.f32 %v936, %v1461
        %1463 = vmatmul.f32.gmra.mxu0 %v1256
        %v1464 = vpop.f32.mrf.mxu0
        %v1465 = vadd.f32 %v941, %v1464
        %1466 = vmatmul.f32.gmra.mxu0 %v1259
        %v1467 = vpop.f32.mrf.mxu0
        %v1468 = vadd.f32 %v946, %v1467
        %1469 = vmatmul.f32.gmra.mxu0 %v1262
        %v1470 = vpop.f32.mrf.mxu0
        %v1471 = vadd.f32 %v951, %v1470
        %1472 = vmatmul.f32.gmra.mxu0 %v1265
        %v1473 = vpop.f32.mrf.mxu0
        %v1474 = vadd.f32 %v956, %v1473
        %1475 = vmatmul.f32.gmra.mxu0 %v1268
        %v1476 = vpop.f32.mrf.mxu0
        %v1477 = vadd.f32 %v961, %v1476
        %1478 = vmatmul.f32.gmra.mxu0 %v1271
        %v1479 = vpop.f32.mrf.mxu0
        %v1480 = vadd.f32 %v966, %v1479
        %1481 = vmatmul.f32.gmra.mxu0 %v1274
        %v1482 = vpop.f32.mrf.mxu0
        %v1483 = vadd.f32 %v971, %v1482
        %1484 = vmatmul.f32.gmra.mxu0 %v1277
        %v1485 = vpop.f32.mrf.mxu0
        %v1486 = vadd.f32 %v976, %v1485
        %1487 = vmatmul.f32.gmra.mxu0 %v1280
        %v1488 = vpop.f32.mrf.mxu0
        %v1489 = vadd.f32 %v981, %v1488
        %1490 = vmatmul.f32.gmra.mxu0 %v1283
        %v1491 = vpop.f32.mrf.mxu0
        %v1492 = vadd.f32 %v986, %v1491
        %1493 = vmatmul.f32.gmra.mxu0 %v1286
        %v1494 = vpop.f32.mrf.mxu0
        %v1495 = vadd.f32 %v991, %v1494
        %1496 = vmatmul.f32.gmra.mxu0 %v1289
        %v1497 = vpop.f32.mrf.mxu0
        %v1498 = vadd.f32 %v996, %v1497
        %1499 = vmatmul.f32.gmra.mxu0 %v1292
        %v1500 = vpop.f32.mrf.mxu0
        %v1501 = vadd.f32 %v1001, %v1500
        %1502 = vmatmul.f32.gmra.mxu0 %v1295
        %v1503 = vpop.f32.mrf.mxu0
        %v1504 = vadd.f32 %v1006, %v1503
        %1505 = vmatmul.f32.gmra.mxu0 %v1298
        %v1506 = vpop.f32.mrf.mxu0
        %v1507 = vadd.f32 %v1011, %v1506
        %1508 = vmatmul.f32.gmra.mxu0 %v1301
        %v1509 = vpop.f32.mrf.mxu0
        %v1510 = vadd.f32 %v1016, %v1509
        %1511 = vmatmul.f32.gmra.mxu0 %v1304
        %v1512 = vpop.f32.mrf.mxu0
        %v1513 = vadd.f32 %v1021, %v1512
        %1514 = vmatmul.f32.gmra.mxu0 %v1307
        %v1515 = vpop.f32.mrf.mxu0
        %v1516 = vadd.f32 %v1026, %v1515
        %1517 = vmatmul.f32.gmra.mxu0 %v1310
        %v1518 = vpop.f32.mrf.mxu0
        %v1519 = vadd.f32 %v1031, %v1518
        %1520 = vmatmul.f32.gmra.mxu0 %v1313
        %v1521 = vpop.f32.mrf.mxu0
        %v1522 = vadd.f32 %v1036, %v1521
        %1523 = vmatmul.f32.gmra.mxu0 %v1316
        %v1524 = vpop.f32.mrf.mxu0
        %v1525 = vadd.f32 %v1041, %v1524
        %1526 = vmatmul.f32.gmra.mxu0 %v1319
        %v1527 = vpop.f32.mrf.mxu0
        %v1528 = vadd.f32 %v1046, %v1527
        %1529 = vmatmul.f32.gmra.mxu0 %v1322
        %v1530 = vpop.f32.mrf.mxu0
        %v1531 = vadd.f32 %v1051, %v1530
        %1532 = vmatmul.f32.gmra.mxu0 %v1325
        %v1533 = vpop.f32.mrf.mxu0
        %v1534 = vadd.f32 %v1056, %v1533
        %1535 = vmatmul.f32.gmra.mxu0 %v1328
        %v1536 = vpop.f32.mrf.mxu0
        %v1537 = vadd.f32 %v1061, %v1536
        %1538 = vmatmul.f32.gmra.mxu0 %v1331
        %v1539 = vpop.f32.mrf.mxu0
        %v1540 = vadd.f32 %v1066, %v1539
        %1541 = vmatmul.f32.gmra.mxu0 %v1334
        %v1542 = vpop.f32.mrf.mxu0
        %v1543 = vadd.f32 %v1071, %v1542
        %1544 = vmatmul.f32.gmra.mxu0 %v1337
        %v1545 = vpop.f32.mrf.mxu0
        %v1546 = vadd.f32 %v1076, %v1545
        %1547 = vmatmul.f32.gmra.mxu0 %v1340
        %v1548 = vpop.f32.mrf.mxu0
        %v1549 = vadd.f32 %v1081, %v1548
        %1550 = vmatmul.f32.gmra.mxu0 %v1343
        %v1551 = vpop.f32.mrf.mxu0
        %v1552 = vadd.f32 %v1086, %v1551
        %1553 = vmatmul.f32.gmra.mxu0 %v1346
        %v1554 = vpop.f32.mrf.mxu0
        %v1555 = vadd.f32 %v1091, %v1554
        %1556 = vmatmul.f32.gmra.mxu0 %v1349
        %v1557 = vpop.f32.mrf.mxu0
        %v1558 = vadd.f32 %v1096, %v1557
        %1559 = vmatmul.f32.gmra.mxu0 %v1352
        %v1560 = vpop.f32.mrf.mxu0
        %v1561 = vadd.f32 %v1101, %v1560
        %1562 = vmatmul.f32.gmra.mxu0 %v1355
        %v1563 = vpop.f32.mrf.mxu0
        %v1564 = vadd.f32 %v1106, %v1563
        %1565 = vmatmul.f32.gmra.mxu0 %v1358
        %v1566 = vpop.f32.mrf.mxu0
        %v1567 = vadd.f32 %v1111, %v1566
        %1568 = vmatmul.f32.gmra.mxu0 %v1361
        %v1569 = vpop.f32.mrf.mxu0
        %v1570 = vadd.f32 %v1116, %v1569
        %1571 = vmatmul.f32.gmra.mxu0 %v1364
        %v1572 = vpop.f32.mrf.mxu0
        %v1573 = vadd.f32 %v1121, %v1572
        %1574 = vmatmul.f32.gmra.mxu0 %v1367
        %v1575 = vpop.f32.mrf.mxu0
        %v1576 = vadd.f32 %v1126, %v1575
        %1577 = vmatmul.f32.gmra.mxu0 %v1370
        %v1578 = vpop.f32.mrf.mxu0
        %v1579 = vadd.f32 %v1131, %v1578
        %1580 = vmatmul.f32.gmra.mxu0 %v1373
        %v1581 = vpop.f32.mrf.mxu0
        %v1582 = vadd.f32 %v1136, %v1581
        %1583 = vmatmul.f32.gmra.mxu0 %v1376
        %v1584 = vpop.f32.mrf.mxu0
        %v1585 = vadd.f32 %v1141, %v1584
        %1586 = vmatmul.f32.gmra.mxu0 %v1379
        %v1587 = vpop.f32.mrf.mxu0
        %v1588 = vadd.f32 %v1146, %v1587
        %1589 = vmatmul.f32.gmra.mxu0 %v1382
        %v1590 = vpop.f32.mrf.mxu0
        %v1591 = vadd.f32 %v1151, %v1590
        %1592 = vmatmul.f32.gmra.mxu0 %v1385
        %v1593 = vpop.f32.mrf.mxu0
        %v1594 = vadd.f32 %v1156, %v1593
        %1595 = vmatmul.f32.gmra.mxu0 %v1388
        %v1596 = vpop.f32.mrf.mxu0
        %v1597 = vadd.f32 %v1161, %v1596
        %1598 = vmatmul.f32.gmra.mxu0 %v1391
        %v1599 = vpop.f32.mrf.mxu0
        %v1600 = vadd.f32 %v1166, %v1599
        %1601 = vmatmul.f32.gmra.mxu0 %v1394
        %v1602 = vpop.f32.mrf.mxu0
        %v1603 = vadd.f32 %v1171, %v1602
        %1604 = vmatmul.f32.gmra.mxu0 %v1397
        %v1605 = vpop.f32.mrf.mxu0
        %v1606 = vadd.f32 %v1176, %v1605
        %1607 = vmatmul.f32.gmra.mxu0 %v1400
        %v1608 = vpop.f32.mrf.mxu0
        %v1609 = vadd.f32 %v1181, %v1608
        %1610 = vmatmul.f32.gmra.mxu0 %v1403
        %v1611 = vpop.f32.mrf.mxu0
        %v1612 = vadd.f32 %v1186, %v1611
        %1613 = vmatmul.f32.gmra.mxu0 %v1406
        %v1614 = vpop.f32.mrf.mxu0
        %v1615 = vadd.f32 %v1191, %v1614
        %1616 = vmatmul.f32.gmra.mxu0 %v1409
        %v1617 = vpop.f32.mrf.mxu0
        %v1618 = vadd.f32 %v1196, %v1617
        %1619 = vmatmul.f32.gmra.mxu0 %v1412
        %v1620 = vpop.f32.mrf.mxu0
        %v1621 = vadd.f32 %v1201, %v1620
        %1622 = vmatmul.f32.gmra.mxu0 %v1415
        %v1623 = vpop.f32.mrf.mxu0
        %v1624 = vadd.f32 %v1206, %v1623
        %1625 = vmatmul.f32.gmra.mxu0 %v1418
        %v1626 = vpop.f32.mrf.mxu0
        %v1627 = vadd.f32 %v1211, %v1626
        %1628 = vmatmul.f32.gmra.mxu0 %v1421
        %v1629 = vpop.f32.mrf.mxu0
        %v1630 = vadd.f32 %v1216, %v1629
        %1631 = vmatmul.f32.gmra.mxu0 %v1424
        %v1632 = vpop.f32.mrf.mxu0
        %v1633 = vadd.f32 %v1221, %v1632
        %1634 = vmatmul.f32.gmra.mxu0 %v1427
        %v1635 = vpop.f32.mrf.mxu0
        %v1636 = vadd.f32 %v1226, %v1635
        %1637 = vmatmul.f32.gmra.mxu0 %v1430
        %v1638 = vpop.f32.mrf.mxu0
        %v1639 = vadd.f32 %v1231, %v1638
        %1640 = vmatmul.f32.gmra.mxu0 %v1433
        %v1641 = vpop.f32.mrf.mxu0
        %v1642 = vadd.f32 %v1236, %v1641
        %1643 = vmatmul.f32.gmra.mxu0 %v1436
        %v1644 = vpop.f32.mrf.mxu0
        %v1645 = vadd.f32 %v1241, %v1644
        %1646 = vmatmul.f32.gmra.mxu0 %v1439
        %v1647 = vpop.f32.mrf.mxu0
        %v1648 = vadd.f32 %v1246, %v1647
        %1649 = vdwg.mxu0
        %v1650 = vld [vmem:[%s9] sm:$0xff]
        %v1651 = vld [vmem:[%s8] sm:$0xff]
        %1653 = vset.pattern.permute.xlu0 0
        %1654 = vperm.xlu0 %1653, %v1651
        %v1655 = vpop.permute.xlu0 %1654
        %v1657 = vadd.f32 %v603, %v1655
        %1659 = vset.pattern.permute.xlu0 0
        %1660 = vperm.xlu0 %1659, %v1650
        %v1661 = vpop.permute.xlu0 %1660
        %v1663 = vmul.f32 %v1661, %v1657
        %v1664 = vld [vmem:[%s10] sm:$0xff]
        %v1665 = vld [vmem:[%s10 + $0x8] sm:$0xff]
        %v1666 = vld [vmem:[%s10 + $0x10] sm:$0xff]
        %v1667 = vld [vmem:[%s10 + $0x18] sm:$0xff]
        %v1668 = vld [vmem:[%s10 + $0x20] sm:$0xff]
        %v1669 = vld [vmem:[%s10 + $0x28] sm:$0xff]
        %v1670 = vld [vmem:[%s10 + $0x30] sm:$0xff]
        %v1671 = vld [vmem:[%s10 + $0x38] sm:$0xff]
        %v1673 = vsel %vm1248, %v1664, 0
        %v1676 = vsel %vm1248, %v1665, 0
        %v1679 = vsel %vm1248, %v1666, 0
        %v1682 = vsel %vm1248, %v1667, 0
        %v1685 = vsel %vm1248, %v1668, 0
        %v1688 = vsel %vm1248, %v1669, 0
        %v1691 = vsel %vm1248, %v1670, 0
        %v1694 = vsel %vm1248, %v1671, 0
        %1696 = vmatpush.msra.mxu0 0.0
        %1697 = vmatpush.msra.mxu0 0.0
        %1698 = vmatpush.msra.mxu0 0.0
        %1699 = vmatpush.msra.mxu0 0.0
        %1700 = vmatpush.msra.mxu0 0.0
        %1701 = vmatpush.msra.mxu0 0.0
        %1702 = vmatpush.msra.mxu0 0.0
        %1703 = vmatpush.msra.mxu0 0.0
        %1704 = vmatpush.msra.mxu0 0.0
        %1705 = vmatpush.msra.mxu0 0.0
        %1706 = vmatpush.msra.mxu0 0.0
        %1707 = vmatpush.msra.mxu0 0.0
        %1708 = vmatpush.msra.mxu0 0.0
        %1709 = vmatpush.msra.mxu0 0.0
        %1710 = vmatpush.msra.mxu0 0.0
        %1711 = vmatpush.msra.mxu0 %v1663
        %1712 = vmatmul.f32.gmra.mxu0 %v1673
        %v1713 = vpop.f32.mrf.mxu0
        %v1714 = vadd.f32 %v1459, %v1713
        %1715 = vmatmul.f32.gmra.mxu0 %v1676
        %v1716 = vpop.f32.mrf.mxu0
        %v1717 = vadd.f32 %v1462, %v1716
        %1718 = vmatmul.f32.gmra.mxu0 %v1679
        %v1719 = vpop.f32.mrf.mxu0
        %v1720 = vadd.f32 %v1465, %v1719
        %1721 = vmatmul.f32.gmra.mxu0 %v1682
        %v1722 = vpop.f32.mrf.mxu0
        %v1723 = vadd.f32 %v1468, %v1722
        %1724 = vmatmul.f32.gmra.mxu0 %v1685
        %v1725 = vpop.f32.mrf.mxu0
        %v1726 = vadd.f32 %v1471, %v1725
        %1727 = vmatmul.f32.gmra.mxu0 %v1688
        %v1728 = vpop.f32.mrf.mxu0
        %v1729 = vadd.f32 %v1474, %v1728
        %1730 = vmatmul.f32.gmra.mxu0 %v1691
        %v1731 = vpop.f32.mrf.mxu0
        %v1732 = vadd.f32 %v1477, %v1731
        %1733 = vmatmul.f32.gmra.mxu0 %v1694
        %v1734 = vpop.f32.mrf.mxu0
        %v1735 = vadd.f32 %v1480, %v1734
        %1736 = vdwg.mxu0
        %vm1737 = vcmp.ge.f32.partialorder %v1714, 0.0
        %vm1738 = vcmp.ge.f32.partialorder %v1717, 0.0
        %vm1739 = vcmp.ge.f32.partialorder %v1720, 0.0
        %vm1740 = vcmp.ge.f32.partialorder %v1723, 0.0
        %vm1741 = vcmp.ge.f32.partialorder %v1726, 0.0
        %vm1742 = vcmp.ge.f32.partialorder %v1729, 0.0
        %vm1743 = vcmp.ge.f32.partialorder %v1732, 0.0
        %vm1744 = vcmp.ge.f32.partialorder %v1735, 0.0
        %v1745 = vmul.f32 %v1714, 0.01
        %v1746 = vmul.f32 %v1717, 0.01
        %v1747 = vmul.f32 %v1720, 0.01
        %v1748 = vmul.f32 %v1723, 0.01
        %v1749 = vmul.f32 %v1726, 0.01
        %v1750 = vmul.f32 %v1729, 0.01
        %v1751 = vmul.f32 %v1732, 0.01
        %v1752 = vmul.f32 %v1735, 0.01
        %v1753 = vsel %vm1737, %v1714, %v1745
        %v1754 = vsel %vm1738, %v1717, %v1746
        %v1755 = vsel %vm1739, %v1720, %v1747
        %v1756 = vsel %vm1740, %v1723, %v1748
        %v1757 = vsel %vm1741, %v1726, %v1749
        %v1758 = vsel %vm1742, %v1729, %v1750
        %v1759 = vsel %vm1743, %v1732, %v1751
        %v1760 = vsel %vm1744, %v1735, %v1752
        %v1761 = vld [vmem:[%s13] sm:$0xff]
        %v1762 = vld [vmem:[%s13 + $0x8] sm:$0xff]
        %v1763 = vld [vmem:[%s13 + $0x10] sm:$0xff]
        %v1764 = vld [vmem:[%s13 + $0x18] sm:$0xff]
        %v1765 = vld [vmem:[%s13 + $0x20] sm:$0xff]
        %v1766 = vld [vmem:[%s13 + $0x28] sm:$0xff]
        %v1767 = vld [vmem:[%s13 + $0x30] sm:$0xff]
        %v1768 = vld [vmem:[%s13 + $0x38] sm:$0xff]
        %v1769 = vld [vmem:[%s14] sm:$0xff]
        %v1770 = vld [vmem:[%s14 + $0x8] sm:$0xff]
        %v1771 = vld [vmem:[%s14 + $0x10] sm:$0xff]
        %v1772 = vld [vmem:[%s14 + $0x18] sm:$0xff]
        %v1773 = vld [vmem:[%s14 + $0x20] sm:$0xff]
        %v1774 = vld [vmem:[%s14 + $0x28] sm:$0xff]
        %v1775 = vld [vmem:[%s14 + $0x30] sm:$0xff]
        %v1776 = vld [vmem:[%s14 + $0x38] sm:$0xff]
        %1778 = vset.pattern.permute.xlu0 0
        %1779 = vperm.xlu0 %1778, %v1769
        %v1780 = vpop.permute.xlu0 %1779
        %1783 = vset.pattern.permute.xlu0 0
        %1784 = vperm.xlu0 %1783, %v1770
        %v1785 = vpop.permute.xlu0 %1784
        %1788 = vset.pattern.permute.xlu0 0
        %1789 = vperm.xlu0 %1788, %v1771
        %v1790 = vpop.permute.xlu0 %1789
        %1793 = vset.pattern.permute.xlu0 0
        %1794 = vperm.xlu0 %1793, %v1772
        %v1795 = vpop.permute.xlu0 %1794
        %1798 = vset.pattern.permute.xlu0 0
        %1799 = vperm.xlu0 %1798, %v1773
        %v1800 = vpop.permute.xlu0 %1799
        %1803 = vset.pattern.permute.xlu0 0
        %1804 = vperm.xlu0 %1803, %v1774
        %v1805 = vpop.permute.xlu0 %1804
        %1808 = vset.pattern.permute.xlu0 0
        %1809 = vperm.xlu0 %1808, %v1775
        %v1810 = vpop.permute.xlu0 %1809
        %1813 = vset.pattern.permute.xlu0 0
        %1814 = vperm.xlu0 %1813, %v1776
        %v1815 = vpop.permute.xlu0 %1814
        %vm1817 = vcmask 523264
        %v1819 = vsel %vm1817, %v1761, 0
        %v1822 = vsel %vm1817, %v1762, 0
        %v1825 = vsel %vm1817, %v1763, 0
        %v1828 = vsel %vm1817, %v1764, 0
        %v1831 = vsel %vm1817, %v1765, 0
        %v1834 = vsel %vm1817, %v1766, 0
        %v1837 = vsel %vm1817, %v1767, 0
        %v1840 = vsel %vm1817, %v1768, 0
        %1842 = vmatpush.msra.mxu0 0.0
        %1843 = vmatpush.msra.mxu0 0.0
        %1844 = vmatpush.msra.mxu0 0.0
        %1845 = vmatpush.msra.mxu0 0.0
        %1846 = vmatpush.msra.mxu0 0.0
        %1847 = vmatpush.msra.mxu0 0.0
        %1848 = vmatpush.msra.mxu0 0.0
        %1849 = vmatpush.msra.mxu0 0.0
        %1850 = vmatpush.msra.mxu0 %v1760
        %1851 = vmatpush.msra.mxu0 %v1759
        %1852 = vmatpush.msra.mxu0 %v1758
        %1853 = vmatpush.msra.mxu0 %v1757
        %1854 = vmatpush.msra.mxu0 %v1756
        %1855 = vmatpush.msra.mxu0 %v1755
        %1856 = vmatpush.msra.mxu0 %v1754
        %1857 = vmatpush.msra.mxu0 %v1753
        %1858 = vmatmul.f32.gmra.mxu0 %v1819
        %v1859 = vpop.f32.mrf.mxu0
        %v1860 = vadd.f32 %v1780, %v1859
        %1861 = vmatmul.f32.gmra.mxu0 %v1822
        %v1862 = vpop.f32.mrf.mxu0
        %v1863 = vadd.f32 %v1785, %v1862
        %1864 = vmatmul.f32.gmra.mxu0 %v1825
        %v1865 = vpop.f32.mrf.mxu0
        %v1866 = vadd.f32 %v1790, %v1865
        %1867 = vmatmul.f32.gmra.mxu0 %v1828
        %v1868 = vpop.f32.mrf.mxu0
        %v1869 = vadd.f32 %v1795, %v1868
        %1870 = vmatmul.f32.gmra.mxu0 %v1831
        %v1871 = vpop.f32.mrf.mxu0
        %v1872 = vadd.f32 %v1800, %v1871
        %1873 = vmatmul.f32.gmra.mxu0 %v1834
        %v1874 = vpop.f32.mrf.mxu0
        %v1875 = vadd.f32 %v1805, %v1874
        %1876 = vmatmul.f32.gmra.mxu0 %v1837
        %v1877 = vpop.f32.mrf.mxu0
        %v1878 = vadd.f32 %v1810, %v1877
        %1879 = vmatmul.f32.gmra.mxu0 %v1840
        %v1880 = vpop.f32.mrf.mxu0
        %v1881 = vadd.f32 %v1815, %v1880
        %1882 = vdwg.mxu0
        %vm1883 = vcmp.ge.f32.partialorder %v1860, 0.0
        %vm1884 = vcmp.ge.f32.partialorder %v1863, 0.0
        %vm1885 = vcmp.ge.f32.partialorder %v1866, 0.0
        %vm1886 = vcmp.ge.f32.partialorder %v1869, 0.0
        %vm1887 = vcmp.ge.f32.partialorder %v1872, 0.0
        %vm1888 = vcmp.ge.f32.partialorder %v1875, 0.0
        %vm1889 = vcmp.ge.f32.partialorder %v1878, 0.0
        %vm1890 = vcmp.ge.f32.partialorder %v1881, 0.0
        %v1891 = vmul.f32 %v1860, 0.01
        %v1892 = vmul.f32 %v1863, 0.01
        %v1893 = vmul.f32 %v1866, 0.01
        %v1894 = vmul.f32 %v1869, 0.01
        %v1895 = vmul.f32 %v1872, 0.01
        %v1896 = vmul.f32 %v1875, 0.01
        %v1897 = vmul.f32 %v1878, 0.01
        %v1898 = vmul.f32 %v1881, 0.01
        %v1899 = vsel %vm1883, %v1860, %v1891
        %v1900 = vsel %vm1884, %v1863, %v1892
        %v1901 = vsel %vm1885, %v1866, %v1893
        %v1902 = vsel %vm1886, %v1869, %v1894
        %v1903 = vsel %vm1887, %v1872, %v1895
        %v1904 = vsel %vm1888, %v1875, %v1896
        %v1905 = vsel %vm1889, %v1878, %v1897
        %v1906 = vsel %vm1890, %v1881, %v1898
        %s1907 = scalar_lea.vmem %s13, 64
        %v1908 = vld [vmem:[%s1907] sm:$0xff]
        %v1909 = vld [vmem:[%s1907 + $0x8] sm:$0xff]
        %v1910 = vld [vmem:[%s1907 + $0x10] sm:$0xff]
        %v1911 = vld [vmem:[%s1907 + $0x18] sm:$0xff]
        %v1912 = vld [vmem:[%s1907 + $0x20] sm:$0xff]
        %v1913 = vld [vmem:[%s1907 + $0x28] sm:$0xff]
        %v1914 = vld [vmem:[%s1907 + $0x30] sm:$0xff]
        %v1915 = vld [vmem:[%s1907 + $0x38] sm:$0xff]
        %s1916 = scalar_lea.vmem %s14, 64
        %v1917 = vld [vmem:[%s1916] sm:$0xff]
        %v1918 = vld [vmem:[%s1916 + $0x8] sm:$0xff]
        %v1919 = vld [vmem:[%s1916 + $0x10] sm:$0xff]
        %v1920 = vld [vmem:[%s1916 + $0x18] sm:$0xff]
        %v1921 = vld [vmem:[%s1916 + $0x20] sm:$0xff]
        %v1922 = vld [vmem:[%s1916 + $0x28] sm:$0xff]
        %v1923 = vld [vmem:[%s1916 + $0x30] sm:$0xff]
        %v1924 = vld [vmem:[%s1916 + $0x38] sm:$0xff]
        %1926 = vset.pattern.permute.xlu0 0
        %1927 = vperm.xlu0 %1926, %v1917
        %v1928 = vpop.permute.xlu0 %1927
        %1931 = vset.pattern.permute.xlu0 0
        %1932 = vperm.xlu0 %1931, %v1918
        %v1933 = vpop.permute.xlu0 %1932
        %1936 = vset.pattern.permute.xlu0 0
        %1937 = vperm.xlu0 %1936, %v1919
        %v1938 = vpop.permute.xlu0 %1937
        %1941 = vset.pattern.permute.xlu0 0
        %1942 = vperm.xlu0 %1941, %v1920
        %v1943 = vpop.permute.xlu0 %1942
        %1946 = vset.pattern.permute.xlu0 0
        %1947 = vperm.xlu0 %1946, %v1921
        %v1948 = vpop.permute.xlu0 %1947
        %1951 = vset.pattern.permute.xlu0 0
        %1952 = vperm.xlu0 %1951, %v1922
        %v1953 = vpop.permute.xlu0 %1952
        %1956 = vset.pattern.permute.xlu0 0
        %1957 = vperm.xlu0 %1956, %v1923
        %v1958 = vpop.permute.xlu0 %1957
        %1961 = vset.pattern.permute.xlu0 0
        %1962 = vperm.xlu0 %1961, %v1924
        %v1963 = vpop.permute.xlu0 %1962
        %v1966 = vsel %vm1817, %v1908, 0
        %v1969 = vsel %vm1817, %v1909, 0
        %v1972 = vsel %vm1817, %v1910, 0
        %v1975 = vsel %vm1817, %v1911, 0
        %v1978 = vsel %vm1817, %v1912, 0
        %v1981 = vsel %vm1817, %v1913, 0
        %v1984 = vsel %vm1817, %v1914, 0
        %v1987 = vsel %vm1817, %v1915, 0
        %1989 = vmatpush.msra.mxu0 0.0
        %1990 = vmatpush.msra.mxu0 0.0
        %1991 = vmatpush.msra.mxu0 0.0
        %1992 = vmatpush.msra.mxu0 0.0
        %1993 = vmatpush.msra.mxu0 0.0
        %1994 = vmatpush.msra.mxu0 0.0
        %1995 = vmatpush.msra.mxu0 0.0
        %1996 = vmatpush.msra.mxu0 0.0
        %1997 = vmatpush.msra.mxu0 %v1906
        %1998 = vmatpush.msra.mxu0 %v1905
        %1999 = vmatpush.msra.mxu0 %v1904
        %2000 = vmatpush.msra.mxu0 %v1903
        %2001 = vmatpush.msra.mxu0 %v1902
        %2002 = vmatpush.msra.mxu0 %v1901
        %2003 = vmatpush.msra.mxu0 %v1900
        %2004 = vmatpush.msra.mxu0 %v1899
        %2005 = vmatmul.f32.gmra.mxu0 %v1966
        %v2006 = vpop.f32.mrf.mxu0
        %v2007 = vadd.f32 %v1928, %v2006
        %2008 = vmatmul.f32.gmra.mxu0 %v1969
        %v2009 = vpop.f32.mrf.mxu0
        %v2010 = vadd.f32 %v1933, %v2009
        %2011 = vmatmul.f32.gmra.mxu0 %v1972
        %v2012 = vpop.f32.mrf.mxu0
        %v2013 = vadd.f32 %v1938, %v2012
        %2014 = vmatmul.f32.gmra.mxu0 %v1975
        %v2015 = vpop.f32.mrf.mxu0
        %v2016 = vadd.f32 %v1943, %v2015
        %2017 = vmatmul.f32.gmra.mxu0 %v1978
        %v2018 = vpop.f32.mrf.mxu0
        %v2019 = vadd.f32 %v1948, %v2018
        %2020 = vmatmul.f32.gmra.mxu0 %v1981
        %v2021 = vpop.f32.mrf.mxu0
        %v2022 = vadd.f32 %v1953, %v2021
        %2023 = vmatmul.f32.gmra.mxu0 %v1984
        %v2024 = vpop.f32.mrf.mxu0
        %v2025 = vadd.f32 %v1958, %v2024
        %2026 = vmatmul.f32.gmra.mxu0 %v1987
        %v2027 = vpop.f32.mrf.mxu0
        %v2028 = vadd.f32 %v1963, %v2027
        %2029 = vdwg.mxu0
        %vm2030 = vcmp.ge.f32.partialorder %v2007, 0.0
        %vm2031 = vcmp.ge.f32.partialorder %v2010, 0.0
        %vm2032 = vcmp.ge.f32.partialorder %v2013, 0.0
        %vm2033 = vcmp.ge.f32.partialorder %v2016, 0.0
        %vm2034 = vcmp.ge.f32.partialorder %v2019, 0.0
        %vm2035 = vcmp.ge.f32.partialorder %v2022, 0.0
        %vm2036 = vcmp.ge.f32.partialorder %v2025, 0.0
        %vm2037 = vcmp.ge.f32.partialorder %v2028, 0.0
        %v2038 = vmul.f32 %v2007, 0.01
        %v2039 = vmul.f32 %v2010, 0.01
        %v2040 = vmul.f32 %v2013, 0.01
        %v2041 = vmul.f32 %v2016, 0.01
        %v2042 = vmul.f32 %v2019, 0.01
        %v2043 = vmul.f32 %v2022, 0.01
        %v2044 = vmul.f32 %v2025, 0.01
        %v2045 = vmul.f32 %v2028, 0.01
        %v2046 = vsel %vm2030, %v2007, %v2038
        %v2047 = vsel %vm2031, %v2010, %v2039
        %v2048 = vsel %vm2032, %v2013, %v2040
        %v2049 = vsel %vm2033, %v2016, %v2041
        %v2050 = vsel %vm2034, %v2019, %v2042
        %v2051 = vsel %vm2035, %v2022, %v2043
        %v2052 = vsel %vm2036, %v2025, %v2044
        %v2053 = vsel %vm2037, %v2028, %v2045
        %v2054 = vld [vmem:[%s15] sm:$0xff]
        %v2055 = vld [vmem:[%s15 + $0x8] sm:$0xff]
        %v2056 = vld [vmem:[%s16] sm:$0xff]
        %v2057 = vld [vmem:[%s16 + $0x8] sm:$0xff]
        %2059 = vset.pattern.permute.xlu0 0
        %2060 = vperm.xlu0 %2059, %v2056
        %v2061 = vpop.permute.xlu0 %2060
        %2064 = vset.pattern.permute.xlu0 0
        %2065 = vperm.xlu0 %2064, %v2057
        %v2066 = vpop.permute.xlu0 %2065
        %v2069 = vsel %vm1817, %v2054, 0
        %v2072 = vsel %vm1817, %v2055, 0
        %2074 = vmatpush.msra.mxu0 0.0
        %2075 = vmatpush.msra.mxu0 0.0
        %2076 = vmatpush.msra.mxu0 0.0
        %2077 = vmatpush.msra.mxu0 0.0
        %2078 = vmatpush.msra.mxu0 0.0
        %2079 = vmatpush.msra.mxu0 0.0
        %2080 = vmatpush.msra.mxu0 0.0
        %2081 = vmatpush.msra.mxu0 0.0
        %2082 = vmatpush.msra.mxu0 %v2053
        %2083 = vmatpush.msra.mxu0 %v2052
        %2084 = vmatpush.msra.mxu0 %v2051
        %2085 = vmatpush.msra.mxu0 %v2050
        %2086 = vmatpush.msra.mxu0 %v2049
        %2087 = vmatpush.msra.mxu0 %v2048
        %2088 = vmatpush.msra.mxu0 %v2047
        %2089 = vmatpush.msra.mxu0 %v2046
        %2090 = vmatmul.f32.gmra.mxu0 %v2069
        %v2091 = vpop.f32.mrf.mxu0
        %v2092 = vadd.f32 %v2061, %v2091
        %2093 = vmatmul.f32.gmra.mxu0 %v2072
        %v2094 = vpop.f32.mrf.mxu0
        %v2095 = vadd.f32 %v2066, %v2094
        %2096 = vdwg.mxu0
        %v2097 = vtanh.pop %v2092
        %v2098 = vmul.f32 %v2097, 1.442695
        %v2099 = vpow.pop %v2098
        %v2100 = vmul.f32 %v1663, %v2099
        %v2101 = vadd.f32 %v2100, %v2095
        %v2102 = vadd.f32 %v2097, 0.0
        %s2103 = scalar_lea.vmem %s10, 64
        %v2104 = vld [vmem:[%s2103] sm:$0xff]
        %v2105 = vld [vmem:[%s2103 + $0x8] sm:$0xff]
        %v2106 = vld [vmem:[%s2103 + $0x10] sm:$0xff]
        %v2107 = vld [vmem:[%s2103 + $0x18] sm:$0xff]
        %v2108 = vld [vmem:[%s2103 + $0x20] sm:$0xff]
        %v2109 = vld [vmem:[%s2103 + $0x28] sm:$0xff]
        %v2110 = vld [vmem:[%s2103 + $0x30] sm:$0xff]
        %v2111 = vld [vmem:[%s2103 + $0x38] sm:$0xff]
        %v2113 = vsel %vm1248, %v2104, 0
        %v2116 = vsel %vm1248, %v2105, 0
        %v2119 = vsel %vm1248, %v2106, 0
        %v2122 = vsel %vm1248, %v2107, 0
        %v2125 = vsel %vm1248, %v2108, 0
        %v2128 = vsel %vm1248, %v2109, 0
        %v2131 = vsel %vm1248, %v2110, 0
        %v2134 = vsel %vm1248, %v2111, 0
        %2136 = vmatpush.msra.mxu0 0.0
        %2137 = vmatpush.msra.mxu0 0.0
        %2138 = vmatpush.msra.mxu0 0.0
        %2139 = vmatpush.msra.mxu0 0.0
        %2140 = vmatpush.msra.mxu0 0.0
        %2141 = vmatpush.msra.mxu0 0.0
        %2142 = vmatpush.msra.mxu0 0.0
        %2143 = vmatpush.msra.mxu0 0.0
        %2144 = vmatpush.msra.mxu0 0.0
        %2145 = vmatpush.msra.mxu0 0.0
        %2146 = vmatpush.msra.mxu0 0.0
        %2147 = vmatpush.msra.mxu0 0.0
        %2148 = vmatpush.msra.mxu0 0.0
        %2149 = vmatpush.msra.mxu0 0.0
        %2150 = vmatpush.msra.mxu0 0.0
        %2151 = vmatpush.msra.mxu0 %v2101
        %2152 = vmatmul.f32.gmra.mxu0 %v2113
        %v2153 = vpop.f32.mrf.mxu0
        %v2154 = vadd.f32 %v1483, %v2153
        %2155 = vmatmul.f32.gmra.mxu0 %v2116
        %v2156 = vpop.f32.mrf.mxu0
        %v2157 = vadd.f32 %v1486, %v2156
        %2158 = vmatmul.f32.gmra.mxu0 %v2119
        %v2159 = vpop.f32.mrf.mxu0
        %v2160 = vadd.f32 %v1489, %v2159
        %2161 = vmatmul.f32.gmra.mxu0 %v2122
        %v2162 = vpop.f32.mrf.mxu0
        %v2163 = vadd.f32 %v1492, %v2162
        %2164 = vmatmul.f32.gmra.mxu0 %v2125
        %v2165 = vpop.f32.mrf.mxu0
        %v2166 = vadd.f32 %v1495, %v2165
        %2167 = vmatmul.f32.gmra.mxu0 %v2128
        %v2168 = vpop.f32.mrf.mxu0
        %v2169 = vadd.f32 %v1498, %v2168
        %2170 = vmatmul.f32.gmra.mxu0 %v2131
        %v2171 = vpop.f32.mrf.mxu0
        %v2172 = vadd.f32 %v1501, %v2171
        %2173 = vmatmul.f32.gmra.mxu0 %v2134
        %v2174 = vpop.f32.mrf.mxu0
        %v2175 = vadd.f32 %v1504, %v2174
        %2176 = vdwg.mxu0
        %vm2177 = vcmp.ge.f32.partialorder %v2154, 0.0
        %vm2178 = vcmp.ge.f32.partialorder %v2157, 0.0
        %vm2179 = vcmp.ge.f32.partialorder %v2160, 0.0
        %vm2180 = vcmp.ge.f32.partialorder %v2163, 0.0
        %vm2181 = vcmp.ge.f32.partialorder %v2166, 0.0
        %vm2182 = vcmp.ge.f32.partialorder %v2169, 0.0
        %vm2183 = vcmp.ge.f32.partialorder %v2172, 0.0
        %vm2184 = vcmp.ge.f32.partialorder %v2175, 0.0
        %v2185 = vmul.f32 %v2154, 0.01
        %v2186 = vmul.f32 %v2157, 0.01
        %v2187 = vmul.f32 %v2160, 0.01
        %v2188 = vmul.f32 %v2163, 0.01
        %v2189 = vmul.f32 %v2166, 0.01
        %v2190 = vmul.f32 %v2169, 0.01
        %v2191 = vmul.f32 %v2172, 0.01
        %v2192 = vmul.f32 %v2175, 0.01
        %v2193 = vsel %vm2177, %v2154, %v2185
        %v2194 = vsel %vm2178, %v2157, %v2186
        %v2195 = vsel %vm2179, %v2160, %v2187
        %v2196 = vsel %vm2180, %v2163, %v2188
        %v2197 = vsel %vm2181, %v2166, %v2189
        %v2198 = vsel %vm2182, %v2169, %v2190
        %v2199 = vsel %vm2183, %v2172, %v2191
        %v2200 = vsel %vm2184, %v2175, %v2192
        %s2201 = scalar_lea.vmem %s13, 128
        %v2202 = vld [vmem:[%s2201] sm:$0xff]
        %v2203 = vld [vmem:[%s2201 + $0x8] sm:$0xff]
        %v2204 = vld [vmem:[%s2201 + $0x10] sm:$0xff]
        %v2205 = vld [vmem:[%s2201 + $0x18] sm:$0xff]
        %v2206 = vld [vmem:[%s2201 + $0x20] sm:$0xff]
        %v2207 = vld [vmem:[%s2201 + $0x28] sm:$0xff]
        %v2208 = vld [vmem:[%s2201 + $0x30] sm:$0xff]
        %v2209 = vld [vmem:[%s2201 + $0x38] sm:$0xff]
        %s2210 = scalar_lea.vmem %s14, 128
        %v2211 = vld [vmem:[%s2210] sm:$0xff]
        %v2212 = vld [vmem:[%s2210 + $0x8] sm:$0xff]
        %v2213 = vld [vmem:[%s2210 + $0x10] sm:$0xff]
        %v2214 = vld [vmem:[%s2210 + $0x18] sm:$0xff]
        %v2215 = vld [vmem:[%s2210 + $0x20] sm:$0xff]
        %v2216 = vld [vmem:[%s2210 + $0x28] sm:$0xff]
        %v2217 = vld [vmem:[%s2210 + $0x30] sm:$0xff]
        %v2218 = vld [vmem:[%s2210 + $0x38] sm:$0xff]
        %2220 = vset.pattern.permute.xlu0 0
        %2221 = vperm.xlu0 %2220, %v2211
        %v2222 = vpop.permute.xlu0 %2221
        %2225 = vset.pattern.permute.xlu0 0
        %2226 = vperm.xlu0 %2225, %v2212
        %v2227 = vpop.permute.xlu0 %2226
        %2230 = vset.pattern.permute.xlu0 0
        %2231 = vperm.xlu0 %2230, %v2213
        %v2232 = vpop.permute.xlu0 %2231
        %2235 = vset.pattern.permute.xlu0 0
        %2236 = vperm.xlu0 %2235, %v2214
        %v2237 = vpop.permute.xlu0 %2236
        %2240 = vset.pattern.permute.xlu0 0
        %2241 = vperm.xlu0 %2240, %v2215
        %v2242 = vpop.permute.xlu0 %2241
        %2245 = vset.pattern.permute.xlu0 0
        %2246 = vperm.xlu0 %2245, %v2216
        %v2247 = vpop.permute.xlu0 %2246
        %2250 = vset.pattern.permute.xlu0 0
        %2251 = vperm.xlu0 %2250, %v2217
        %v2252 = vpop.permute.xlu0 %2251
        %2255 = vset.pattern.permute.xlu0 0
        %2256 = vperm.xlu0 %2255, %v2218
        %v2257 = vpop.permute.xlu0 %2256
        %v2260 = vsel %vm1817, %v2202, 0
        %v2263 = vsel %vm1817, %v2203, 0
        %v2266 = vsel %vm1817, %v2204, 0
        %v2269 = vsel %vm1817, %v2205, 0
        %v2272 = vsel %vm1817, %v2206, 0
        %v2275 = vsel %vm1817, %v2207, 0
        %v2278 = vsel %vm1817, %v2208, 0
        %v2281 = vsel %vm1817, %v2209, 0
        %2283 = vmatpush.msra.mxu0 0.0
        %2284 = vmatpush.msra.mxu0 0.0
        %2285 = vmatpush.msra.mxu0 0.0
        %2286 = vmatpush.msra.mxu0 0.0
        %2287 = vmatpush.msra.mxu0 0.0
        %2288 = vmatpush.msra.mxu0 0.0
        %2289 = vmatpush.msra.mxu0 0.0
        %2290 = vmatpush.msra.mxu0 0.0
        %2291 = vmatpush.msra.mxu0 %v2200
        %2292 = vmatpush.msra.mxu0 %v2199
        %2293 = vmatpush.msra.mxu0 %v2198
        %2294 = vmatpush.msra.mxu0 %v2197
        %2295 = vmatpush.msra.mxu0 %v2196
        %2296 = vmatpush.msra.mxu0 %v2195
        %2297 = vmatpush.msra.mxu0 %v2194
        %2298 = vmatpush.msra.mxu0 %v2193
        %2299 = vmatmul.f32.gmra.mxu0 %v2260
        %v2300 = vpop.f32.mrf.mxu0
        %v2301 = vadd.f32 %v2222, %v2300
        %2302 = vmatmul.f32.gmra.mxu0 %v2263
        %v2303 = vpop.f32.mrf.mxu0
        %v2304 = vadd.f32 %v2227, %v2303
        %2305 = vmatmul.f32.gmra.mxu0 %v2266
        %v2306 = vpop.f32.mrf.mxu0
        %v2307 = vadd.f32 %v2232, %v2306
        %2308 = vmatmul.f32.gmra.mxu0 %v2269
        %v2309 = vpop.f32.mrf.mxu0
        %v2310 = vadd.f32 %v2237, %v2309
        %2311 = vmatmul.f32.gmra.mxu0 %v2272
        %v2312 = vpop.f32.mrf.mxu0
        %v2313 = vadd.f32 %v2242, %v2312
        %2314 = vmatmul.f32.gmra.mxu0 %v2275
        %v2315 = vpop.f32.mrf.mxu0
        %v2316 = vadd.f32 %v2247, %v2315
        %2317 = vmatmul.f32.gmra.mxu0 %v2278
        %v2318 = vpop.f32.mrf.mxu0
        %v2319 = vadd.f32 %v2252, %v2318
        %2320 = vmatmul.f32.gmra.mxu0 %v2281
        %v2321 = vpop.f32.mrf.mxu0
        %v2322 = vadd.f32 %v2257, %v2321
        %2323 = vdwg.mxu0
        %vm2324 = vcmp.ge.f32.partialorder %v2301, 0.0
        %vm2325 = vcmp.ge.f32.partialorder %v2304, 0.0
        %vm2326 = vcmp.ge.f32.partialorder %v2307, 0.0
        %vm2327 = vcmp.ge.f32.partialorder %v2310, 0.0
        %vm2328 = vcmp.ge.f32.partialorder %v2313, 0.0
        %vm2329 = vcmp.ge.f32.partialorder %v2316, 0.0
        %vm2330 = vcmp.ge.f32.partialorder %v2319, 0.0
        %vm2331 = vcmp.ge.f32.partialorder %v2322, 0.0
        %v2332 = vmul.f32 %v2301, 0.01
        %v2333 = vmul.f32 %v2304, 0.01
        %v2334 = vmul.f32 %v2307, 0.01
        %v2335 = vmul.f32 %v2310, 0.01
        %v2336 = vmul.f32 %v2313, 0.01
        %v2337 = vmul.f32 %v2316, 0.01
        %v2338 = vmul.f32 %v2319, 0.01
        %v2339 = vmul.f32 %v2322, 0.01
        %v2340 = vsel %vm2324, %v2301, %v2332
        %v2341 = vsel %vm2325, %v2304, %v2333
        %v2342 = vsel %vm2326, %v2307, %v2334
        %v2343 = vsel %vm2327, %v2310, %v2335
        %v2344 = vsel %vm2328, %v2313, %v2336
        %v2345 = vsel %vm2329, %v2316, %v2337
        %v2346 = vsel %vm2330, %v2319, %v2338
        %v2347 = vsel %vm2331, %v2322, %v2339
        %s2348 = scalar_lea.vmem %s13, 192
        %v2349 = vld [vmem:[%s2348] sm:$0xff]
        %v2350 = vld [vmem:[%s2348 + $0x8] sm:$0xff]
        %v2351 = vld [vmem:[%s2348 + $0x10] sm:$0xff]
        %v2352 = vld [vmem:[%s2348 + $0x18] sm:$0xff]
        %v2353 = vld [vmem:[%s2348 + $0x20] sm:$0xff]
        %v2354 = vld [vmem:[%s2348 + $0x28] sm:$0xff]
        %v2355 = vld [vmem:[%s2348 + $0x30] sm:$0xff]
        %v2356 = vld [vmem:[%s2348 + $0x38] sm:$0xff]
        %s2357 = scalar_lea.vmem %s14, 192
        %v2358 = vld [vmem:[%s2357] sm:$0xff]
        %v2359 = vld [vmem:[%s2357 + $0x8] sm:$0xff]
        %v2360 = vld [vmem:[%s2357 + $0x10] sm:$0xff]
        %v2361 = vld [vmem:[%s2357 + $0x18] sm:$0xff]
        %v2362 = vld [vmem:[%s2357 + $0x20] sm:$0xff]
        %v2363 = vld [vmem:[%s2357 + $0x28] sm:$0xff]
        %v2364 = vld [vmem:[%s2357 + $0x30] sm:$0xff]
        %v2365 = vld [vmem:[%s2357 + $0x38] sm:$0xff]
        %2367 = vset.pattern.permute.xlu0 0
        %2368 = vperm.xlu0 %2367, %v2358
        %v2369 = vpop.permute.xlu0 %2368
        %2372 = vset.pattern.permute.xlu0 0
        %2373 = vperm.xlu0 %2372, %v2359
        %v2374 = vpop.permute.xlu0 %2373
        %2377 = vset.pattern.permute.xlu0 0
        %2378 = vperm.xlu0 %2377, %v2360
        %v2379 = vpop.permute.xlu0 %2378
        %2382 = vset.pattern.permute.xlu0 0
        %2383 = vperm.xlu0 %2382, %v2361
        %v2384 = vpop.permute.xlu0 %2383
        %2387 = vset.pattern.permute.xlu0 0
        %2388 = vperm.xlu0 %2387, %v2362
        %v2389 = vpop.permute.xlu0 %2388
        %2392 = vset.pattern.permute.xlu0 0
        %2393 = vperm.xlu0 %2392, %v2363
        %v2394 = vpop.permute.xlu0 %2393
        %2397 = vset.pattern.permute.xlu0 0
        %2398 = vperm.xlu0 %2397, %v2364
        %v2399 = vpop.permute.xlu0 %2398
        %2402 = vset.pattern.permute.xlu0 0
        %2403 = vperm.xlu0 %2402, %v2365
        %v2404 = vpop.permute.xlu0 %2403
        %v2407 = vsel %vm1817, %v2349, 0
        %v2410 = vsel %vm1817, %v2350, 0
        %v2413 = vsel %vm1817, %v2351, 0
        %v2416 = vsel %vm1817, %v2352, 0
        %v2419 = vsel %vm1817, %v2353, 0
        %v2422 = vsel %vm1817, %v2354, 0
        %v2425 = vsel %vm1817, %v2355, 0
        %v2428 = vsel %vm1817, %v2356, 0
        %2430 = vmatpush.msra.mxu0 0.0
        %2431 = vmatpush.msra.mxu0 0.0
        %2432 = vmatpush.msra.mxu0 0.0
        %2433 = vmatpush.msra.mxu0 0.0
        %2434 = vmatpush.msra.mxu0 0.0
        %2435 = vmatpush.msra.mxu0 0.0
        %2436 = vmatpush.msra.mxu0 0.0
        %2437 = vmatpush.msra.mxu0 0.0
        %2438 = vmatpush.msra.mxu0 %v2347
        %2439 = vmatpush.msra.mxu0 %v2346
        %2440 = vmatpush.msra.mxu0 %v2345
        %2441 = vmatpush.msra.mxu0 %v2344
        %2442 = vmatpush.msra.mxu0 %v2343
        %2443 = vmatpush.msra.mxu0 %v2342
        %2444 = vmatpush.msra.mxu0 %v2341
        %2445 = vmatpush.msra.mxu0 %v2340
        %2446 = vmatmul.f32.gmra.mxu0 %v2407
        %v2447 = vpop.f32.mrf.mxu0
        %v2448 = vadd.f32 %v2369, %v2447
        %2449 = vmatmul.f32.gmra.mxu0 %v2410
        %v2450 = vpop.f32.mrf.mxu0
        %v2451 = vadd.f32 %v2374, %v2450
        %2452 = vmatmul.f32.gmra.mxu0 %v2413
        %v2453 = vpop.f32.mrf.mxu0
        %v2454 = vadd.f32 %v2379, %v2453
        %2455 = vmatmul.f32.gmra.mxu0 %v2416
        %v2456 = vpop.f32.mrf.mxu0
        %v2457 = vadd.f32 %v2384, %v2456
        %2458 = vmatmul.f32.gmra.mxu0 %v2419
        %v2459 = vpop.f32.mrf.mxu0
        %v2460 = vadd.f32 %v2389, %v2459
        %2461 = vmatmul.f32.gmra.mxu0 %v2422
        %v2462 = vpop.f32.mrf.mxu0
        %v2463 = vadd.f32 %v2394, %v2462
        %2464 = vmatmul.f32.gmra.mxu0 %v2425
        %v2465 = vpop.f32.mrf.mxu0
        %v2466 = vadd.f32 %v2399, %v2465
        %2467 = vmatmul.f32.gmra.mxu0 %v2428
        %v2468 = vpop.f32.mrf.mxu0
        %v2469 = vadd.f32 %v2404, %v2468
        %2470 = vdwg.mxu0
        %vm2471 = vcmp.ge.f32.partialorder %v2448, 0.0
        %vm2472 = vcmp.ge.f32.partialorder %v2451, 0.0
        %vm2473 = vcmp.ge.f32.partialorder %v2454, 0.0
        %vm2474 = vcmp.ge.f32.partialorder %v2457, 0.0
        %vm2475 = vcmp.ge.f32.partialorder %v2460, 0.0
        %vm2476 = vcmp.ge.f32.partialorder %v2463, 0.0
        %vm2477 = vcmp.ge.f32.partialorder %v2466, 0.0
        %vm2478 = vcmp.ge.f32.partialorder %v2469, 0.0
        %v2479 = vmul.f32 %v2448, 0.01
        %v2480 = vmul.f32 %v2451, 0.01
        %v2481 = vmul.f32 %v2454, 0.01
        %v2482 = vmul.f32 %v2457, 0.01
        %v2483 = vmul.f32 %v2460, 0.01
        %v2484 = vmul.f32 %v2463, 0.01
        %v2485 = vmul.f32 %v2466, 0.01
        %v2486 = vmul.f32 %v2469, 0.01
        %v2487 = vsel %vm2471, %v2448, %v2479
        %v2488 = vsel %vm2472, %v2451, %v2480
        %v2489 = vsel %vm2473, %v2454, %v2481
        %v2490 = vsel %vm2474, %v2457, %v2482
        %v2491 = vsel %vm2475, %v2460, %v2483
        %v2492 = vsel %vm2476, %v2463, %v2484
        %v2493 = vsel %vm2477, %v2466, %v2485
        %v2494 = vsel %vm2478, %v2469, %v2486
        %s2495 = scalar_lea.vmem %s15, 16
        %v2496 = vld [vmem:[%s2495] sm:$0xff]
        %v2497 = vld [vmem:[%s2495 + $0x8] sm:$0xff]
        %s2498 = scalar_lea.vmem %s16, 16
        %v2499 = vld [vmem:[%s2498] sm:$0xff]
        %v2500 = vld [vmem:[%s2498 + $0x8] sm:$0xff]
        %2502 = vset.pattern.permute.xlu0 0
        %2503 = vperm.xlu0 %2502, %v2499
        %v2504 = vpop.permute.xlu0 %2503
        %2507 = vset.pattern.permute.xlu0 0
        %2508 = vperm.xlu0 %2507, %v2500
        %v2509 = vpop.permute.xlu0 %2508
        %v2512 = vsel %vm1817, %v2496, 0
        %v2515 = vsel %vm1817, %v2497, 0
        %2517 = vmatpush.msra.mxu0 0.0
        %2518 = vmatpush.msra.mxu0 0.0
        %2519 = vmatpush.msra.mxu0 0.0
        %2520 = vmatpush.msra.mxu0 0.0
        %2521 = vmatpush.msra.mxu0 0.0
        %2522 = vmatpush.msra.mxu0 0.0
        %2523 = vmatpush.msra.mxu0 0.0
        %2524 = vmatpush.msra.mxu0 0.0
        %2525 = vmatpush.msra.mxu0 %v2494
        %2526 = vmatpush.msra.mxu0 %v2493
        %2527 = vmatpush.msra.mxu0 %v2492
        %2528 = vmatpush.msra.mxu0 %v2491
        %2529 = vmatpush.msra.mxu0 %v2490
        %2530 = vmatpush.msra.mxu0 %v2489
        %2531 = vmatpush.msra.mxu0 %v2488
        %2532 = vmatpush.msra.mxu0 %v2487
        %2533 = vmatmul.f32.gmra.mxu0 %v2512
        %v2534 = vpop.f32.mrf.mxu0
        %v2535 = vadd.f32 %v2504, %v2534
        %2536 = vmatmul.f32.gmra.mxu0 %v2515
        %v2537 = vpop.f32.mrf.mxu0
        %v2538 = vadd.f32 %v2509, %v2537
        %2539 = vdwg.mxu0
        %v2540 = vtanh.pop %v2535
        %v2541 = vmul.f32 %v2540, 1.442695
        %v2542 = vpow.pop %v2541
        %v2543 = vmul.f32 %v2101, %v2542
        %v2544 = vadd.f32 %v2543, %v2538
        %v2545 = vadd.f32 %v2102, %v2540
        %s2546 = scalar_lea.vmem %s9, 8
        %v2547 = vld [vmem:[%s2546] sm:$0xff]
        %s2548 = scalar_lea.vmem %s8, 8
        %v2549 = vld [vmem:[%s2548] sm:$0xff]
        %2551 = vset.pattern.permute.xlu0 0
        %2552 = vperm.xlu0 %2551, %v2549
        %v2553 = vpop.permute.xlu0 %2552
        %v2555 = vadd.f32 %v2544, %v2553
        %2557 = vset.pattern.permute.xlu0 0
        %2558 = vperm.xlu0 %2557, %v2547
        %v2559 = vpop.permute.xlu0 %2558
        %v2561 = vmul.f32 %v2559, %v2555
        %s2562 = scalar_lea.vmem %s10, 128
        %v2563 = vld [vmem:[%s2562] sm:$0xff]
        %v2564 = vld [vmem:[%s2562 + $0x8] sm:$0xff]
        %v2565 = vld [vmem:[%s2562 + $0x10] sm:$0xff]
        %v2566 = vld [vmem:[%s2562 + $0x18] sm:$0xff]
        %v2567 = vld [vmem:[%s2562 + $0x20] sm:$0xff]
        %v2568 = vld [vmem:[%s2562 + $0x28] sm:$0xff]
        %v2569 = vld [vmem:[%s2562 + $0x30] sm:$0xff]
        %v2570 = vld [vmem:[%s2562 + $0x38] sm:$0xff]
        %v2572 = vsel %vm1248, %v2563, 0
        %v2575 = vsel %vm1248, %v2564, 0
        %v2578 = vsel %vm1248, %v2565, 0
        %v2581 = vsel %vm1248, %v2566, 0
        %v2584 = vsel %vm1248, %v2567, 0
        %v2587 = vsel %vm1248, %v2568, 0
        %v2590 = vsel %vm1248, %v2569, 0
        %v2593 = vsel %vm1248, %v2570, 0
        %2595 = vmatpush.msra.mxu0 0.0
        %2596 = vmatpush.msra.mxu0 0.0
        %2597 = vmatpush.msra.mxu0 0.0
        %2598 = vmatpush.msra.mxu0 0.0
        %2599 = vmatpush.msra.mxu0 0.0
        %2600 = vmatpush.msra.mxu0 0.0
        %2601 = vmatpush.msra.mxu0 0.0
        %2602 = vmatpush.msra.mxu0 0.0
        %2603 = vmatpush.msra.mxu0 0.0
        %2604 = vmatpush.msra.mxu0 0.0
        %2605 = vmatpush.msra.mxu0 0.0
        %2606 = vmatpush.msra.mxu0 0.0
        %2607 = vmatpush.msra.mxu0 0.0
        %2608 = vmatpush.msra.mxu0 0.0
        %2609 = vmatpush.msra.mxu0 0.0
        %2610 = vmatpush.msra.mxu0 %v2561
        %2611 = vmatmul.f32.gmra.mxu0 %v2572
        %v2612 = vpop.f32.mrf.mxu0
        %v2613 = vadd.f32 %v1507, %v2612
        %2614 = vmatmul.f32.gmra.mxu0 %v2575
        %v2615 = vpop.f32.mrf.mxu0
        %v2616 = vadd.f32 %v1510, %v2615
        %2617 = vmatmul.f32.gmra.mxu0 %v2578
        %v2618 = vpop.f32.mrf.mxu0
        %v2619 = vadd.f32 %v1513, %v2618
        %2620 = vmatmul.f32.gmra.mxu0 %v2581
        %v2621 = vpop.f32.mrf.mxu0
        %v2622 = vadd.f32 %v1516, %v2621
        %2623 = vmatmul.f32.gmra.mxu0 %v2584
        %v2624 = vpop.f32.mrf.mxu0
        %v2625 = vadd.f32 %v1519, %v2624
        %2626 = vmatmul.f32.gmra.mxu0 %v2587
        %v2627 = vpop.f32.mrf.mxu0
        %v2628 = vadd.f32 %v1522, %v2627
        %2629 = vmatmul.f32.gmra.mxu0 %v2590
        %v2630 = vpop.f32.mrf.mxu0
        %v2631 = vadd.f32 %v1525, %v2630
        %2632 = vmatmul.f32.gmra.mxu0 %v2593
        %v2633 = vpop.f32.mrf.mxu0
        %v2634 = vadd.f32 %v1528, %v2633
        %2635 = vdwg.mxu0
        %vm2636 = vcmp.ge.f32.partialorder %v2613, 0.0
        %vm2637 = vcmp.ge.f32.partialorder %v2616, 0.0
        %vm2638 = vcmp.ge.f32.partialorder %v2619, 0.0
        %vm2639 = vcmp.ge.f32.partialorder %v2622, 0.0
        %vm2640 = vcmp.ge.f32.partialorder %v2625, 0.0
        %vm2641 = vcmp.ge.f32.partialorder %v2628, 0.0
        %vm2642 = vcmp.ge.f32.partialorder %v2631, 0.0
        %vm2643 = vcmp.ge.f32.partialorder %v2634, 0.0
        %v2644 = vmul.f32 %v2613, 0.01
        %v2645 = vmul.f32 %v2616, 0.01
        %v2646 = vmul.f32 %v2619, 0.01
        %v2647 = vmul.f32 %v2622, 0.01
        %v2648 = vmul.f32 %v2625, 0.01
        %v2649 = vmul.f32 %v2628, 0.01
        %v2650 = vmul.f32 %v2631, 0.01
        %v2651 = vmul.f32 %v2634, 0.01
        %v2652 = vsel %vm2636, %v2613, %v2644
        %v2653 = vsel %vm2637, %v2616, %v2645
        %v2654 = vsel %vm2638, %v2619, %v2646
        %v2655 = vsel %vm2639, %v2622, %v2647
        %v2656 = vsel %vm2640, %v2625, %v2648
        %v2657 = vsel %vm2641, %v2628, %v2649
        %v2658 = vsel %vm2642, %v2631, %v2650
        %v2659 = vsel %vm2643, %v2634, %v2651
        %s2660 = scalar_lea.vmem %s13, 256
        %v2661 = vld [vmem:[%s2660] sm:$0xff]
        %v2662 = vld [vmem:[%s2660 + $0x8] sm:$0xff]
        %v2663 = vld [vmem:[%s2660 + $0x10] sm:$0xff]
        %v2664 = vld [vmem:[%s2660 + $0x18] sm:$0xff]
        %v2665 = vld [vmem:[%s2660 + $0x20] sm:$0xff]
        %v2666 = vld [vmem:[%s2660 + $0x28] sm:$0xff]
        %v2667 = vld [vmem:[%s2660 + $0x30] sm:$0xff]
        %v2668 = vld [vmem:[%s2660 + $0x38] sm:$0xff]
        %s2669 = scalar_lea.vmem %s14, 256
        %v2670 = vld [vmem:[%s2669] sm:$0xff]
        %v2671 = vld [vmem:[%s2669 + $0x8] sm:$0xff]
        %v2672 = vld [vmem:[%s2669 + $0x10] sm:$0xff]
        %v2673 = vld [vmem:[%s2669 + $0x18] sm:$0xff]
        %v2674 = vld [vmem:[%s2669 + $0x20] sm:$0xff]
        %v2675 = vld [vmem:[%s2669 + $0x28] sm:$0xff]
        %v2676 = vld [vmem:[%s2669 + $0x30] sm:$0xff]
        %v2677 = vld [vmem:[%s2669 + $0x38] sm:$0xff]
        %2679 = vset.pattern.permute.xlu0 0
        %2680 = vperm.xlu0 %2679, %v2670
        %v2681 = vpop.permute.xlu0 %2680
        %2684 = vset.pattern.permute.xlu0 0
        %2685 = vperm.xlu0 %2684, %v2671
        %v2686 = vpop.permute.xlu0 %2685
        %2689 = vset.pattern.permute.xlu0 0
        %2690 = vperm.xlu0 %2689, %v2672
        %v2691 = vpop.permute.xlu0 %2690
        %2694 = vset.pattern.permute.xlu0 0
        %2695 = vperm.xlu0 %2694, %v2673
        %v2696 = vpop.permute.xlu0 %2695
        %2699 = vset.pattern.permute.xlu0 0
        %2700 = vperm.xlu0 %2699, %v2674
        %v2701 = vpop.permute.xlu0 %2700
        %2704 = vset.pattern.permute.xlu0 0
        %2705 = vperm.xlu0 %2704, %v2675
        %v2706 = vpop.permute.xlu0 %2705
        %2709 = vset.pattern.permute.xlu0 0
        %2710 = vperm.xlu0 %2709, %v2676
        %v2711 = vpop.permute.xlu0 %2710
        %2714 = vset.pattern.permute.xlu0 0
        %2715 = vperm.xlu0 %2714, %v2677
        %v2716 = vpop.permute.xlu0 %2715
        %v2719 = vsel %vm1817, %v2661, 0
        %v2722 = vsel %vm1817, %v2662, 0
        %v2725 = vsel %vm1817, %v2663, 0
        %v2728 = vsel %vm1817, %v2664, 0
        %v2731 = vsel %vm1817, %v2665, 0
        %v2734 = vsel %vm1817, %v2666, 0
        %v2737 = vsel %vm1817, %v2667, 0
        %v2740 = vsel %vm1817, %v2668, 0
        %2742 = vmatpush.msra.mxu0 0.0
        %2743 = vmatpush.msra.mxu0 0.0
        %2744 = vmatpush.msra.mxu0 0.0
        %2745 = vmatpush.msra.mxu0 0.0
        %2746 = vmatpush.msra.mxu0 0.0
        %2747 = vmatpush.msra.mxu0 0.0
        %2748 = vmatpush.msra.mxu0 0.0
        %2749 = vmatpush.msra.mxu0 0.0
        %2750 = vmatpush.msra.mxu0 %v2659
        %2751 = vmatpush.msra.mxu0 %v2658
        %2752 = vmatpush.msra.mxu0 %v2657
        %2753 = vmatpush.msra.mxu0 %v2656
        %2754 = vmatpush.msra.mxu0 %v2655
        %2755 = vmatpush.msra.mxu0 %v2654
        %2756 = vmatpush.msra.mxu0 %v2653
        %2757 = vmatpush.msra.mxu0 %v2652
        %2758 = vmatmul.f32.gmra.mxu0 %v2719
        %v2759 = vpop.f32.mrf.mxu0
        %v2760 = vadd.f32 %v2681, %v2759
        %2761 = vmatmul.f32.gmra.mxu0 %v2722
        %v2762 = vpop.f32.mrf.mxu0
        %v2763 = vadd.f32 %v2686, %v2762
        %2764 = vmatmul.f32.gmra.mxu0 %v2725
        %v2765 = vpop.f32.mrf.mxu0
        %v2766 = vadd.f32 %v2691, %v2765
        %2767 = vmatmul.f32.gmra.mxu0 %v2728
        %v2768 = vpop.f32.mrf.mxu0
        %v2769 = vadd.f32 %v2696, %v2768
        %2770 = vmatmul.f32.gmra.mxu0 %v2731
        %v2771 = vpop.f32.mrf.mxu0
        %v2772 = vadd.f32 %v2701, %v2771
        %2773 = vmatmul.f32.gmra.mxu0 %v2734
        %v2774 = vpop.f32.mrf.mxu0
        %v2775 = vadd.f32 %v2706, %v2774
        %2776 = vmatmul.f32.gmra.mxu0 %v2737
        %v2777 = vpop.f32.mrf.mxu0
        %v2778 = vadd.f32 %v2711, %v2777
        %2779 = vmatmul.f32.gmra.mxu0 %v2740
        %v2780 = vpop.f32.mrf.mxu0
        %v2781 = vadd.f32 %v2716, %v2780
        %2782 = vdwg.mxu0
        %vm2783 = vcmp.ge.f32.partialorder %v2760, 0.0
        %vm2784 = vcmp.ge.f32.partialorder %v2763, 0.0
        %vm2785 = vcmp.ge.f32.partialorder %v2766, 0.0
        %vm2786 = vcmp.ge.f32.partialorder %v2769, 0.0
        %vm2787 = vcmp.ge.f32.partialorder %v2772, 0.0
        %vm2788 = vcmp.ge.f32.partialorder %v2775, 0.0
        %vm2789 = vcmp.ge.f32.partialorder %v2778, 0.0
        %vm2790 = vcmp.ge.f32.partialorder %v2781, 0.0
        %v2791 = vmul.f32 %v2760, 0.01
        %v2792 = vmul.f32 %v2763, 0.01
        %v2793 = vmul.f32 %v2766, 0.01
        %v2794 = vmul.f32 %v2769, 0.01
        %v2795 = vmul.f32 %v2772, 0.01
        %v2796 = vmul.f32 %v2775, 0.01
        %v2797 = vmul.f32 %v2778, 0.01
        %v2798 = vmul.f32 %v2781, 0.01
        %v2799 = vsel %vm2783, %v2760, %v2791
        %v2800 = vsel %vm2784, %v2763, %v2792
        %v2801 = vsel %vm2785, %v2766, %v2793
        %v2802 = vsel %vm2786, %v2769, %v2794
        %v2803 = vsel %vm2787, %v2772, %v2795
        %v2804 = vsel %vm2788, %v2775, %v2796
        %v2805 = vsel %vm2789, %v2778, %v2797
        %v2806 = vsel %vm2790, %v2781, %v2798
        %s2807 = scalar_lea.vmem %s13, 320
        %v2808 = vld [vmem:[%s2807] sm:$0xff]
        %v2809 = vld [vmem:[%s2807 + $0x8] sm:$0xff]
        %v2810 = vld [vmem:[%s2807 + $0x10] sm:$0xff]
        %v2811 = vld [vmem:[%s2807 + $0x18] sm:$0xff]
        %v2812 = vld [vmem:[%s2807 + $0x20] sm:$0xff]
        %v2813 = vld [vmem:[%s2807 + $0x28] sm:$0xff]
        %v2814 = vld [vmem:[%s2807 + $0x30] sm:$0xff]
        %v2815 = vld [vmem:[%s2807 + $0x38] sm:$0xff]
        %s2816 = scalar_lea.vmem %s14, 320
        %v2817 = vld [vmem:[%s2816] sm:$0xff]
        %v2818 = vld [vmem:[%s2816 + $0x8] sm:$0xff]
        %v2819 = vld [vmem:[%s2816 + $0x10] sm:$0xff]
        %v2820 = vld [vmem:[%s2816 + $0x18] sm:$0xff]
        %v2821 = vld [vmem:[%s2816 + $0x20] sm:$0xff]
        %v2822 = vld [vmem:[%s2816 + $0x28] sm:$0xff]
        %v2823 = vld [vmem:[%s2816 + $0x30] sm:$0xff]
        %v2824 = vld [vmem:[%s2816 + $0x38] sm:$0xff]
        %2826 = vset.pattern.permute.xlu0 0
        %2827 = vperm.xlu0 %2826, %v2817
        %v2828 = vpop.permute.xlu0 %2827
        %2831 = vset.pattern.permute.xlu0 0
        %2832 = vperm.xlu0 %2831, %v2818
        %v2833 = vpop.permute.xlu0 %2832
        %2836 = vset.pattern.permute.xlu0 0
        %2837 = vperm.xlu0 %2836, %v2819
        %v2838 = vpop.permute.xlu0 %2837
        %2841 = vset.pattern.permute.xlu0 0
        %2842 = vperm.xlu0 %2841, %v2820
        %v2843 = vpop.permute.xlu0 %2842
        %2846 = vset.pattern.permute.xlu0 0
        %2847 = vperm.xlu0 %2846, %v2821
        %v2848 = vpop.permute.xlu0 %2847
        %2851 = vset.pattern.permute.xlu0 0
        %2852 = vperm.xlu0 %2851, %v2822
        %v2853 = vpop.permute.xlu0 %2852
        %2856 = vset.pattern.permute.xlu0 0
        %2857 = vperm.xlu0 %2856, %v2823
        %v2858 = vpop.permute.xlu0 %2857
        %2861 = vset.pattern.permute.xlu0 0
        %2862 = vperm.xlu0 %2861, %v2824
        %v2863 = vpop.permute.xlu0 %2862
        %v2866 = vsel %vm1817, %v2808, 0
        %v2869 = vsel %vm1817, %v2809, 0
        %v2872 = vsel %vm1817, %v2810, 0
        %v2875 = vsel %vm1817, %v2811, 0
        %v2878 = vsel %vm1817, %v2812, 0
        %v2881 = vsel %vm1817, %v2813, 0
        %v2884 = vsel %vm1817, %v2814, 0
        %v2887 = vsel %vm1817, %v2815, 0
        %2889 = vmatpush.msra.mxu0 0.0
        %2890 = vmatpush.msra.mxu0 0.0
        %2891 = vmatpush.msra.mxu0 0.0
        %2892 = vmatpush.msra.mxu0 0.0
        %2893 = vmatpush.msra.mxu0 0.0
        %2894 = vmatpush.msra.mxu0 0.0
        %2895 = vmatpush.msra.mxu0 0.0
        %2896 = vmatpush.msra.mxu0 0.0
        %2897 = vmatpush.msra.mxu0 %v2806
        %2898 = vmatpush.msra.mxu0 %v2805
        %2899 = vmatpush.msra.mxu0 %v2804
        %2900 = vmatpush.msra.mxu0 %v2803
        %2901 = vmatpush.msra.mxu0 %v2802
        %2902 = vmatpush.msra.mxu0 %v2801
        %2903 = vmatpush.msra.mxu0 %v2800
        %2904 = vmatpush.msra.mxu0 %v2799
        %2905 = vmatmul.f32.gmra.mxu0 %v2866
        %v2906 = vpop.f32.mrf.mxu0
        %v2907 = vadd.f32 %v2828, %v2906
        %2908 = vmatmul.f32.gmra.mxu0 %v2869
        %v2909 = vpop.f32.mrf.mxu0
        %v2910 = vadd.f32 %v2833, %v2909
        %2911 = vmatmul.f32.gmra.mxu0 %v2872
        %v2912 = vpop.f32.mrf.mxu0
        %v2913 = vadd.f32 %v2838, %v2912
        %2914 = vmatmul.f32.gmra.mxu0 %v2875
        %v2915 = vpop.f32.mrf.mxu0
        %v2916 = vadd.f32 %v2843, %v2915
        %2917 = vmatmul.f32.gmra.mxu0 %v2878
        %v2918 = vpop.f32.mrf.mxu0
        %v2919 = vadd.f32 %v2848, %v2918
        %2920 = vmatmul.f32.gmra.mxu0 %v2881
        %v2921 = vpop.f32.mrf.mxu0
        %v2922 = vadd.f32 %v2853, %v2921
        %2923 = vmatmul.f32.gmra.mxu0 %v2884
        %v2924 = vpop.f32.mrf.mxu0
        %v2925 = vadd.f32 %v2858, %v2924
        %2926 = vmatmul.f32.gmra.mxu0 %v2887
        %v2927 = vpop.f32.mrf.mxu0
        %v2928 = vadd.f32 %v2863, %v2927
        %2929 = vdwg.mxu0
        %vm2930 = vcmp.ge.f32.partialorder %v2907, 0.0
        %vm2931 = vcmp.ge.f32.partialorder %v2910, 0.0
        %vm2932 = vcmp.ge.f32.partialorder %v2913, 0.0
        %vm2933 = vcmp.ge.f32.partialorder %v2916, 0.0
        %vm2934 = vcmp.ge.f32.partialorder %v2919, 0.0
        %vm2935 = vcmp.ge.f32.partialorder %v2922, 0.0
        %vm2936 = vcmp.ge.f32.partialorder %v2925, 0.0
        %vm2937 = vcmp.ge.f32.partialorder %v2928, 0.0
        %v2938 = vmul.f32 %v2907, 0.01
        %v2939 = vmul.f32 %v2910, 0.01
        %v2940 = vmul.f32 %v2913, 0.01
        %v2941 = vmul.f32 %v2916, 0.01
        %v2942 = vmul.f32 %v2919, 0.01
        %v2943 = vmul.f32 %v2922, 0.01
        %v2944 = vmul.f32 %v2925, 0.01
        %v2945 = vmul.f32 %v2928, 0.01
        %v2946 = vsel %vm2930, %v2907, %v2938
        %v2947 = vsel %vm2931, %v2910, %v2939
        %v2948 = vsel %vm2932, %v2913, %v2940
        %v2949 = vsel %vm2933, %v2916, %v2941
        %v2950 = vsel %vm2934, %v2919, %v2942
        %v2951 = vsel %vm2935, %v2922, %v2943
        %v2952 = vsel %vm2936, %v2925, %v2944
        %v2953 = vsel %vm2937, %v2928, %v2945
        %s2954 = scalar_lea.vmem %s15, 32
        %v2955 = vld [vmem:[%s2954] sm:$0xff]
        %v2956 = vld [vmem:[%s2954 + $0x8] sm:$0xff]
        %s2957 = scalar_lea.vmem %s16, 32
        %v2958 = vld [vmem:[%s2957] sm:$0xff]
        %v2959 = vld [vmem:[%s2957 + $0x8] sm:$0xff]
        %2961 = vset.pattern.permute.xlu0 0
        %2962 = vperm.xlu0 %2961, %v2958
        %v2963 = vpop.permute.xlu0 %2962
        %2966 = vset.pattern.permute.xlu0 0
        %2967 = vperm.xlu0 %2966, %v2959
        %v2968 = vpop.permute.xlu0 %2967
        %v2971 = vsel %vm1817, %v2955, 0
        %v2974 = vsel %vm1817, %v2956, 0
        %2976 = vmatpush.msra.mxu0 0.0
        %2977 = vmatpush.msra.mxu0 0.0
        %2978 = vmatpush.msra.mxu0 0.0
        %2979 = vmatpush.msra.mxu0 0.0
        %2980 = vmatpush.msra.mxu0 0.0
        %2981 = vmatpush.msra.mxu0 0.0
        %2982 = vmatpush.msra.mxu0 0.0
        %2983 = vmatpush.msra.mxu0 0.0
        %2984 = vmatpush.msra.mxu0 %v2953
        %2985 = vmatpush.msra.mxu0 %v2952
        %2986 = vmatpush.msra.mxu0 %v2951
        %2987 = vmatpush.msra.mxu0 %v2950
        %2988 = vmatpush.msra.mxu0 %v2949
        %2989 = vmatpush.msra.mxu0 %v2948
        %2990 = vmatpush.msra.mxu0 %v2947
        %2991 = vmatpush.msra.mxu0 %v2946
        %2992 = vmatmul.f32.gmra.mxu0 %v2971
        %v2993 = vpop.f32.mrf.mxu0
        %v2994 = vadd.f32 %v2963, %v2993
        %2995 = vmatmul.f32.gmra.mxu0 %v2974
        %v2996 = vpop.f32.mrf.mxu0
        %v2997 = vadd.f32 %v2968, %v2996
        %2998 = vdwg.mxu0
        %v2999 = vtanh.pop %v2994
        %v3000 = vmul.f32 %v2999, 1.442695
        %v3001 = vpow.pop %v3000
        %v3002 = vmul.f32 %v2561, %v3001
        %v3003 = vadd.f32 %v3002, %v2997
        %v3004 = vadd.f32 %v2545, %v2999
        %s3005 = scalar_lea.vmem %s10, 192
        %v3006 = vld [vmem:[%s3005] sm:$0xff]
        %v3007 = vld [vmem:[%s3005 + $0x8] sm:$0xff]
        %v3008 = vld [vmem:[%s3005 + $0x10] sm:$0xff]
        %v3009 = vld [vmem:[%s3005 + $0x18] sm:$0xff]
        %v3010 = vld [vmem:[%s3005 + $0x20] sm:$0xff]
        %v3011 = vld [vmem:[%s3005 + $0x28] sm:$0xff]
        %v3012 = vld [vmem:[%s3005 + $0x30] sm:$0xff]
        %v3013 = vld [vmem:[%s3005 + $0x38] sm:$0xff]
        %v3015 = vsel %vm1248, %v3006, 0
        %v3018 = vsel %vm1248, %v3007, 0
        %v3021 = vsel %vm1248, %v3008, 0
        %v3024 = vsel %vm1248, %v3009, 0
        %v3027 = vsel %vm1248, %v3010, 0
        %v3030 = vsel %vm1248, %v3011, 0
        %v3033 = vsel %vm1248, %v3012, 0
        %v3036 = vsel %vm1248, %v3013, 0
        %3038 = vmatpush.msra.mxu0 0.0
        %3039 = vmatpush.msra.mxu0 0.0
        %3040 = vmatpush.msra.mxu0 0.0
        %3041 = vmatpush.msra.mxu0 0.0
        %3042 = vmatpush.msra.mxu0 0.0
        %3043 = vmatpush.msra.mxu0 0.0
        %3044 = vmatpush.msra.mxu0 0.0
        %3045 = vmatpush.msra.mxu0 0.0
        %3046 = vmatpush.msra.mxu0 0.0
        %3047 = vmatpush.msra.mxu0 0.0
        %3048 = vmatpush.msra.mxu0 0.0
        %3049 = vmatpush.msra.mxu0 0.0
        %3050 = vmatpush.msra.mxu0 0.0
        %3051 = vmatpush.msra.mxu0 0.0
        %3052 = vmatpush.msra.mxu0 0.0
        %3053 = vmatpush.msra.mxu0 %v3003
        %3054 = vmatmul.f32.gmra.mxu0 %v3015
        %v3055 = vpop.f32.mrf.mxu0
        %v3056 = vadd.f32 %v1531, %v3055
        %3057 = vmatmul.f32.gmra.mxu0 %v3018
        %v3058 = vpop.f32.mrf.mxu0
        %v3059 = vadd.f32 %v1534, %v3058
        %3060 = vmatmul.f32.gmra.mxu0 %v3021
        %v3061 = vpop.f32.mrf.mxu0
        %v3062 = vadd.f32 %v1537, %v3061
        %3063 = vmatmul.f32.gmra.mxu0 %v3024
        %v3064 = vpop.f32.mrf.mxu0
        %v3065 = vadd.f32 %v1540, %v3064
        %3066 = vmatmul.f32.gmra.mxu0 %v3027
        %v3067 = vpop.f32.mrf.mxu0
        %v3068 = vadd.f32 %v1543, %v3067
        %3069 = vmatmul.f32.gmra.mxu0 %v3030
        %v3070 = vpop.f32.mrf.mxu0
        %v3071 = vadd.f32 %v1546, %v3070
        %3072 = vmatmul.f32.gmra.mxu0 %v3033
        %v3073 = vpop.f32.mrf.mxu0
        %v3074 = vadd.f32 %v1549, %v3073
        %3075 = vmatmul.f32.gmra.mxu0 %v3036
        %v3076 = vpop.f32.mrf.mxu0
        %v3077 = vadd.f32 %v1552, %v3076
        %3078 = vdwg.mxu0
        %vm3079 = vcmp.ge.f32.partialorder %v3056, 0.0
        %vm3080 = vcmp.ge.f32.partialorder %v3059, 0.0
        %vm3081 = vcmp.ge.f32.partialorder %v3062, 0.0
        %vm3082 = vcmp.ge.f32.partialorder %v3065, 0.0
        %vm3083 = vcmp.ge.f32.partialorder %v3068, 0.0
        %vm3084 = vcmp.ge.f32.partialorder %v3071, 0.0
        %vm3085 = vcmp.ge.f32.partialorder %v3074, 0.0
        %vm3086 = vcmp.ge.f32.partialorder %v3077, 0.0
        %v3087 = vmul.f32 %v3056, 0.01
        %v3088 = vmul.f32 %v3059, 0.01
        %v3089 = vmul.f32 %v3062, 0.01
        %v3090 = vmul.f32 %v3065, 0.01
        %v3091 = vmul.f32 %v3068, 0.01
        %v3092 = vmul.f32 %v3071, 0.01
        %v3093 = vmul.f32 %v3074, 0.01
        %v3094 = vmul.f32 %v3077, 0.01
        %v3095 = vsel %vm3079, %v3056, %v3087
        %v3096 = vsel %vm3080, %v3059, %v3088
        %v3097 = vsel %vm3081, %v3062, %v3089
        %v3098 = vsel %vm3082, %v3065, %v3090
        %v3099 = vsel %vm3083, %v3068, %v3091
        %v3100 = vsel %vm3084, %v3071, %v3092
        %v3101 = vsel %vm3085, %v3074, %v3093
        %v3102 = vsel %vm3086, %v3077, %v3094
        %s3103 = scalar_lea.vmem %s13, 384
        %v3104 = vld [vmem:[%s3103] sm:$0xff]
        %v3105 = vld [vmem:[%s3103 + $0x8] sm:$0xff]
        %v3106 = vld [vmem:[%s3103 + $0x10] sm:$0xff]
        %v3107 = vld [vmem:[%s3103 + $0x18] sm:$0xff]
        %v3108 = vld [vmem:[%s3103 + $0x20] sm:$0xff]
        %v3109 = vld [vmem:[%s3103 + $0x28] sm:$0xff]
        %v3110 = vld [vmem:[%s3103 + $0x30] sm:$0xff]
        %v3111 = vld [vmem:[%s3103 + $0x38] sm:$0xff]
        %s3112 = scalar_lea.vmem %s14, 384
        %v3113 = vld [vmem:[%s3112] sm:$0xff]
        %v3114 = vld [vmem:[%s3112 + $0x8] sm:$0xff]
        %v3115 = vld [vmem:[%s3112 + $0x10] sm:$0xff]
        %v3116 = vld [vmem:[%s3112 + $0x18] sm:$0xff]
        %v3117 = vld [vmem:[%s3112 + $0x20] sm:$0xff]
        %v3118 = vld [vmem:[%s3112 + $0x28] sm:$0xff]
        %v3119 = vld [vmem:[%s3112 + $0x30] sm:$0xff]
        %v3120 = vld [vmem:[%s3112 + $0x38] sm:$0xff]
        %3122 = vset.pattern.permute.xlu0 0
        %3123 = vperm.xlu0 %3122, %v3113
        %v3124 = vpop.permute.xlu0 %3123
        %3127 = vset.pattern.permute.xlu0 0
        %3128 = vperm.xlu0 %3127, %v3114
        %v3129 = vpop.permute.xlu0 %3128
        %3132 = vset.pattern.permute.xlu0 0
        %3133 = vperm.xlu0 %3132, %v3115
        %v3134 = vpop.permute.xlu0 %3133
        %3137 = vset.pattern.permute.xlu0 0
        %3138 = vperm.xlu0 %3137, %v3116
        %v3139 = vpop.permute.xlu0 %3138
        %3142 = vset.pattern.permute.xlu0 0
        %3143 = vperm.xlu0 %3142, %v3117
        %v3144 = vpop.permute.xlu0 %3143
        %3147 = vset.pattern.permute.xlu0 0
        %3148 = vperm.xlu0 %3147, %v3118
        %v3149 = vpop.permute.xlu0 %3148
        %3152 = vset.pattern.permute.xlu0 0
        %3153 = vperm.xlu0 %3152, %v3119
        %v3154 = vpop.permute.xlu0 %3153
        %3157 = vset.pattern.permute.xlu0 0
        %3158 = vperm.xlu0 %3157, %v3120
        %v3159 = vpop.permute.xlu0 %3158
        %v3162 = vsel %vm1817, %v3104, 0
        %v3165 = vsel %vm1817, %v3105, 0
        %v3168 = vsel %vm1817, %v3106, 0
        %v3171 = vsel %vm1817, %v3107, 0
        %v3174 = vsel %vm1817, %v3108, 0
        %v3177 = vsel %vm1817, %v3109, 0
        %v3180 = vsel %vm1817, %v3110, 0
        %v3183 = vsel %vm1817, %v3111, 0
        %3185 = vmatpush.msra.mxu0 0.0
        %3186 = vmatpush.msra.mxu0 0.0
        %3187 = vmatpush.msra.mxu0 0.0
        %3188 = vmatpush.msra.mxu0 0.0
        %3189 = vmatpush.msra.mxu0 0.0
        %3190 = vmatpush.msra.mxu0 0.0
        %3191 = vmatpush.msra.mxu0 0.0
        %3192 = vmatpush.msra.mxu0 0.0
        %3193 = vmatpush.msra.mxu0 %v3102
        %3194 = vmatpush.msra.mxu0 %v3101
        %3195 = vmatpush.msra.mxu0 %v3100
        %3196 = vmatpush.msra.mxu0 %v3099
        %3197 = vmatpush.msra.mxu0 %v3098
        %3198 = vmatpush.msra.mxu0 %v3097
        %3199 = vmatpush.msra.mxu0 %v3096
        %3200 = vmatpush.msra.mxu0 %v3095
        %3201 = vmatmul.f32.gmra.mxu0 %v3162
        %v3202 = vpop.f32.mrf.mxu0
        %v3203 = vadd.f32 %v3124, %v3202
        %3204 = vmatmul.f32.gmra.mxu0 %v3165
        %v3205 = vpop.f32.mrf.mxu0
        %v3206 = vadd.f32 %v3129, %v3205
        %3207 = vmatmul.f32.gmra.mxu0 %v3168
        %v3208 = vpop.f32.mrf.mxu0
        %v3209 = vadd.f32 %v3134, %v3208
        %3210 = vmatmul.f32.gmra.mxu0 %v3171
        %v3211 = vpop.f32.mrf.mxu0
        %v3212 = vadd.f32 %v3139, %v3211
        %3213 = vmatmul.f32.gmra.mxu0 %v3174
        %v3214 = vpop.f32.mrf.mxu0
        %v3215 = vadd.f32 %v3144, %v3214
        %3216 = vmatmul.f32.gmra.mxu0 %v3177
        %v3217 = vpop.f32.mrf.mxu0
        %v3218 = vadd.f32 %v3149, %v3217
        %3219 = vmatmul.f32.gmra.mxu0 %v3180
        %v3220 = vpop.f32.mrf.mxu0
        %v3221 = vadd.f32 %v3154, %v3220
        %3222 = vmatmul.f32.gmra.mxu0 %v3183
        %v3223 = vpop.f32.mrf.mxu0
        %v3224 = vadd.f32 %v3159, %v3223
        %3225 = vdwg.mxu0
        %vm3226 = vcmp.ge.f32.partialorder %v3203, 0.0
        %vm3227 = vcmp.ge.f32.partialorder %v3206, 0.0
        %vm3228 = vcmp.ge.f32.partialorder %v3209, 0.0
        %vm3229 = vcmp.ge.f32.partialorder %v3212, 0.0
        %vm3230 = vcmp.ge.f32.partialorder %v3215, 0.0
        %vm3231 = vcmp.ge.f32.partialorder %v3218, 0.0
        %vm3232 = vcmp.ge.f32.partialorder %v3221, 0.0
        %vm3233 = vcmp.ge.f32.partialorder %v3224, 0.0
        %v3234 = vmul.f32 %v3203, 0.01
        %v3235 = vmul.f32 %v3206, 0.01
        %v3236 = vmul.f32 %v3209, 0.01
        %v3237 = vmul.f32 %v3212, 0.01
        %v3238 = vmul.f32 %v3215, 0.01
        %v3239 = vmul.f32 %v3218, 0.01
        %v3240 = vmul.f32 %v3221, 0.01
        %v3241 = vmul.f32 %v3224, 0.01
        %v3242 = vsel %vm3226, %v3203, %v3234
        %v3243 = vsel %vm3227, %v3206, %v3235
        %v3244 = vsel %vm3228, %v3209, %v3236
        %v3245 = vsel %vm3229, %v3212, %v3237
        %v3246 = vsel %vm3230, %v3215, %v3238
        %v3247 = vsel %vm3231, %v3218, %v3239
        %v3248 = vsel %vm3232, %v3221, %v3240
        %v3249 = vsel %vm3233, %v3224, %v3241
        %s3250 = scalar_lea.vmem %s13, 448
        %v3251 = vld [vmem:[%s3250] sm:$0xff]
        %v3252 = vld [vmem:[%s3250 + $0x8] sm:$0xff]
        %v3253 = vld [vmem:[%s3250 + $0x10] sm:$0xff]
        %v3254 = vld [vmem:[%s3250 + $0x18] sm:$0xff]
        %v3255 = vld [vmem:[%s3250 + $0x20] sm:$0xff]
        %v3256 = vld [vmem:[%s3250 + $0x28] sm:$0xff]
        %v3257 = vld [vmem:[%s3250 + $0x30] sm:$0xff]
        %v3258 = vld [vmem:[%s3250 + $0x38] sm:$0xff]
        %s3259 = scalar_lea.vmem %s14, 448
        %v3260 = vld [vmem:[%s3259] sm:$0xff]
        %v3261 = vld [vmem:[%s3259 + $0x8] sm:$0xff]
        %v3262 = vld [vmem:[%s3259 + $0x10] sm:$0xff]
        %v3263 = vld [vmem:[%s3259 + $0x18] sm:$0xff]
        %v3264 = vld [vmem:[%s3259 + $0x20] sm:$0xff]
        %v3265 = vld [vmem:[%s3259 + $0x28] sm:$0xff]
        %v3266 = vld [vmem:[%s3259 + $0x30] sm:$0xff]
        %v3267 = vld [vmem:[%s3259 + $0x38] sm:$0xff]
        %3269 = vset.pattern.permute.xlu0 0
        %3270 = vperm.xlu0 %3269, %v3260
        %v3271 = vpop.permute.xlu0 %3270
        %3274 = vset.pattern.permute.xlu0 0
        %3275 = vperm.xlu0 %3274, %v3261
        %v3276 = vpop.permute.xlu0 %3275
        %3279 = vset.pattern.permute.xlu0 0
        %3280 = vperm.xlu0 %3279, %v3262
        %v3281 = vpop.permute.xlu0 %3280
        %3284 = vset.pattern.permute.xlu0 0
        %3285 = vperm.xlu0 %3284, %v3263
        %v3286 = vpop.permute.xlu0 %3285
        %3289 = vset.pattern.permute.xlu0 0
        %3290 = vperm.xlu0 %3289, %v3264
        %v3291 = vpop.permute.xlu0 %3290
        %3294 = vset.pattern.permute.xlu0 0
        %3295 = vperm.xlu0 %3294, %v3265
        %v3296 = vpop.permute.xlu0 %3295
        %3299 = vset.pattern.permute.xlu0 0
        %3300 = vperm.xlu0 %3299, %v3266
        %v3301 = vpop.permute.xlu0 %3300
        %3304 = vset.pattern.permute.xlu0 0
        %3305 = vperm.xlu0 %3304, %v3267
        %v3306 = vpop.permute.xlu0 %3305
        %v3309 = vsel %vm1817, %v3251, 0
        %v3312 = vsel %vm1817, %v3252, 0
        %v3315 = vsel %vm1817, %v3253, 0
        %v3318 = vsel %vm1817, %v3254, 0
        %v3321 = vsel %vm1817, %v3255, 0
        %v3324 = vsel %vm1817, %v3256, 0
        %v3327 = vsel %vm1817, %v3257, 0
        %v3330 = vsel %vm1817, %v3258, 0
        %3332 = vmatpush.msra.mxu0 0.0
        %3333 = vmatpush.msra.mxu0 0.0
        %3334 = vmatpush.msra.mxu0 0.0
        %3335 = vmatpush.msra.mxu0 0.0
        %3336 = vmatpush.msra.mxu0 0.0
        %3337 = vmatpush.msra.mxu0 0.0
        %3338 = vmatpush.msra.mxu0 0.0
        %3339 = vmatpush.msra.mxu0 0.0
        %3340 = vmatpush.msra.mxu0 %v3249
        %3341 = vmatpush.msra.mxu0 %v3248
        %3342 = vmatpush.msra.mxu0 %v3247
        %3343 = vmatpush.msra.mxu0 %v3246
        %3344 = vmatpush.msra.mxu0 %v3245
        %3345 = vmatpush.msra.mxu0 %v3244
        %3346 = vmatpush.msra.mxu0 %v3243
        %3347 = vmatpush.msra.mxu0 %v3242
        %3348 = vmatmul.f32.gmra.mxu0 %v3309
        %v3349 = vpop.f32.mrf.mxu0
        %v3350 = vadd.f32 %v3271, %v3349
        %3351 = vmatmul.f32.gmra.mxu0 %v3312
        %v3352 = vpop.f32.mrf.mxu0
        %v3353 = vadd.f32 %v3276, %v3352
        %3354 = vmatmul.f32.gmra.mxu0 %v3315
        %v3355 = vpop.f32.mrf.mxu0
        %v3356 = vadd.f32 %v3281, %v3355
        %3357 = vmatmul.f32.gmra.mxu0 %v3318
        %v3358 = vpop.f32.mrf.mxu0
        %v3359 = vadd.f32 %v3286, %v3358
        %3360 = vmatmul.f32.gmra.mxu0 %v3321
        %v3361 = vpop.f32.mrf.mxu0
        %v3362 = vadd.f32 %v3291, %v3361
        %3363 = vmatmul.f32.gmra.mxu0 %v3324
        %v3364 = vpop.f32.mrf.mxu0
        %v3365 = vadd.f32 %v3296, %v3364
        %3366 = vmatmul.f32.gmra.mxu0 %v3327
        %v3367 = vpop.f32.mrf.mxu0
        %v3368 = vadd.f32 %v3301, %v3367
        %3369 = vmatmul.f32.gmra.mxu0 %v3330
        %v3370 = vpop.f32.mrf.mxu0
        %v3371 = vadd.f32 %v3306, %v3370
        %3372 = vdwg.mxu0
        %vm3373 = vcmp.ge.f32.partialorder %v3350, 0.0
        %vm3374 = vcmp.ge.f32.partialorder %v3353, 0.0
        %vm3375 = vcmp.ge.f32.partialorder %v3356, 0.0
        %vm3376 = vcmp.ge.f32.partialorder %v3359, 0.0
        %vm3377 = vcmp.ge.f32.partialorder %v3362, 0.0
        %vm3378 = vcmp.ge.f32.partialorder %v3365, 0.0
        %vm3379 = vcmp.ge.f32.partialorder %v3368, 0.0
        %vm3380 = vcmp.ge.f32.partialorder %v3371, 0.0
        %v3381 = vmul.f32 %v3350, 0.01
        %v3382 = vmul.f32 %v3353, 0.01
        %v3383 = vmul.f32 %v3356, 0.01
        %v3384 = vmul.f32 %v3359, 0.01
        %v3385 = vmul.f32 %v3362, 0.01
        %v3386 = vmul.f32 %v3365, 0.01
        %v3387 = vmul.f32 %v3368, 0.01
        %v3388 = vmul.f32 %v3371, 0.01
        %v3389 = vsel %vm3373, %v3350, %v3381
        %v3390 = vsel %vm3374, %v3353, %v3382
        %v3391 = vsel %vm3375, %v3356, %v3383
        %v3392 = vsel %vm3376, %v3359, %v3384
        %v3393 = vsel %vm3377, %v3362, %v3385
        %v3394 = vsel %vm3378, %v3365, %v3386
        %v3395 = vsel %vm3379, %v3368, %v3387
        %v3396 = vsel %vm3380, %v3371, %v3388
        %s3397 = scalar_lea.vmem %s15, 48
        %v3398 = vld [vmem:[%s3397] sm:$0xff]
        %v3399 = vld [vmem:[%s3397 + $0x8] sm:$0xff]
        %s3400 = scalar_lea.vmem %s16, 48
        %v3401 = vld [vmem:[%s3400] sm:$0xff]
        %v3402 = vld [vmem:[%s3400 + $0x8] sm:$0xff]
        %3404 = vset.pattern.permute.xlu0 0
        %3405 = vperm.xlu0 %3404, %v3401
        %v3406 = vpop.permute.xlu0 %3405
        %3409 = vset.pattern.permute.xlu0 0
        %3410 = vperm.xlu0 %3409, %v3402
        %v3411 = vpop.permute.xlu0 %3410
        %v3414 = vsel %vm1817, %v3398, 0
        %v3417 = vsel %vm1817, %v3399, 0
        %3419 = vmatpush.msra.mxu0 0.0
        %3420 = vmatpush.msra.mxu0 0.0
        %3421 = vmatpush.msra.mxu0 0.0
        %3422 = vmatpush.msra.mxu0 0.0
        %3423 = vmatpush.msra.mxu0 0.0
        %3424 = vmatpush.msra.mxu0 0.0
        %3425 = vmatpush.msra.mxu0 0.0
        %3426 = vmatpush.msra.mxu0 0.0
        %3427 = vmatpush.msra.mxu0 %v3396
        %3428 = vmatpush.msra.mxu0 %v3395
        %3429 = vmatpush.msra.mxu0 %v3394
        %3430 = vmatpush.msra.mxu0 %v3393
        %3431 = vmatpush.msra.mxu0 %v3392
        %3432 = vmatpush.msra.mxu0 %v3391
        %3433 = vmatpush.msra.mxu0 %v3390
        %3434 = vmatpush.msra.mxu0 %v3389
        %3435 = vmatmul.f32.gmra.mxu0 %v3414
        %v3436 = vpop.f32.mrf.mxu0
        %v3437 = vadd.f32 %v3406, %v3436
        %3438 = vmatmul.f32.gmra.mxu0 %v3417
        %v3439 = vpop.f32.mrf.mxu0
        %v3440 = vadd.f32 %v3411, %v3439
        %3441 = vdwg.mxu0
        %v3442 = vtanh.pop %v3437
        %v3443 = vmul.f32 %v3442, 1.442695
        %v3444 = vpow.pop %v3443
        %v3445 = vmul.f32 %v3003, %v3444
        %v3446 = vadd.f32 %v3445, %v3440
        %v3447 = vadd.f32 %v3004, %v3442
        %s3448 = scalar_lea.vmem %s9, 16
        %v3449 = vld [vmem:[%s3448] sm:$0xff]
        %s3450 = scalar_lea.vmem %s8, 16
        %v3451 = vld [vmem:[%s3450] sm:$0xff]
        %3453 = vset.pattern.permute.xlu0 0
        %3454 = vperm.xlu0 %3453, %v3451
        %v3455 = vpop.permute.xlu0 %3454
        %v3457 = vadd.f32 %v3446, %v3455
        %3459 = vset.pattern.permute.xlu0 0
        %3460 = vperm.xlu0 %3459, %v3449
        %v3461 = vpop.permute.xlu0 %3460
        %v3463 = vmul.f32 %v3461, %v3457
        %s3464 = scalar_lea.vmem %s10, 256
        %v3465 = vld [vmem:[%s3464] sm:$0xff]
        %v3466 = vld [vmem:[%s3464 + $0x8] sm:$0xff]
        %v3467 = vld [vmem:[%s3464 + $0x10] sm:$0xff]
        %v3468 = vld [vmem:[%s3464 + $0x18] sm:$0xff]
        %v3469 = vld [vmem:[%s3464 + $0x20] sm:$0xff]
        %v3470 = vld [vmem:[%s3464 + $0x28] sm:$0xff]
        %v3471 = vld [vmem:[%s3464 + $0x30] sm:$0xff]
        %v3472 = vld [vmem:[%s3464 + $0x38] sm:$0xff]
        %v3474 = vsel %vm1248, %v3465, 0
        %v3477 = vsel %vm1248, %v3466, 0
        %v3480 = vsel %vm1248, %v3467, 0
        %v3483 = vsel %vm1248, %v3468, 0
        %v3486 = vsel %vm1248, %v3469, 0
        %v3489 = vsel %vm1248, %v3470, 0
        %v3492 = vsel %vm1248, %v3471, 0
        %v3495 = vsel %vm1248, %v3472, 0
        %3497 = vmatpush.msra.mxu0 0.0
        %3498 = vmatpush.msra.mxu0 0.0
        %3499 = vmatpush.msra.mxu0 0.0
        %3500 = vmatpush.msra.mxu0 0.0
        %3501 = vmatpush.msra.mxu0 0.0
        %3502 = vmatpush.msra.mxu0 0.0
        %3503 = vmatpush.msra.mxu0 0.0
        %3504 = vmatpush.msra.mxu0 0.0
        %3505 = vmatpush.msra.mxu0 0.0
        %3506 = vmatpush.msra.mxu0 0.0
        %3507 = vmatpush.msra.mxu0 0.0
        %3508 = vmatpush.msra.mxu0 0.0
        %3509 = vmatpush.msra.mxu0 0.0
        %3510 = vmatpush.msra.mxu0 0.0
        %3511 = vmatpush.msra.mxu0 0.0
        %3512 = vmatpush.msra.mxu0 %v3463
        %3513 = vmatmul.f32.gmra.mxu0 %v3474
        %v3514 = vpop.f32.mrf.mxu0
        %v3515 = vadd.f32 %v1555, %v3514
        %3516 = vmatmul.f32.gmra.mxu0 %v3477
        %v3517 = vpop.f32.mrf.mxu0
        %v3518 = vadd.f32 %v1558, %v3517
        %3519 = vmatmul.f32.gmra.mxu0 %v3480
        %v3520 = vpop.f32.mrf.mxu0
        %v3521 = vadd.f32 %v1561, %v3520
        %3522 = vmatmul.f32.gmra.mxu0 %v3483
        %v3523 = vpop.f32.mrf.mxu0
        %v3524 = vadd.f32 %v1564, %v3523
        %3525 = vmatmul.f32.gmra.mxu0 %v3486
        %v3526 = vpop.f32.mrf.mxu0
        %v3527 = vadd.f32 %v1567, %v3526
        %3528 = vmatmul.f32.gmra.mxu0 %v3489
        %v3529 = vpop.f32.mrf.mxu0
        %v3530 = vadd.f32 %v1570, %v3529
        %3531 = vmatmul.f32.gmra.mxu0 %v3492
        %v3532 = vpop.f32.mrf.mxu0
        %v3533 = vadd.f32 %v1573, %v3532
        %3534 = vmatmul.f32.gmra.mxu0 %v3495
        %v3535 = vpop.f32.mrf.mxu0
        %v3536 = vadd.f32 %v1576, %v3535
        %3537 = vdwg.mxu0
        %vm3538 = vcmp.ge.f32.partialorder %v3515, 0.0
        %vm3539 = vcmp.ge.f32.partialorder %v3518, 0.0
        %vm3540 = vcmp.ge.f32.partialorder %v3521, 0.0
        %vm3541 = vcmp.ge.f32.partialorder %v3524, 0.0
        %vm3542 = vcmp.ge.f32.partialorder %v3527, 0.0
        %vm3543 = vcmp.ge.f32.partialorder %v3530, 0.0
        %vm3544 = vcmp.ge.f32.partialorder %v3533, 0.0
        %vm3545 = vcmp.ge.f32.partialorder %v3536, 0.0
        %v3546 = vmul.f32 %v3515, 0.01
        %v3547 = vmul.f32 %v3518, 0.01
        %v3548 = vmul.f32 %v3521, 0.01
        %v3549 = vmul.f32 %v3524, 0.01
        %v3550 = vmul.f32 %v3527, 0.01
        %v3551 = vmul.f32 %v3530, 0.01
        %v3552 = vmul.f32 %v3533, 0.01
        %v3553 = vmul.f32 %v3536, 0.01
        %v3554 = vsel %vm3538, %v3515, %v3546
        %v3555 = vsel %vm3539, %v3518, %v3547
        %v3556 = vsel %vm3540, %v3521, %v3548
        %v3557 = vsel %vm3541, %v3524, %v3549
        %v3558 = vsel %vm3542, %v3527, %v3550
        %v3559 = vsel %vm3543, %v3530, %v3551
        %v3560 = vsel %vm3544, %v3533, %v3552
        %v3561 = vsel %vm3545, %v3536, %v3553
        %s3562 = scalar_lea.vmem %s13, 512
        %v3563 = vld [vmem:[%s3562] sm:$0xff]
        %v3564 = vld [vmem:[%s3562 + $0x8] sm:$0xff]
        %v3565 = vld [vmem:[%s3562 + $0x10] sm:$0xff]
        %v3566 = vld [vmem:[%s3562 + $0x18] sm:$0xff]
        %v3567 = vld [vmem:[%s3562 + $0x20] sm:$0xff]
        %v3568 = vld [vmem:[%s3562 + $0x28] sm:$0xff]
        %v3569 = vld [vmem:[%s3562 + $0x30] sm:$0xff]
        %v3570 = vld [vmem:[%s3562 + $0x38] sm:$0xff]
        %s3571 = scalar_lea.vmem %s14, 512
        %v3572 = vld [vmem:[%s3571] sm:$0xff]
        %v3573 = vld [vmem:[%s3571 + $0x8] sm:$0xff]
        %v3574 = vld [vmem:[%s3571 + $0x10] sm:$0xff]
        %v3575 = vld [vmem:[%s3571 + $0x18] sm:$0xff]
        %v3576 = vld [vmem:[%s3571 + $0x20] sm:$0xff]
        %v3577 = vld [vmem:[%s3571 + $0x28] sm:$0xff]
        %v3578 = vld [vmem:[%s3571 + $0x30] sm:$0xff]
        %v3579 = vld [vmem:[%s3571 + $0x38] sm:$0xff]
        %3581 = vset.pattern.permute.xlu0 0
        %3582 = vperm.xlu0 %3581, %v3572
        %v3583 = vpop.permute.xlu0 %3582
        %3586 = vset.pattern.permute.xlu0 0
        %3587 = vperm.xlu0 %3586, %v3573
        %v3588 = vpop.permute.xlu0 %3587
        %3591 = vset.pattern.permute.xlu0 0
        %3592 = vperm.xlu0 %3591, %v3574
        %v3593 = vpop.permute.xlu0 %3592
        %3596 = vset.pattern.permute.xlu0 0
        %3597 = vperm.xlu0 %3596, %v3575
        %v3598 = vpop.permute.xlu0 %3597
        %3601 = vset.pattern.permute.xlu0 0
        %3602 = vperm.xlu0 %3601, %v3576
        %v3603 = vpop.permute.xlu0 %3602
        %3606 = vset.pattern.permute.xlu0 0
        %3607 = vperm.xlu0 %3606, %v3577
        %v3608 = vpop.permute.xlu0 %3607
        %3611 = vset.pattern.permute.xlu0 0
        %3612 = vperm.xlu0 %3611, %v3578
        %v3613 = vpop.permute.xlu0 %3612
        %3616 = vset.pattern.permute.xlu0 0
        %3617 = vperm.xlu0 %3616, %v3579
        %v3618 = vpop.permute.xlu0 %3617
        %v3621 = vsel %vm1817, %v3563, 0
        %v3624 = vsel %vm1817, %v3564, 0
        %v3627 = vsel %vm1817, %v3565, 0
        %v3630 = vsel %vm1817, %v3566, 0
        %v3633 = vsel %vm1817, %v3567, 0
        %v3636 = vsel %vm1817, %v3568, 0
        %v3639 = vsel %vm1817, %v3569, 0
        %v3642 = vsel %vm1817, %v3570, 0
        %3644 = vmatpush.msra.mxu0 0.0
        %3645 = vmatpush.msra.mxu0 0.0
        %3646 = vmatpush.msra.mxu0 0.0
        %3647 = vmatpush.msra.mxu0 0.0
        %3648 = vmatpush.msra.mxu0 0.0
        %3649 = vmatpush.msra.mxu0 0.0
        %3650 = vmatpush.msra.mxu0 0.0
        %3651 = vmatpush.msra.mxu0 0.0
        %3652 = vmatpush.msra.mxu0 %v3561
        %3653 = vmatpush.msra.mxu0 %v3560
        %3654 = vmatpush.msra.mxu0 %v3559
        %3655 = vmatpush.msra.mxu0 %v3558
        %3656 = vmatpush.msra.mxu0 %v3557
        %3657 = vmatpush.msra.mxu0 %v3556
        %3658 = vmatpush.msra.mxu0 %v3555
        %3659 = vmatpush.msra.mxu0 %v3554
        %3660 = vmatmul.f32.gmra.mxu0 %v3621
        %v3661 = vpop.f32.mrf.mxu0
        %v3662 = vadd.f32 %v3583, %v3661
        %3663 = vmatmul.f32.gmra.mxu0 %v3624
        %v3664 = vpop.f32.mrf.mxu0
        %v3665 = vadd.f32 %v3588, %v3664
        %3666 = vmatmul.f32.gmra.mxu0 %v3627
        %v3667 = vpop.f32.mrf.mxu0
        %v3668 = vadd.f32 %v3593, %v3667
        %3669 = vmatmul.f32.gmra.mxu0 %v3630
        %v3670 = vpop.f32.mrf.mxu0
        %v3671 = vadd.f32 %v3598, %v3670
        %3672 = vmatmul.f32.gmra.mxu0 %v3633
        %v3673 = vpop.f32.mrf.mxu0
        %v3674 = vadd.f32 %v3603, %v3673
        %3675 = vmatmul.f32.gmra.mxu0 %v3636
        %v3676 = vpop.f32.mrf.mxu0
        %v3677 = vadd.f32 %v3608, %v3676
        %3678 = vmatmul.f32.gmra.mxu0 %v3639
        %v3679 = vpop.f32.mrf.mxu0
        %v3680 = vadd.f32 %v3613, %v3679
        %3681 = vmatmul.f32.gmra.mxu0 %v3642
        %v3682 = vpop.f32.mrf.mxu0
        %v3683 = vadd.f32 %v3618, %v3682
        %3684 = vdwg.mxu0
        %vm3685 = vcmp.ge.f32.partialorder %v3662, 0.0
        %vm3686 = vcmp.ge.f32.partialorder %v3665, 0.0
        %vm3687 = vcmp.ge.f32.partialorder %v3668, 0.0
        %vm3688 = vcmp.ge.f32.partialorder %v3671, 0.0
        %vm3689 = vcmp.ge.f32.partialorder %v3674, 0.0
        %vm3690 = vcmp.ge.f32.partialorder %v3677, 0.0
        %vm3691 = vcmp.ge.f32.partialorder %v3680, 0.0
        %vm3692 = vcmp.ge.f32.partialorder %v3683, 0.0
        %v3693 = vmul.f32 %v3662, 0.01
        %v3694 = vmul.f32 %v3665, 0.01
        %v3695 = vmul.f32 %v3668, 0.01
        %v3696 = vmul.f32 %v3671, 0.01
        %v3697 = vmul.f32 %v3674, 0.01
        %v3698 = vmul.f32 %v3677, 0.01
        %v3699 = vmul.f32 %v3680, 0.01
        %v3700 = vmul.f32 %v3683, 0.01
        %v3701 = vsel %vm3685, %v3662, %v3693
        %v3702 = vsel %vm3686, %v3665, %v3694
        %v3703 = vsel %vm3687, %v3668, %v3695
        %v3704 = vsel %vm3688, %v3671, %v3696
        %v3705 = vsel %vm3689, %v3674, %v3697
        %v3706 = vsel %vm3690, %v3677, %v3698
        %v3707 = vsel %vm3691, %v3680, %v3699
        %v3708 = vsel %vm3692, %v3683, %v3700
        %s3709 = scalar_lea.vmem %s13, 576
        %v3710 = vld [vmem:[%s3709] sm:$0xff]
        %v3711 = vld [vmem:[%s3709 + $0x8] sm:$0xff]
        %v3712 = vld [vmem:[%s3709 + $0x10] sm:$0xff]
        %v3713 = vld [vmem:[%s3709 + $0x18] sm:$0xff]
        %v3714 = vld [vmem:[%s3709 + $0x20] sm:$0xff]
        %v3715 = vld [vmem:[%s3709 + $0x28] sm:$0xff]
        %v3716 = vld [vmem:[%s3709 + $0x30] sm:$0xff]
        %v3717 = vld [vmem:[%s3709 + $0x38] sm:$0xff]
        %s3718 = scalar_lea.vmem %s14, 576
        %v3719 = vld [vmem:[%s3718] sm:$0xff]
        %v3720 = vld [vmem:[%s3718 + $0x8] sm:$0xff]
        %v3721 = vld [vmem:[%s3718 + $0x10] sm:$0xff]
        %v3722 = vld [vmem:[%s3718 + $0x18] sm:$0xff]
        %v3723 = vld [vmem:[%s3718 + $0x20] sm:$0xff]
        %v3724 = vld [vmem:[%s3718 + $0x28] sm:$0xff]
        %v3725 = vld [vmem:[%s3718 + $0x30] sm:$0xff]
        %v3726 = vld [vmem:[%s3718 + $0x38] sm:$0xff]
        %3728 = vset.pattern.permute.xlu0 0
        %3729 = vperm.xlu0 %3728, %v3719
        %v3730 = vpop.permute.xlu0 %3729
        %3733 = vset.pattern.permute.xlu0 0
        %3734 = vperm.xlu0 %3733, %v3720
        %v3735 = vpop.permute.xlu0 %3734
        %3738 = vset.pattern.permute.xlu0 0
        %3739 = vperm.xlu0 %3738, %v3721
        %v3740 = vpop.permute.xlu0 %3739
        %3743 = vset.pattern.permute.xlu0 0
        %3744 = vperm.xlu0 %3743, %v3722
        %v3745 = vpop.permute.xlu0 %3744
        %3748 = vset.pattern.permute.xlu0 0
        %3749 = vperm.xlu0 %3748, %v3723
        %v3750 = vpop.permute.xlu0 %3749
        %3753 = vset.pattern.permute.xlu0 0
        %3754 = vperm.xlu0 %3753, %v3724
        %v3755 = vpop.permute.xlu0 %3754
        %3758 = vset.pattern.permute.xlu0 0
        %3759 = vperm.xlu0 %3758, %v3725
        %v3760 = vpop.permute.xlu0 %3759
        %3763 = vset.pattern.permute.xlu0 0
        %3764 = vperm.xlu0 %3763, %v3726
        %v3765 = vpop.permute.xlu0 %3764
        %v3768 = vsel %vm1817, %v3710, 0
        %v3771 = vsel %vm1817, %v3711, 0
        %v3774 = vsel %vm1817, %v3712, 0
        %v3777 = vsel %vm1817, %v3713, 0
        %v3780 = vsel %vm1817, %v3714, 0
        %v3783 = vsel %vm1817, %v3715, 0
        %v3786 = vsel %vm1817, %v3716, 0
        %v3789 = vsel %vm1817, %v3717, 0
        %3791 = vmatpush.msra.mxu0 0.0
        %3792 = vmatpush.msra.mxu0 0.0
        %3793 = vmatpush.msra.mxu0 0.0
        %3794 = vmatpush.msra.mxu0 0.0
        %3795 = vmatpush.msra.mxu0 0.0
        %3796 = vmatpush.msra.mxu0 0.0
        %3797 = vmatpush.msra.mxu0 0.0
        %3798 = vmatpush.msra.mxu0 0.0
        %3799 = vmatpush.msra.mxu0 %v3708
        %3800 = vmatpush.msra.mxu0 %v3707
        %3801 = vmatpush.msra.mxu0 %v3706
        %3802 = vmatpush.msra.mxu0 %v3705
        %3803 = vmatpush.msra.mxu0 %v3704
        %3804 = vmatpush.msra.mxu0 %v3703
        %3805 = vmatpush.msra.mxu0 %v3702
        %3806 = vmatpush.msra.mxu0 %v3701
        %3807 = vmatmul.f32.gmra.mxu0 %v3768
        %v3808 = vpop.f32.mrf.mxu0
        %v3809 = vadd.f32 %v3730, %v3808
        %3810 = vmatmul.f32.gmra.mxu0 %v3771
        %v3811 = vpop.f32.mrf.mxu0
        %v3812 = vadd.f32 %v3735, %v3811
        %3813 = vmatmul.f32.gmra.mxu0 %v3774
        %v3814 = vpop.f32.mrf.mxu0
        %v3815 = vadd.f32 %v3740, %v3814
        %3816 = vmatmul.f32.gmra.mxu0 %v3777
        %v3817 = vpop.f32.mrf.mxu0
        %v3818 = vadd.f32 %v3745, %v3817
        %3819 = vmatmul.f32.gmra.mxu0 %v3780
        %v3820 = vpop.f32.mrf.mxu0
        %v3821 = vadd.f32 %v3750, %v3820
        %3822 = vmatmul.f32.gmra.mxu0 %v3783
        %v3823 = vpop.f32.mrf.mxu0
        %v3824 = vadd.f32 %v3755, %v3823
        %3825 = vmatmul.f32.gmra.mxu0 %v3786
        %v3826 = vpop.f32.mrf.mxu0
        %v3827 = vadd.f32 %v3760, %v3826
        %3828 = vmatmul.f32.gmra.mxu0 %v3789
        %v3829 = vpop.f32.mrf.mxu0
        %v3830 = vadd.f32 %v3765, %v3829
        %3831 = vdwg.mxu0
        %vm3832 = vcmp.ge.f32.partialorder %v3809, 0.0
        %vm3833 = vcmp.ge.f32.partialorder %v3812, 0.0
        %vm3834 = vcmp.ge.f32.partialorder %v3815, 0.0
        %vm3835 = vcmp.ge.f32.partialorder %v3818, 0.0
        %vm3836 = vcmp.ge.f32.partialorder %v3821, 0.0
        %vm3837 = vcmp.ge.f32.partialorder %v3824, 0.0
        %vm3838 = vcmp.ge.f32.partialorder %v3827, 0.0
        %vm3839 = vcmp.ge.f32.partialorder %v3830, 0.0
        %v3840 = vmul.f32 %v3809, 0.01
        %v3841 = vmul.f32 %v3812, 0.01
        %v3842 = vmul.f32 %v3815, 0.01
        %v3843 = vmul.f32 %v3818, 0.01
        %v3844 = vmul.f32 %v3821, 0.01
        %v3845 = vmul.f32 %v3824, 0.01
        %v3846 = vmul.f32 %v3827, 0.01
        %v3847 = vmul.f32 %v3830, 0.01
        %v3848 = vsel %vm3832, %v3809, %v3840
        %v3849 = vsel %vm3833, %v3812, %v3841
        %v3850 = vsel %vm3834, %v3815, %v3842
        %v3851 = vsel %vm3835, %v3818, %v3843
        %v3852 = vsel %vm3836, %v3821, %v3844
        %v3853 = vsel %vm3837, %v3824, %v3845
        %v3854 = vsel %vm3838, %v3827, %v3846
        %v3855 = vsel %vm3839, %v3830, %v3847
        %s3856 = scalar_lea.vmem %s15, 64
        %v3857 = vld [vmem:[%s3856] sm:$0xff]
        %v3858 = vld [vmem:[%s3856 + $0x8] sm:$0xff]
        %s3859 = scalar_lea.vmem %s16, 64
        %v3860 = vld [vmem:[%s3859] sm:$0xff]
        %v3861 = vld [vmem:[%s3859 + $0x8] sm:$0xff]
        %3863 = vset.pattern.permute.xlu0 0
        %3864 = vperm.xlu0 %3863, %v3860
        %v3865 = vpop.permute.xlu0 %3864
        %3868 = vset.pattern.permute.xlu0 0
        %3869 = vperm.xlu0 %3868, %v3861
        %v3870 = vpop.permute.xlu0 %3869
        %v3873 = vsel %vm1817, %v3857, 0
        %v3876 = vsel %vm1817, %v3858, 0
        %3878 = vmatpush.msra.mxu0 0.0
        %3879 = vmatpush.msra.mxu0 0.0
        %3880 = vmatpush.msra.mxu0 0.0
        %3881 = vmatpush.msra.mxu0 0.0
        %3882 = vmatpush.msra.mxu0 0.0
        %3883 = vmatpush.msra.mxu0 0.0
        %3884 = vmatpush.msra.mxu0 0.0
        %3885 = vmatpush.msra.mxu0 0.0
        %3886 = vmatpush.msra.mxu0 %v3855
        %3887 = vmatpush.msra.mxu0 %v3854
        %3888 = vmatpush.msra.mxu0 %v3853
        %3889 = vmatpush.msra.mxu0 %v3852
        %3890 = vmatpush.msra.mxu0 %v3851
        %3891 = vmatpush.msra.mxu0 %v3850
        %3892 = vmatpush.msra.mxu0 %v3849
        %3893 = vmatpush.msra.mxu0 %v3848
        %3894 = vmatmul.f32.gmra.mxu0 %v3873
        %v3895 = vpop.f32.mrf.mxu0
        %v3896 = vadd.f32 %v3865, %v3895
        %3897 = vmatmul.f32.gmra.mxu0 %v3876
        %v3898 = vpop.f32.mrf.mxu0
        %v3899 = vadd.f32 %v3870, %v3898
        %3900 = vdwg.mxu0
        %v3901 = vtanh.pop %v3896
        %v3902 = vmul.f32 %v3901, 1.442695
        %v3903 = vpow.pop %v3902
        %v3904 = vmul.f32 %v3463, %v3903
        %v3905 = vadd.f32 %v3904, %v3899
        %v3906 = vadd.f32 %v3447, %v3901
        %s3907 = scalar_lea.vmem %s10, 320
        %v3908 = vld [vmem:[%s3907] sm:$0xff]
        %v3909 = vld [vmem:[%s3907 + $0x8] sm:$0xff]
        %v3910 = vld [vmem:[%s3907 + $0x10] sm:$0xff]
        %v3911 = vld [vmem:[%s3907 + $0x18] sm:$0xff]
        %v3912 = vld [vmem:[%s3907 + $0x20] sm:$0xff]
        %v3913 = vld [vmem:[%s3907 + $0x28] sm:$0xff]
        %v3914 = vld [vmem:[%s3907 + $0x30] sm:$0xff]
        %v3915 = vld [vmem:[%s3907 + $0x38] sm:$0xff]
        %v3917 = vsel %vm1248, %v3908, 0
        %v3920 = vsel %vm1248, %v3909, 0
        %v3923 = vsel %vm1248, %v3910, 0
        %v3926 = vsel %vm1248, %v3911, 0
        %v3929 = vsel %vm1248, %v3912, 0
        %v3932 = vsel %vm1248, %v3913, 0
        %v3935 = vsel %vm1248, %v3914, 0
        %v3938 = vsel %vm1248, %v3915, 0
        %3940 = vmatpush.msra.mxu0 0.0
        %3941 = vmatpush.msra.mxu0 0.0
        %3942 = vmatpush.msra.mxu0 0.0
        %3943 = vmatpush.msra.mxu0 0.0
        %3944 = vmatpush.msra.mxu0 0.0
        %3945 = vmatpush.msra.mxu0 0.0
        %3946 = vmatpush.msra.mxu0 0.0
        %3947 = vmatpush.msra.mxu0 0.0
        %3948 = vmatpush.msra.mxu0 0.0
        %3949 = vmatpush.msra.mxu0 0.0
        %3950 = vmatpush.msra.mxu0 0.0
        %3951 = vmatpush.msra.mxu0 0.0
        %3952 = vmatpush.msra.mxu0 0.0
        %3953 = vmatpush.msra.mxu0 0.0
        %3954 = vmatpush.msra.mxu0 0.0
        %3955 = vmatpush.msra.mxu0 %v3905
        %3956 = vmatmul.f32.gmra.mxu0 %v3917
        %v3957 = vpop.f32.mrf.mxu0
        %v3958 = vadd.f32 %v1579, %v3957
        %3959 = vmatmul.f32.gmra.mxu0 %v3920
        %v3960 = vpop.f32.mrf.mxu0
        %v3961 = vadd.f32 %v1582, %v3960
        %3962 = vmatmul.f32.gmra.mxu0 %v3923
        %v3963 = vpop.f32.mrf.mxu0
        %v3964 = vadd.f32 %v1585, %v3963
        %3965 = vmatmul.f32.gmra.mxu0 %v3926
        %v3966 = vpop.f32.mrf.mxu0
        %v3967 = vadd.f32 %v1588, %v3966
        %3968 = vmatmul.f32.gmra.mxu0 %v3929
        %v3969 = vpop.f32.mrf.mxu0
        %v3970 = vadd.f32 %v1591, %v3969
        %3971 = vmatmul.f32.gmra.mxu0 %v3932
        %v3972 = vpop.f32.mrf.mxu0
        %v3973 = vadd.f32 %v1594, %v3972
        %3974 = vmatmul.f32.gmra.mxu0 %v3935
        %v3975 = vpop.f32.mrf.mxu0
        %v3976 = vadd.f32 %v1597, %v3975
        %3977 = vmatmul.f32.gmra.mxu0 %v3938
        %v3978 = vpop.f32.mrf.mxu0
        %v3979 = vadd.f32 %v1600, %v3978
        %3980 = vdwg.mxu0
        %vm3981 = vcmp.ge.f32.partialorder %v3958, 0.0
        %vm3982 = vcmp.ge.f32.partialorder %v3961, 0.0
        %vm3983 = vcmp.ge.f32.partialorder %v3964, 0.0
        %vm3984 = vcmp.ge.f32.partialorder %v3967, 0.0
        %vm3985 = vcmp.ge.f32.partialorder %v3970, 0.0
        %vm3986 = vcmp.ge.f32.partialorder %v3973, 0.0
        %vm3987 = vcmp.ge.f32.partialorder %v3976, 0.0
        %vm3988 = vcmp.ge.f32.partialorder %v3979, 0.0
        %v3989 = vmul.f32 %v3958, 0.01
        %v3990 = vmul.f32 %v3961, 0.01
        %v3991 = vmul.f32 %v3964, 0.01
        %v3992 = vmul.f32 %v3967, 0.01
        %v3993 = vmul.f32 %v3970, 0.01
        %v3994 = vmul.f32 %v3973, 0.01
        %v3995 = vmul.f32 %v3976, 0.01
        %v3996 = vmul.f32 %v3979, 0.01
        %v3997 = vsel %vm3981, %v3958, %v3989
        %v3998 = vsel %vm3982, %v3961, %v3990
        %v3999 = vsel %vm3983, %v3964, %v3991
        %v4000 = vsel %vm3984, %v3967, %v3992
        %v4001 = vsel %vm3985, %v3970, %v3993
        %v4002 = vsel %vm3986, %v3973, %v3994
        %v4003 = vsel %vm3987, %v3976, %v3995
        %v4004 = vsel %vm3988, %v3979, %v3996
        %s4005 = scalar_lea.vmem %s13, 640
        %v4006 = vld [vmem:[%s4005] sm:$0xff]
        %v4007 = vld [vmem:[%s4005 + $0x8] sm:$0xff]
        %v4008 = vld [vmem:[%s4005 + $0x10] sm:$0xff]
        %v4009 = vld [vmem:[%s4005 + $0x18] sm:$0xff]
        %v4010 = vld [vmem:[%s4005 + $0x20] sm:$0xff]
        %v4011 = vld [vmem:[%s4005 + $0x28] sm:$0xff]
        %v4012 = vld [vmem:[%s4005 + $0x30] sm:$0xff]
        %v4013 = vld [vmem:[%s4005 + $0x38] sm:$0xff]
        %s4014 = scalar_lea.vmem %s14, 640
        %v4015 = vld [vmem:[%s4014] sm:$0xff]
        %v4016 = vld [vmem:[%s4014 + $0x8] sm:$0xff]
        %v4017 = vld [vmem:[%s4014 + $0x10] sm:$0xff]
        %v4018 = vld [vmem:[%s4014 + $0x18] sm:$0xff]
        %v4019 = vld [vmem:[%s4014 + $0x20] sm:$0xff]
        %v4020 = vld [vmem:[%s4014 + $0x28] sm:$0xff]
        %v4021 = vld [vmem:[%s4014 + $0x30] sm:$0xff]
        %v4022 = vld [vmem:[%s4014 + $0x38] sm:$0xff]
        %4024 = vset.pattern.permute.xlu0 0
        %4025 = vperm.xlu0 %4024, %v4015
        %v4026 = vpop.permute.xlu0 %4025
        %4029 = vset.pattern.permute.xlu0 0
        %4030 = vperm.xlu0 %4029, %v4016
        %v4031 = vpop.permute.xlu0 %4030
        %4034 = vset.pattern.permute.xlu0 0
        %4035 = vperm.xlu0 %4034, %v4017
        %v4036 = vpop.permute.xlu0 %4035
        %4039 = vset.pattern.permute.xlu0 0
        %4040 = vperm.xlu0 %4039, %v4018
        %v4041 = vpop.permute.xlu0 %4040
        %4044 = vset.pattern.permute.xlu0 0
        %4045 = vperm.xlu0 %4044, %v4019
        %v4046 = vpop.permute.xlu0 %4045
        %4049 = vset.pattern.permute.xlu0 0
        %4050 = vperm.xlu0 %4049, %v4020
        %v4051 = vpop.permute.xlu0 %4050
        %4054 = vset.pattern.permute.xlu0 0
        %4055 = vperm.xlu0 %4054, %v4021
        %v4056 = vpop.permute.xlu0 %4055
        %4059 = vset.pattern.permute.xlu0 0
        %4060 = vperm.xlu0 %4059, %v4022
        %v4061 = vpop.permute.xlu0 %4060
        %v4064 = vsel %vm1817, %v4006, 0
        %v4067 = vsel %vm1817, %v4007, 0
        %v4070 = vsel %vm1817, %v4008, 0
        %v4073 = vsel %vm1817, %v4009, 0
        %v4076 = vsel %vm1817, %v4010, 0
        %v4079 = vsel %vm1817, %v4011, 0
        %v4082 = vsel %vm1817, %v4012, 0
        %v4085 = vsel %vm1817, %v4013, 0
        %4087 = vmatpush.msra.mxu0 0.0
        %4088 = vmatpush.msra.mxu0 0.0
        %4089 = vmatpush.msra.mxu0 0.0
        %4090 = vmatpush.msra.mxu0 0.0
        %4091 = vmatpush.msra.mxu0 0.0
        %4092 = vmatpush.msra.mxu0 0.0
        %4093 = vmatpush.msra.mxu0 0.0
        %4094 = vmatpush.msra.mxu0 0.0
        %4095 = vmatpush.msra.mxu0 %v4004
        %4096 = vmatpush.msra.mxu0 %v4003
        %4097 = vmatpush.msra.mxu0 %v4002
        %4098 = vmatpush.msra.mxu0 %v4001
        %4099 = vmatpush.msra.mxu0 %v4000
        %4100 = vmatpush.msra.mxu0 %v3999
        %4101 = vmatpush.msra.mxu0 %v3998
        %4102 = vmatpush.msra.mxu0 %v3997
        %4103 = vmatmul.f32.gmra.mxu0 %v4064
        %v4104 = vpop.f32.mrf.mxu0
        %v4105 = vadd.f32 %v4026, %v4104
        %4106 = vmatmul.f32.gmra.mxu0 %v4067
        %v4107 = vpop.f32.mrf.mxu0
        %v4108 = vadd.f32 %v4031, %v4107
        %4109 = vmatmul.f32.gmra.mxu0 %v4070
        %v4110 = vpop.f32.mrf.mxu0
        %v4111 = vadd.f32 %v4036, %v4110
        %4112 = vmatmul.f32.gmra.mxu0 %v4073
        %v4113 = vpop.f32.mrf.mxu0
        %v4114 = vadd.f32 %v4041, %v4113
        %4115 = vmatmul.f32.gmra.mxu0 %v4076
        %v4116 = vpop.f32.mrf.mxu0
        %v4117 = vadd.f32 %v4046, %v4116
        %4118 = vmatmul.f32.gmra.mxu0 %v4079
        %v4119 = vpop.f32.mrf.mxu0
        %v4120 = vadd.f32 %v4051, %v4119
        %4121 = vmatmul.f32.gmra.mxu0 %v4082
        %v4122 = vpop.f32.mrf.mxu0
        %v4123 = vadd.f32 %v4056, %v4122
        %4124 = vmatmul.f32.gmra.mxu0 %v4085
        %v4125 = vpop.f32.mrf.mxu0
        %v4126 = vadd.f32 %v4061, %v4125
        %4127 = vdwg.mxu0
        %vm4128 = vcmp.ge.f32.partialorder %v4105, 0.0
        %vm4129 = vcmp.ge.f32.partialorder %v4108, 0.0
        %vm4130 = vcmp.ge.f32.partialorder %v4111, 0.0
        %vm4131 = vcmp.ge.f32.partialorder %v4114, 0.0
        %vm4132 = vcmp.ge.f32.partialorder %v4117, 0.0
        %vm4133 = vcmp.ge.f32.partialorder %v4120, 0.0
        %vm4134 = vcmp.ge.f32.partialorder %v4123, 0.0
        %vm4135 = vcmp.ge.f32.partialorder %v4126, 0.0
        %v4136 = vmul.f32 %v4105, 0.01
        %v4137 = vmul.f32 %v4108, 0.01
        %v4138 = vmul.f32 %v4111, 0.01
        %v4139 = vmul.f32 %v4114, 0.01
        %v4140 = vmul.f32 %v4117, 0.01
        %v4141 = vmul.f32 %v4120, 0.01
        %v4142 = vmul.f32 %v4123, 0.01
        %v4143 = vmul.f32 %v4126, 0.01
        %v4144 = vsel %vm4128, %v4105, %v4136
        %v4145 = vsel %vm4129, %v4108, %v4137
        %v4146 = vsel %vm4130, %v4111, %v4138
        %v4147 = vsel %vm4131, %v4114, %v4139
        %v4148 = vsel %vm4132, %v4117, %v4140
        %v4149 = vsel %vm4133, %v4120, %v4141
        %v4150 = vsel %vm4134, %v4123, %v4142
        %v4151 = vsel %vm4135, %v4126, %v4143
        %s4152 = scalar_lea.vmem %s13, 704
        %v4153 = vld [vmem:[%s4152] sm:$0xff]
        %v4154 = vld [vmem:[%s4152 + $0x8] sm:$0xff]
        %v4155 = vld [vmem:[%s4152 + $0x10] sm:$0xff]
        %v4156 = vld [vmem:[%s4152 + $0x18] sm:$0xff]
        %v4157 = vld [vmem:[%s4152 + $0x20] sm:$0xff]
        %v4158 = vld [vmem:[%s4152 + $0x28] sm:$0xff]
        %v4159 = vld [vmem:[%s4152 + $0x30] sm:$0xff]
        %v4160 = vld [vmem:[%s4152 + $0x38] sm:$0xff]
        %s4161 = scalar_lea.vmem %s14, 704
        %v4162 = vld [vmem:[%s4161] sm:$0xff]
        %v4163 = vld [vmem:[%s4161 + $0x8] sm:$0xff]
        %v4164 = vld [vmem:[%s4161 + $0x10] sm:$0xff]
        %v4165 = vld [vmem:[%s4161 + $0x18] sm:$0xff]
        %v4166 = vld [vmem:[%s4161 + $0x20] sm:$0xff]
        %v4167 = vld [vmem:[%s4161 + $0x28] sm:$0xff]
        %v4168 = vld [vmem:[%s4161 + $0x30] sm:$0xff]
        %v4169 = vld [vmem:[%s4161 + $0x38] sm:$0xff]
        %4171 = vset.pattern.permute.xlu0 0
        %4172 = vperm.xlu0 %4171, %v4162
        %v4173 = vpop.permute.xlu0 %4172
        %4176 = vset.pattern.permute.xlu0 0
        %4177 = vperm.xlu0 %4176, %v4163
        %v4178 = vpop.permute.xlu0 %4177
        %4181 = vset.pattern.permute.xlu0 0
        %4182 = vperm.xlu0 %4181, %v4164
        %v4183 = vpop.permute.xlu0 %4182
        %4186 = vset.pattern.permute.xlu0 0
        %4187 = vperm.xlu0 %4186, %v4165
        %v4188 = vpop.permute.xlu0 %4187
        %4191 = vset.pattern.permute.xlu0 0
        %4192 = vperm.xlu0 %4191, %v4166
        %v4193 = vpop.permute.xlu0 %4192
        %4196 = vset.pattern.permute.xlu0 0
        %4197 = vperm.xlu0 %4196, %v4167
        %v4198 = vpop.permute.xlu0 %4197
        %4201 = vset.pattern.permute.xlu0 0
        %4202 = vperm.xlu0 %4201, %v4168
        %v4203 = vpop.permute.xlu0 %4202
        %4206 = vset.pattern.permute.xlu0 0
        %4207 = vperm.xlu0 %4206, %v4169
        %v4208 = vpop.permute.xlu0 %4207
        %v4211 = vsel %vm1817, %v4153, 0
        %v4214 = vsel %vm1817, %v4154, 0
        %v4217 = vsel %vm1817, %v4155, 0
        %v4220 = vsel %vm1817, %v4156, 0
        %v4223 = vsel %vm1817, %v4157, 0
        %v4226 = vsel %vm1817, %v4158, 0
        %v4229 = vsel %vm1817, %v4159, 0
        %v4232 = vsel %vm1817, %v4160, 0
        %4234 = vmatpush.msra.mxu0 0.0
        %4235 = vmatpush.msra.mxu0 0.0
        %4236 = vmatpush.msra.mxu0 0.0
        %4237 = vmatpush.msra.mxu0 0.0
        %4238 = vmatpush.msra.mxu0 0.0
        %4239 = vmatpush.msra.mxu0 0.0
        %4240 = vmatpush.msra.mxu0 0.0
        %4241 = vmatpush.msra.mxu0 0.0
        %4242 = vmatpush.msra.mxu0 %v4151
        %4243 = vmatpush.msra.mxu0 %v4150
        %4244 = vmatpush.msra.mxu0 %v4149
        %4245 = vmatpush.msra.mxu0 %v4148
        %4246 = vmatpush.msra.mxu0 %v4147
        %4247 = vmatpush.msra.mxu0 %v4146
        %4248 = vmatpush.msra.mxu0 %v4145
        %4249 = vmatpush.msra.mxu0 %v4144
        %4250 = vmatmul.f32.gmra.mxu0 %v4211
        %v4251 = vpop.f32.mrf.mxu0
        %v4252 = vadd.f32 %v4173, %v4251
        %4253 = vmatmul.f32.gmra.mxu0 %v4214
        %v4254 = vpop.f32.mrf.mxu0
        %v4255 = vadd.f32 %v4178, %v4254
        %4256 = vmatmul.f32.gmra.mxu0 %v4217
        %v4257 = vpop.f32.mrf.mxu0
        %v4258 = vadd.f32 %v4183, %v4257
        %4259 = vmatmul.f32.gmra.mxu0 %v4220
        %v4260 = vpop.f32.mrf.mxu0
        %v4261 = vadd.f32 %v4188, %v4260
        %4262 = vmatmul.f32.gmra.mxu0 %v4223
        %v4263 = vpop.f32.mrf.mxu0
        %v4264 = vadd.f32 %v4193, %v4263
        %4265 = vmatmul.f32.gmra.mxu0 %v4226
        %v4266 = vpop.f32.mrf.mxu0
        %v4267 = vadd.f32 %v4198, %v4266
        %4268 = vmatmul.f32.gmra.mxu0 %v4229
        %v4269 = vpop.f32.mrf.mxu0
        %v4270 = vadd.f32 %v4203, %v4269
        %4271 = vmatmul.f32.gmra.mxu0 %v4232
        %v4272 = vpop.f32.mrf.mxu0
        %v4273 = vadd.f32 %v4208, %v4272
        %4274 = vdwg.mxu0
        %vm4275 = vcmp.ge.f32.partialorder %v4252, 0.0
        %vm4276 = vcmp.ge.f32.partialorder %v4255, 0.0
        %vm4277 = vcmp.ge.f32.partialorder %v4258, 0.0
        %vm4278 = vcmp.ge.f32.partialorder %v4261, 0.0
        %vm4279 = vcmp.ge.f32.partialorder %v4264, 0.0
        %vm4280 = vcmp.ge.f32.partialorder %v4267, 0.0
        %vm4281 = vcmp.ge.f32.partialorder %v4270, 0.0
        %vm4282 = vcmp.ge.f32.partialorder %v4273, 0.0
        %v4283 = vmul.f32 %v4252, 0.01
        %v4284 = vmul.f32 %v4255, 0.01
        %v4285 = vmul.f32 %v4258, 0.01
        %v4286 = vmul.f32 %v4261, 0.01
        %v4287 = vmul.f32 %v4264, 0.01
        %v4288 = vmul.f32 %v4267, 0.01
        %v4289 = vmul.f32 %v4270, 0.01
        %v4290 = vmul.f32 %v4273, 0.01
        %v4291 = vsel %vm4275, %v4252, %v4283
        %v4292 = vsel %vm4276, %v4255, %v4284
        %v4293 = vsel %vm4277, %v4258, %v4285
        %v4294 = vsel %vm4278, %v4261, %v4286
        %v4295 = vsel %vm4279, %v4264, %v4287
        %v4296 = vsel %vm4280, %v4267, %v4288
        %v4297 = vsel %vm4281, %v4270, %v4289
        %v4298 = vsel %vm4282, %v4273, %v4290
        %s4299 = scalar_lea.vmem %s15, 80
        %v4300 = vld [vmem:[%s4299] sm:$0xff]
        %v4301 = vld [vmem:[%s4299 + $0x8] sm:$0xff]
        %s4302 = scalar_lea.vmem %s16, 80
        %v4303 = vld [vmem:[%s4302] sm:$0xff]
        %v4304 = vld [vmem:[%s4302 + $0x8] sm:$0xff]
        %4306 = vset.pattern.permute.xlu0 0
        %4307 = vperm.xlu0 %4306, %v4303
        %v4308 = vpop.permute.xlu0 %4307
        %4311 = vset.pattern.permute.xlu0 0
        %4312 = vperm.xlu0 %4311, %v4304
        %v4313 = vpop.permute.xlu0 %4312
        %v4316 = vsel %vm1817, %v4300, 0
        %v4319 = vsel %vm1817, %v4301, 0
        %4321 = vmatpush.msra.mxu0 0.0
        %4322 = vmatpush.msra.mxu0 0.0
        %4323 = vmatpush.msra.mxu0 0.0
        %4324 = vmatpush.msra.mxu0 0.0
        %4325 = vmatpush.msra.mxu0 0.0
        %4326 = vmatpush.msra.mxu0 0.0
        %4327 = vmatpush.msra.mxu0 0.0
        %4328 = vmatpush.msra.mxu0 0.0
        %4329 = vmatpush.msra.mxu0 %v4298
        %4330 = vmatpush.msra.mxu0 %v4297
        %4331 = vmatpush.msra.mxu0 %v4296
        %4332 = vmatpush.msra.mxu0 %v4295
        %4333 = vmatpush.msra.mxu0 %v4294
        %4334 = vmatpush.msra.mxu0 %v4293
        %4335 = vmatpush.msra.mxu0 %v4292
        %4336 = vmatpush.msra.mxu0 %v4291
        %4337 = vmatmul.f32.gmra.mxu0 %v4316
        %v4338 = vpop.f32.mrf.mxu0
        %v4339 = vadd.f32 %v4308, %v4338
        %4340 = vmatmul.f32.gmra.mxu0 %v4319
        %v4341 = vpop.f32.mrf.mxu0
        %v4342 = vadd.f32 %v4313, %v4341
        %4343 = vdwg.mxu0
        %v4344 = vtanh.pop %v4339
        %v4345 = vmul.f32 %v4344, 1.442695
        %v4346 = vpow.pop %v4345
        %v4347 = vmul.f32 %v3905, %v4346
        %v4348 = vadd.f32 %v4347, %v4342
        %v4349 = vadd.f32 %v3906, %v4344
        %s4350 = scalar_lea.vmem %s9, 24
        %v4351 = vld [vmem:[%s4350] sm:$0xff]
        %s4352 = scalar_lea.vmem %s8, 24
        %v4353 = vld [vmem:[%s4352] sm:$0xff]
        %4355 = vset.pattern.permute.xlu0 0
        %4356 = vperm.xlu0 %4355, %v4353
        %v4357 = vpop.permute.xlu0 %4356
        %v4359 = vadd.f32 %v4348, %v4357
        %4361 = vset.pattern.permute.xlu0 0
        %4362 = vperm.xlu0 %4361, %v4351
        %v4363 = vpop.permute.xlu0 %4362
        %v4365 = vmul.f32 %v4363, %v4359
        %s4366 = scalar_lea.vmem %s10, 384
        %v4367 = vld [vmem:[%s4366] sm:$0xff]
        %v4368 = vld [vmem:[%s4366 + $0x8] sm:$0xff]
        %v4369 = vld [vmem:[%s4366 + $0x10] sm:$0xff]
        %v4370 = vld [vmem:[%s4366 + $0x18] sm:$0xff]
        %v4371 = vld [vmem:[%s4366 + $0x20] sm:$0xff]
        %v4372 = vld [vmem:[%s4366 + $0x28] sm:$0xff]
        %v4373 = vld [vmem:[%s4366 + $0x30] sm:$0xff]
        %v4374 = vld [vmem:[%s4366 + $0x38] sm:$0xff]
        %v4376 = vsel %vm1248, %v4367, 0
        %v4379 = vsel %vm1248, %v4368, 0
        %v4382 = vsel %vm1248, %v4369, 0
        %v4385 = vsel %vm1248, %v4370, 0
        %v4388 = vsel %vm1248, %v4371, 0
        %v4391 = vsel %vm1248, %v4372, 0
        %v4394 = vsel %vm1248, %v4373, 0
        %v4397 = vsel %vm1248, %v4374, 0
        %4399 = vmatpush.msra.mxu0 0.0
        %4400 = vmatpush.msra.mxu0 0.0
        %4401 = vmatpush.msra.mxu0 0.0
        %4402 = vmatpush.msra.mxu0 0.0
        %4403 = vmatpush.msra.mxu0 0.0
        %4404 = vmatpush.msra.mxu0 0.0
        %4405 = vmatpush.msra.mxu0 0.0
        %4406 = vmatpush.msra.mxu0 0.0
        %4407 = vmatpush.msra.mxu0 0.0
        %4408 = vmatpush.msra.mxu0 0.0
        %4409 = vmatpush.msra.mxu0 0.0
        %4410 = vmatpush.msra.mxu0 0.0
        %4411 = vmatpush.msra.mxu0 0.0
        %4412 = vmatpush.msra.mxu0 0.0
        %4413 = vmatpush.msra.mxu0 0.0
        %4414 = vmatpush.msra.mxu0 %v4365
        %4415 = vmatmul.f32.gmra.mxu0 %v4376
        %v4416 = vpop.f32.mrf.mxu0
        %v4417 = vadd.f32 %v1603, %v4416
        %4418 = vmatmul.f32.gmra.mxu0 %v4379
        %v4419 = vpop.f32.mrf.mxu0
        %v4420 = vadd.f32 %v1606, %v4419
        %4421 = vmatmul.f32.gmra.mxu0 %v4382
        %v4422 = vpop.f32.mrf.mxu0
        %v4423 = vadd.f32 %v1609, %v4422
        %4424 = vmatmul.f32.gmra.mxu0 %v4385
        %v4425 = vpop.f32.mrf.mxu0
        %v4426 = vadd.f32 %v1612, %v4425
        %4427 = vmatmul.f32.gmra.mxu0 %v4388
        %v4428 = vpop.f32.mrf.mxu0
        %v4429 = vadd.f32 %v1615, %v4428
        %4430 = vmatmul.f32.gmra.mxu0 %v4391
        %v4431 = vpop.f32.mrf.mxu0
        %v4432 = vadd.f32 %v1618, %v4431
        %4433 = vmatmul.f32.gmra.mxu0 %v4394
        %v4434 = vpop.f32.mrf.mxu0
        %v4435 = vadd.f32 %v1621, %v4434
        %4436 = vmatmul.f32.gmra.mxu0 %v4397
        %v4437 = vpop.f32.mrf.mxu0
        %v4438 = vadd.f32 %v1624, %v4437
        %4439 = vdwg.mxu0
        %vm4440 = vcmp.ge.f32.partialorder %v4417, 0.0
        %vm4441 = vcmp.ge.f32.partialorder %v4420, 0.0
        %vm4442 = vcmp.ge.f32.partialorder %v4423, 0.0
        %vm4443 = vcmp.ge.f32.partialorder %v4426, 0.0
        %vm4444 = vcmp.ge.f32.partialorder %v4429, 0.0
        %vm4445 = vcmp.ge.f32.partialorder %v4432, 0.0
        %vm4446 = vcmp.ge.f32.partialorder %v4435, 0.0
        %vm4447 = vcmp.ge.f32.partialorder %v4438, 0.0
        %v4448 = vmul.f32 %v4417, 0.01
        %v4449 = vmul.f32 %v4420, 0.01
        %v4450 = vmul.f32 %v4423, 0.01
        %v4451 = vmul.f32 %v4426, 0.01
        %v4452 = vmul.f32 %v4429, 0.01
        %v4453 = vmul.f32 %v4432, 0.01
        %v4454 = vmul.f32 %v4435, 0.01
        %v4455 = vmul.f32 %v4438, 0.01
        %v4456 = vsel %vm4440, %v4417, %v4448
        %v4457 = vsel %vm4441, %v4420, %v4449
        %v4458 = vsel %vm4442, %v4423, %v4450
        %v4459 = vsel %vm4443, %v4426, %v4451
        %v4460 = vsel %vm4444, %v4429, %v4452
        %v4461 = vsel %vm4445, %v4432, %v4453
        %v4462 = vsel %vm4446, %v4435, %v4454
        %v4463 = vsel %vm4447, %v4438, %v4455
        %s4464 = scalar_lea.vmem %s13, 768
        %v4465 = vld [vmem:[%s4464] sm:$0xff]
        %v4466 = vld [vmem:[%s4464 + $0x8] sm:$0xff]
        %v4467 = vld [vmem:[%s4464 + $0x10] sm:$0xff]
        %v4468 = vld [vmem:[%s4464 + $0x18] sm:$0xff]
        %v4469 = vld [vmem:[%s4464 + $0x20] sm:$0xff]
        %v4470 = vld [vmem:[%s4464 + $0x28] sm:$0xff]
        %v4471 = vld [vmem:[%s4464 + $0x30] sm:$0xff]
        %v4472 = vld [vmem:[%s4464 + $0x38] sm:$0xff]
        %s4473 = scalar_lea.vmem %s14, 768
        %v4474 = vld [vmem:[%s4473] sm:$0xff]
        %v4475 = vld [vmem:[%s4473 + $0x8] sm:$0xff]
        %v4476 = vld [vmem:[%s4473 + $0x10] sm:$0xff]
        %v4477 = vld [vmem:[%s4473 + $0x18] sm:$0xff]
        %v4478 = vld [vmem:[%s4473 + $0x20] sm:$0xff]
        %v4479 = vld [vmem:[%s4473 + $0x28] sm:$0xff]
        %v4480 = vld [vmem:[%s4473 + $0x30] sm:$0xff]
        %v4481 = vld [vmem:[%s4473 + $0x38] sm:$0xff]
        %4483 = vset.pattern.permute.xlu0 0
        %4484 = vperm.xlu0 %4483, %v4474
        %v4485 = vpop.permute.xlu0 %4484
        %4488 = vset.pattern.permute.xlu0 0
        %4489 = vperm.xlu0 %4488, %v4475
        %v4490 = vpop.permute.xlu0 %4489
        %4493 = vset.pattern.permute.xlu0 0
        %4494 = vperm.xlu0 %4493, %v4476
        %v4495 = vpop.permute.xlu0 %4494
        %4498 = vset.pattern.permute.xlu0 0
        %4499 = vperm.xlu0 %4498, %v4477
        %v4500 = vpop.permute.xlu0 %4499
        %4503 = vset.pattern.permute.xlu0 0
        %4504 = vperm.xlu0 %4503, %v4478
        %v4505 = vpop.permute.xlu0 %4504
        %4508 = vset.pattern.permute.xlu0 0
        %4509 = vperm.xlu0 %4508, %v4479
        %v4510 = vpop.permute.xlu0 %4509
        %4513 = vset.pattern.permute.xlu0 0
        %4514 = vperm.xlu0 %4513, %v4480
        %v4515 = vpop.permute.xlu0 %4514
        %4518 = vset.pattern.permute.xlu0 0
        %4519 = vperm.xlu0 %4518, %v4481
        %v4520 = vpop.permute.xlu0 %4519
        %v4523 = vsel %vm1817, %v4465, 0
        %v4526 = vsel %vm1817, %v4466, 0
        %v4529 = vsel %vm1817, %v4467, 0
        %v4532 = vsel %vm1817, %v4468, 0
        %v4535 = vsel %vm1817, %v4469, 0
        %v4538 = vsel %vm1817, %v4470, 0
        %v4541 = vsel %vm1817, %v4471, 0
        %v4544 = vsel %vm1817, %v4472, 0
        %4546 = vmatpush.msra.mxu0 0.0
        %4547 = vmatpush.msra.mxu0 0.0
        %4548 = vmatpush.msra.mxu0 0.0
        %4549 = vmatpush.msra.mxu0 0.0
        %4550 = vmatpush.msra.mxu0 0.0
        %4551 = vmatpush.msra.mxu0 0.0
        %4552 = vmatpush.msra.mxu0 0.0
        %4553 = vmatpush.msra.mxu0 0.0
        %4554 = vmatpush.msra.mxu0 %v4463
        %4555 = vmatpush.msra.mxu0 %v4462
        %4556 = vmatpush.msra.mxu0 %v4461
        %4557 = vmatpush.msra.mxu0 %v4460
        %4558 = vmatpush.msra.mxu0 %v4459
        %4559 = vmatpush.msra.mxu0 %v4458
        %4560 = vmatpush.msra.mxu0 %v4457
        %4561 = vmatpush.msra.mxu0 %v4456
        %4562 = vmatmul.f32.gmra.mxu0 %v4523
        %v4563 = vpop.f32.mrf.mxu0
        %v4564 = vadd.f32 %v4485, %v4563
        %4565 = vmatmul.f32.gmra.mxu0 %v4526
        %v4566 = vpop.f32.mrf.mxu0
        %v4567 = vadd.f32 %v4490, %v4566
        %4568 = vmatmul.f32.gmra.mxu0 %v4529
        %v4569 = vpop.f32.mrf.mxu0
        %v4570 = vadd.f32 %v4495, %v4569
        %4571 = vmatmul.f32.gmra.mxu0 %v4532
        %v4572 = vpop.f32.mrf.mxu0
        %v4573 = vadd.f32 %v4500, %v4572
        %4574 = vmatmul.f32.gmra.mxu0 %v4535
        %v4575 = vpop.f32.mrf.mxu0
        %v4576 = vadd.f32 %v4505, %v4575
        %4577 = vmatmul.f32.gmra.mxu0 %v4538
        %v4578 = vpop.f32.mrf.mxu0
        %v4579 = vadd.f32 %v4510, %v4578
        %4580 = vmatmul.f32.gmra.mxu0 %v4541
        %v4581 = vpop.f32.mrf.mxu0
        %v4582 = vadd.f32 %v4515, %v4581
        %4583 = vmatmul.f32.gmra.mxu0 %v4544
        %v4584 = vpop.f32.mrf.mxu0
        %v4585 = vadd.f32 %v4520, %v4584
        %4586 = vdwg.mxu0
        %vm4587 = vcmp.ge.f32.partialorder %v4564, 0.0
        %vm4588 = vcmp.ge.f32.partialorder %v4567, 0.0
        %vm4589 = vcmp.ge.f32.partialorder %v4570, 0.0
        %vm4590 = vcmp.ge.f32.partialorder %v4573, 0.0
        %vm4591 = vcmp.ge.f32.partialorder %v4576, 0.0
        %vm4592 = vcmp.ge.f32.partialorder %v4579, 0.0
        %vm4593 = vcmp.ge.f32.partialorder %v4582, 0.0
        %vm4594 = vcmp.ge.f32.partialorder %v4585, 0.0
        %v4595 = vmul.f32 %v4564, 0.01
        %v4596 = vmul.f32 %v4567, 0.01
        %v4597 = vmul.f32 %v4570, 0.01
        %v4598 = vmul.f32 %v4573, 0.01
        %v4599 = vmul.f32 %v4576, 0.01
        %v4600 = vmul.f32 %v4579, 0.01
        %v4601 = vmul.f32 %v4582, 0.01
        %v4602 = vmul.f32 %v4585, 0.01
        %v4603 = vsel %vm4587, %v4564, %v4595
        %v4604 = vsel %vm4588, %v4567, %v4596
        %v4605 = vsel %vm4589, %v4570, %v4597
        %v4606 = vsel %vm4590, %v4573, %v4598
        %v4607 = vsel %vm4591, %v4576, %v4599
        %v4608 = vsel %vm4592, %v4579, %v4600
        %v4609 = vsel %vm4593, %v4582, %v4601
        %v4610 = vsel %vm4594, %v4585, %v4602
        %s4611 = scalar_lea.vmem %s13, 832
        %v4612 = vld [vmem:[%s4611] sm:$0xff]
        %v4613 = vld [vmem:[%s4611 + $0x8] sm:$0xff]
        %v4614 = vld [vmem:[%s4611 + $0x10] sm:$0xff]
        %v4615 = vld [vmem:[%s4611 + $0x18] sm:$0xff]
        %v4616 = vld [vmem:[%s4611 + $0x20] sm:$0xff]
        %v4617 = vld [vmem:[%s4611 + $0x28] sm:$0xff]
        %v4618 = vld [vmem:[%s4611 + $0x30] sm:$0xff]
        %v4619 = vld [vmem:[%s4611 + $0x38] sm:$0xff]
        %s4620 = scalar_lea.vmem %s14, 832
        %v4621 = vld [vmem:[%s4620] sm:$0xff]
        %v4622 = vld [vmem:[%s4620 + $0x8] sm:$0xff]
        %v4623 = vld [vmem:[%s4620 + $0x10] sm:$0xff]
        %v4624 = vld [vmem:[%s4620 + $0x18] sm:$0xff]
        %v4625 = vld [vmem:[%s4620 + $0x20] sm:$0xff]
        %v4626 = vld [vmem:[%s4620 + $0x28] sm:$0xff]
        %v4627 = vld [vmem:[%s4620 + $0x30] sm:$0xff]
        %v4628 = vld [vmem:[%s4620 + $0x38] sm:$0xff]
        %4630 = vset.pattern.permute.xlu0 0
        %4631 = vperm.xlu0 %4630, %v4621
        %v4632 = vpop.permute.xlu0 %4631
        %4635 = vset.pattern.permute.xlu0 0
        %4636 = vperm.xlu0 %4635, %v4622
        %v4637 = vpop.permute.xlu0 %4636
        %4640 = vset.pattern.permute.xlu0 0
        %4641 = vperm.xlu0 %4640, %v4623
        %v4642 = vpop.permute.xlu0 %4641
        %4645 = vset.pattern.permute.xlu0 0
        %4646 = vperm.xlu0 %4645, %v4624
        %v4647 = vpop.permute.xlu0 %4646
        %4650 = vset.pattern.permute.xlu0 0
        %4651 = vperm.xlu0 %4650, %v4625
        %v4652 = vpop.permute.xlu0 %4651
        %4655 = vset.pattern.permute.xlu0 0
        %4656 = vperm.xlu0 %4655, %v4626
        %v4657 = vpop.permute.xlu0 %4656
        %4660 = vset.pattern.permute.xlu0 0
        %4661 = vperm.xlu0 %4660, %v4627
        %v4662 = vpop.permute.xlu0 %4661
        %4665 = vset.pattern.permute.xlu0 0
        %4666 = vperm.xlu0 %4665, %v4628
        %v4667 = vpop.permute.xlu0 %4666
        %v4670 = vsel %vm1817, %v4612, 0
        %v4673 = vsel %vm1817, %v4613, 0
        %v4676 = vsel %vm1817, %v4614, 0
        %v4679 = vsel %vm1817, %v4615, 0
        %v4682 = vsel %vm1817, %v4616, 0
        %v4685 = vsel %vm1817, %v4617, 0
        %v4688 = vsel %vm1817, %v4618, 0
        %v4691 = vsel %vm1817, %v4619, 0
        %4693 = vmatpush.msra.mxu0 0.0
        %4694 = vmatpush.msra.mxu0 0.0
        %4695 = vmatpush.msra.mxu0 0.0
        %4696 = vmatpush.msra.mxu0 0.0
        %4697 = vmatpush.msra.mxu0 0.0
        %4698 = vmatpush.msra.mxu0 0.0
        %4699 = vmatpush.msra.mxu0 0.0
        %4700 = vmatpush.msra.mxu0 0.0
        %4701 = vmatpush.msra.mxu0 %v4610
        %4702 = vmatpush.msra.mxu0 %v4609
        %4703 = vmatpush.msra.mxu0 %v4608
        %4704 = vmatpush.msra.mxu0 %v4607
        %4705 = vmatpush.msra.mxu0 %v4606
        %4706 = vmatpush.msra.mxu0 %v4605
        %4707 = vmatpush.msra.mxu0 %v4604
        %4708 = vmatpush.msra.mxu0 %v4603
        %4709 = vmatmul.f32.gmra.mxu0 %v4670
        %v4710 = vpop.f32.mrf.mxu0
        %v4711 = vadd.f32 %v4632, %v4710
        %4712 = vmatmul.f32.gmra.mxu0 %v4673
        %v4713 = vpop.f32.mrf.mxu0
        %v4714 = vadd.f32 %v4637, %v4713
        %4715 = vmatmul.f32.gmra.mxu0 %v4676
        %v4716 = vpop.f32.mrf.mxu0
        %v4717 = vadd.f32 %v4642, %v4716
        %4718 = vmatmul.f32.gmra.mxu0 %v4679
        %v4719 = vpop.f32.mrf.mxu0
        %v4720 = vadd.f32 %v4647, %v4719
        %4721 = vmatmul.f32.gmra.mxu0 %v4682
        %v4722 = vpop.f32.mrf.mxu0
        %v4723 = vadd.f32 %v4652, %v4722
        %4724 = vmatmul.f32.gmra.mxu0 %v4685
        %v4725 = vpop.f32.mrf.mxu0
        %v4726 = vadd.f32 %v4657, %v4725
        %4727 = vmatmul.f32.gmra.mxu0 %v4688
        %v4728 = vpop.f32.mrf.mxu0
        %v4729 = vadd.f32 %v4662, %v4728
        %4730 = vmatmul.f32.gmra.mxu0 %v4691
        %v4731 = vpop.f32.mrf.mxu0
        %v4732 = vadd.f32 %v4667, %v4731
        %4733 = vdwg.mxu0
        %vm4734 = vcmp.ge.f32.partialorder %v4711, 0.0
        %vm4735 = vcmp.ge.f32.partialorder %v4714, 0.0
        %vm4736 = vcmp.ge.f32.partialorder %v4717, 0.0
        %vm4737 = vcmp.ge.f32.partialorder %v4720, 0.0
        %vm4738 = vcmp.ge.f32.partialorder %v4723, 0.0
        %vm4739 = vcmp.ge.f32.partialorder %v4726, 0.0
        %vm4740 = vcmp.ge.f32.partialorder %v4729, 0.0
        %vm4741 = vcmp.ge.f32.partialorder %v4732, 0.0
        %v4742 = vmul.f32 %v4711, 0.01
        %v4743 = vmul.f32 %v4714, 0.01
        %v4744 = vmul.f32 %v4717, 0.01
        %v4745 = vmul.f32 %v4720, 0.01
        %v4746 = vmul.f32 %v4723, 0.01
        %v4747 = vmul.f32 %v4726, 0.01
        %v4748 = vmul.f32 %v4729, 0.01
        %v4749 = vmul.f32 %v4732, 0.01
        %v4750 = vsel %vm4734, %v4711, %v4742
        %v4751 = vsel %vm4735, %v4714, %v4743
        %v4752 = vsel %vm4736, %v4717, %v4744
        %v4753 = vsel %vm4737, %v4720, %v4745
        %v4754 = vsel %vm4738, %v4723, %v4746
        %v4755 = vsel %vm4739, %v4726, %v4747
        %v4756 = vsel %vm4740, %v4729, %v4748
        %v4757 = vsel %vm4741, %v4732, %v4749
        %s4758 = scalar_lea.vmem %s15, 96
        %v4759 = vld [vmem:[%s4758] sm:$0xff]
        %v4760 = vld [vmem:[%s4758 + $0x8] sm:$0xff]
        %s4761 = scalar_lea.vmem %s16, 96
        %v4762 = vld [vmem:[%s4761] sm:$0xff]
        %v4763 = vld [vmem:[%s4761 + $0x8] sm:$0xff]
        %4765 = vset.pattern.permute.xlu0 0
        %4766 = vperm.xlu0 %4765, %v4762
        %v4767 = vpop.permute.xlu0 %4766
        %4770 = vset.pattern.permute.xlu0 0
        %4771 = vperm.xlu0 %4770, %v4763
        %v4772 = vpop.permute.xlu0 %4771
        %v4775 = vsel %vm1817, %v4759, 0
        %v4778 = vsel %vm1817, %v4760, 0
        %4780 = vmatpush.msra.mxu0 0.0
        %4781 = vmatpush.msra.mxu0 0.0
        %4782 = vmatpush.msra.mxu0 0.0
        %4783 = vmatpush.msra.mxu0 0.0
        %4784 = vmatpush.msra.mxu0 0.0
        %4785 = vmatpush.msra.mxu0 0.0
        %4786 = vmatpush.msra.mxu0 0.0
        %4787 = vmatpush.msra.mxu0 0.0
        %4788 = vmatpush.msra.mxu0 %v4757
        %4789 = vmatpush.msra.mxu0 %v4756
        %4790 = vmatpush.msra.mxu0 %v4755
        %4791 = vmatpush.msra.mxu0 %v4754
        %4792 = vmatpush.msra.mxu0 %v4753
        %4793 = vmatpush.msra.mxu0 %v4752
        %4794 = vmatpush.msra.mxu0 %v4751
        %4795 = vmatpush.msra.mxu0 %v4750
        %4796 = vmatmul.f32.gmra.mxu0 %v4775
        %v4797 = vpop.f32.mrf.mxu0
        %v4798 = vadd.f32 %v4767, %v4797
        %4799 = vmatmul.f32.gmra.mxu0 %v4778
        %v4800 = vpop.f32.mrf.mxu0
        %v4801 = vadd.f32 %v4772, %v4800
        %4802 = vdwg.mxu0
        %v4803 = vtanh.pop %v4798
        %v4804 = vmul.f32 %v4803, 1.442695
        %v4805 = vpow.pop %v4804
        %v4806 = vmul.f32 %v4365, %v4805
        %v4807 = vadd.f32 %v4806, %v4801
        %v4808 = vadd.f32 %v4349, %v4803
        %s4809 = scalar_lea.vmem %s10, 448
        %v4810 = vld [vmem:[%s4809] sm:$0xff]
        %v4811 = vld [vmem:[%s4809 + $0x8] sm:$0xff]
        %v4812 = vld [vmem:[%s4809 + $0x10] sm:$0xff]
        %v4813 = vld [vmem:[%s4809 + $0x18] sm:$0xff]
        %v4814 = vld [vmem:[%s4809 + $0x20] sm:$0xff]
        %v4815 = vld [vmem:[%s4809 + $0x28] sm:$0xff]
        %v4816 = vld [vmem:[%s4809 + $0x30] sm:$0xff]
        %v4817 = vld [vmem:[%s4809 + $0x38] sm:$0xff]
        %v4819 = vsel %vm1248, %v4810, 0
        %v4822 = vsel %vm1248, %v4811, 0
        %v4825 = vsel %vm1248, %v4812, 0
        %v4828 = vsel %vm1248, %v4813, 0
        %v4831 = vsel %vm1248, %v4814, 0
        %v4834 = vsel %vm1248, %v4815, 0
        %v4837 = vsel %vm1248, %v4816, 0
        %v4840 = vsel %vm1248, %v4817, 0
        %4842 = vmatpush.msra.mxu0 0.0
        %4843 = vmatpush.msra.mxu0 0.0
        %4844 = vmatpush.msra.mxu0 0.0
        %4845 = vmatpush.msra.mxu0 0.0
        %4846 = vmatpush.msra.mxu0 0.0
        %4847 = vmatpush.msra.mxu0 0.0
        %4848 = vmatpush.msra.mxu0 0.0
        %4849 = vmatpush.msra.mxu0 0.0
        %4850 = vmatpush.msra.mxu0 0.0
        %4851 = vmatpush.msra.mxu0 0.0
        %4852 = vmatpush.msra.mxu0 0.0
        %4853 = vmatpush.msra.mxu0 0.0
        %4854 = vmatpush.msra.mxu0 0.0
        %4855 = vmatpush.msra.mxu0 0.0
        %4856 = vmatpush.msra.mxu0 0.0
        %4857 = vmatpush.msra.mxu0 %v4807
        %4858 = vmatmul.f32.gmra.mxu0 %v4819
        %v4859 = vpop.f32.mrf.mxu0
        %v4860 = vadd.f32 %v1627, %v4859
        %4861 = vmatmul.f32.gmra.mxu0 %v4822
        %v4862 = vpop.f32.mrf.mxu0
        %v4863 = vadd.f32 %v1630, %v4862
        %4864 = vmatmul.f32.gmra.mxu0 %v4825
        %v4865 = vpop.f32.mrf.mxu0
        %v4866 = vadd.f32 %v1633, %v4865
        %4867 = vmatmul.f32.gmra.mxu0 %v4828
        %v4868 = vpop.f32.mrf.mxu0
        %v4869 = vadd.f32 %v1636, %v4868
        %4870 = vmatmul.f32.gmra.mxu0 %v4831
        %v4871 = vpop.f32.mrf.mxu0
        %v4872 = vadd.f32 %v1639, %v4871
        %4873 = vmatmul.f32.gmra.mxu0 %v4834
        %v4874 = vpop.f32.mrf.mxu0
        %v4875 = vadd.f32 %v1642, %v4874
        %4876 = vmatmul.f32.gmra.mxu0 %v4837
        %v4877 = vpop.f32.mrf.mxu0
        %v4878 = vadd.f32 %v1645, %v4877
        %4879 = vmatmul.f32.gmra.mxu0 %v4840
        %v4880 = vpop.f32.mrf.mxu0
        %v4881 = vadd.f32 %v1648, %v4880
        %4882 = vdwg.mxu0
        %vm4883 = vcmp.ge.f32.partialorder %v4860, 0.0
        %vm4884 = vcmp.ge.f32.partialorder %v4863, 0.0
        %vm4885 = vcmp.ge.f32.partialorder %v4866, 0.0
        %vm4886 = vcmp.ge.f32.partialorder %v4869, 0.0
        %vm4887 = vcmp.ge.f32.partialorder %v4872, 0.0
        %vm4888 = vcmp.ge.f32.partialorder %v4875, 0.0
        %vm4889 = vcmp.ge.f32.partialorder %v4878, 0.0
        %vm4890 = vcmp.ge.f32.partialorder %v4881, 0.0
        %v4891 = vmul.f32 %v4860, 0.01
        %v4892 = vmul.f32 %v4863, 0.01
        %v4893 = vmul.f32 %v4866, 0.01
        %v4894 = vmul.f32 %v4869, 0.01
        %v4895 = vmul.f32 %v4872, 0.01
        %v4896 = vmul.f32 %v4875, 0.01
        %v4897 = vmul.f32 %v4878, 0.01
        %v4898 = vmul.f32 %v4881, 0.01
        %v4899 = vsel %vm4883, %v4860, %v4891
        %v4900 = vsel %vm4884, %v4863, %v4892
        %v4901 = vsel %vm4885, %v4866, %v4893
        %v4902 = vsel %vm4886, %v4869, %v4894
        %v4903 = vsel %vm4887, %v4872, %v4895
        %v4904 = vsel %vm4888, %v4875, %v4896
        %v4905 = vsel %vm4889, %v4878, %v4897
        %v4906 = vsel %vm4890, %v4881, %v4898
        %s4907 = scalar_lea.vmem %s13, 896
        %v4908 = vld [vmem:[%s4907] sm:$0xff]
        %v4909 = vld [vmem:[%s4907 + $0x8] sm:$0xff]
        %v4910 = vld [vmem:[%s4907 + $0x10] sm:$0xff]
        %v4911 = vld [vmem:[%s4907 + $0x18] sm:$0xff]
        %v4912 = vld [vmem:[%s4907 + $0x20] sm:$0xff]
        %v4913 = vld [vmem:[%s4907 + $0x28] sm:$0xff]
        %v4914 = vld [vmem:[%s4907 + $0x30] sm:$0xff]
        %v4915 = vld [vmem:[%s4907 + $0x38] sm:$0xff]
        %s4916 = scalar_lea.vmem %s14, 896
        %v4917 = vld [vmem:[%s4916] sm:$0xff]
        %v4918 = vld [vmem:[%s4916 + $0x8] sm:$0xff]
        %v4919 = vld [vmem:[%s4916 + $0x10] sm:$0xff]
        %v4920 = vld [vmem:[%s4916 + $0x18] sm:$0xff]
        %v4921 = vld [vmem:[%s4916 + $0x20] sm:$0xff]
        %v4922 = vld [vmem:[%s4916 + $0x28] sm:$0xff]
        %v4923 = vld [vmem:[%s4916 + $0x30] sm:$0xff]
        %v4924 = vld [vmem:[%s4916 + $0x38] sm:$0xff]
        %4926 = vset.pattern.permute.xlu0 0
        %4927 = vperm.xlu0 %4926, %v4917
        %v4928 = vpop.permute.xlu0 %4927
        %4931 = vset.pattern.permute.xlu0 0
        %4932 = vperm.xlu0 %4931, %v4918
        %v4933 = vpop.permute.xlu0 %4932
        %4936 = vset.pattern.permute.xlu0 0
        %4937 = vperm.xlu0 %4936, %v4919
        %v4938 = vpop.permute.xlu0 %4937
        %4941 = vset.pattern.permute.xlu0 0
        %4942 = vperm.xlu0 %4941, %v4920
        %v4943 = vpop.permute.xlu0 %4942
        %4946 = vset.pattern.permute.xlu0 0
        %4947 = vperm.xlu0 %4946, %v4921
        %v4948 = vpop.permute.xlu0 %4947
        %4951 = vset.pattern.permute.xlu0 0
        %4952 = vperm.xlu0 %4951, %v4922
        %v4953 = vpop.permute.xlu0 %4952
        %4956 = vset.pattern.permute.xlu0 0
        %4957 = vperm.xlu0 %4956, %v4923
        %v4958 = vpop.permute.xlu0 %4957
        %4961 = vset.pattern.permute.xlu0 0
        %4962 = vperm.xlu0 %4961, %v4924
        %v4963 = vpop.permute.xlu0 %4962
        %v4966 = vsel %vm1817, %v4908, 0
        %v4969 = vsel %vm1817, %v4909, 0
        %v4972 = vsel %vm1817, %v4910, 0
        %v4975 = vsel %vm1817, %v4911, 0
        %v4978 = vsel %vm1817, %v4912, 0
        %v4981 = vsel %vm1817, %v4913, 0
        %v4984 = vsel %vm1817, %v4914, 0
        %v4987 = vsel %vm1817, %v4915, 0
        %4989 = vmatpush.msra.mxu0 0.0
        %4990 = vmatpush.msra.mxu0 0.0
        %4991 = vmatpush.msra.mxu0 0.0
        %4992 = vmatpush.msra.mxu0 0.0
        %4993 = vmatpush.msra.mxu0 0.0
        %4994 = vmatpush.msra.mxu0 0.0
        %4995 = vmatpush.msra.mxu0 0.0
        %4996 = vmatpush.msra.mxu0 0.0
        %4997 = vmatpush.msra.mxu0 %v4906
        %4998 = vmatpush.msra.mxu0 %v4905
        %4999 = vmatpush.msra.mxu0 %v4904
        %5000 = vmatpush.msra.mxu0 %v4903
        %5001 = vmatpush.msra.mxu0 %v4902
        %5002 = vmatpush.msra.mxu0 %v4901
        %5003 = vmatpush.msra.mxu0 %v4900
        %5004 = vmatpush.msra.mxu0 %v4899
        %5005 = vmatmul.f32.gmra.mxu0 %v4966
        %v5006 = vpop.f32.mrf.mxu0
        %v5007 = vadd.f32 %v4928, %v5006
        %5008 = vmatmul.f32.gmra.mxu0 %v4969
        %v5009 = vpop.f32.mrf.mxu0
        %v5010 = vadd.f32 %v4933, %v5009
        %5011 = vmatmul.f32.gmra.mxu0 %v4972
        %v5012 = vpop.f32.mrf.mxu0
        %v5013 = vadd.f32 %v4938, %v5012
        %5014 = vmatmul.f32.gmra.mxu0 %v4975
        %v5015 = vpop.f32.mrf.mxu0
        %v5016 = vadd.f32 %v4943, %v5015
        %5017 = vmatmul.f32.gmra.mxu0 %v4978
        %v5018 = vpop.f32.mrf.mxu0
        %v5019 = vadd.f32 %v4948, %v5018
        %5020 = vmatmul.f32.gmra.mxu0 %v4981
        %v5021 = vpop.f32.mrf.mxu0
        %v5022 = vadd.f32 %v4953, %v5021
        %5023 = vmatmul.f32.gmra.mxu0 %v4984
        %v5024 = vpop.f32.mrf.mxu0
        %v5025 = vadd.f32 %v4958, %v5024
        %5026 = vmatmul.f32.gmra.mxu0 %v4987
        %v5027 = vpop.f32.mrf.mxu0
        %v5028 = vadd.f32 %v4963, %v5027
        %5029 = vdwg.mxu0
        %vm5030 = vcmp.ge.f32.partialorder %v5007, 0.0
        %vm5031 = vcmp.ge.f32.partialorder %v5010, 0.0
        %vm5032 = vcmp.ge.f32.partialorder %v5013, 0.0
        %vm5033 = vcmp.ge.f32.partialorder %v5016, 0.0
        %vm5034 = vcmp.ge.f32.partialorder %v5019, 0.0
        %vm5035 = vcmp.ge.f32.partialorder %v5022, 0.0
        %vm5036 = vcmp.ge.f32.partialorder %v5025, 0.0
        %vm5037 = vcmp.ge.f32.partialorder %v5028, 0.0
        %v5038 = vmul.f32 %v5007, 0.01
        %v5039 = vmul.f32 %v5010, 0.01
        %v5040 = vmul.f32 %v5013, 0.01
        %v5041 = vmul.f32 %v5016, 0.01
        %v5042 = vmul.f32 %v5019, 0.01
        %v5043 = vmul.f32 %v5022, 0.01
        %v5044 = vmul.f32 %v5025, 0.01
        %v5045 = vmul.f32 %v5028, 0.01
        %v5046 = vsel %vm5030, %v5007, %v5038
        %v5047 = vsel %vm5031, %v5010, %v5039
        %v5048 = vsel %vm5032, %v5013, %v5040
        %v5049 = vsel %vm5033, %v5016, %v5041
        %v5050 = vsel %vm5034, %v5019, %v5042
        %v5051 = vsel %vm5035, %v5022, %v5043
        %v5052 = vsel %vm5036, %v5025, %v5044
        %v5053 = vsel %vm5037, %v5028, %v5045
        %s5054 = scalar_lea.vmem %s13, 960
        %v5055 = vld [vmem:[%s5054] sm:$0xff]
        %v5056 = vld [vmem:[%s5054 + $0x8] sm:$0xff]
        %v5057 = vld [vmem:[%s5054 + $0x10] sm:$0xff]
        %v5058 = vld [vmem:[%s5054 + $0x18] sm:$0xff]
        %v5059 = vld [vmem:[%s5054 + $0x20] sm:$0xff]
        %v5060 = vld [vmem:[%s5054 + $0x28] sm:$0xff]
        %v5061 = vld [vmem:[%s5054 + $0x30] sm:$0xff]
        %v5062 = vld [vmem:[%s5054 + $0x38] sm:$0xff]
        %s5063 = scalar_lea.vmem %s14, 960
        %v5064 = vld [vmem:[%s5063] sm:$0xff]
        %v5065 = vld [vmem:[%s5063 + $0x8] sm:$0xff]
        %v5066 = vld [vmem:[%s5063 + $0x10] sm:$0xff]
        %v5067 = vld [vmem:[%s5063 + $0x18] sm:$0xff]
        %v5068 = vld [vmem:[%s5063 + $0x20] sm:$0xff]
        %v5069 = vld [vmem:[%s5063 + $0x28] sm:$0xff]
        %v5070 = vld [vmem:[%s5063 + $0x30] sm:$0xff]
        %v5071 = vld [vmem:[%s5063 + $0x38] sm:$0xff]
        %5073 = vset.pattern.permute.xlu0 0
        %5074 = vperm.xlu0 %5073, %v5064
        %v5075 = vpop.permute.xlu0 %5074
        %5078 = vset.pattern.permute.xlu0 0
        %5079 = vperm.xlu0 %5078, %v5065
        %v5080 = vpop.permute.xlu0 %5079
        %5083 = vset.pattern.permute.xlu0 0
        %5084 = vperm.xlu0 %5083, %v5066
        %v5085 = vpop.permute.xlu0 %5084
        %5088 = vset.pattern.permute.xlu0 0
        %5089 = vperm.xlu0 %5088, %v5067
        %v5090 = vpop.permute.xlu0 %5089
        %5093 = vset.pattern.permute.xlu0 0
        %5094 = vperm.xlu0 %5093, %v5068
        %v5095 = vpop.permute.xlu0 %5094
        %5098 = vset.pattern.permute.xlu0 0
        %5099 = vperm.xlu0 %5098, %v5069
        %v5100 = vpop.permute.xlu0 %5099
        %5103 = vset.pattern.permute.xlu0 0
        %5104 = vperm.xlu0 %5103, %v5070
        %v5105 = vpop.permute.xlu0 %5104
        %5108 = vset.pattern.permute.xlu0 0
        %5109 = vperm.xlu0 %5108, %v5071
        %v5110 = vpop.permute.xlu0 %5109
        %v5113 = vsel %vm1817, %v5055, 0
        %v5116 = vsel %vm1817, %v5056, 0
        %v5119 = vsel %vm1817, %v5057, 0
        %v5122 = vsel %vm1817, %v5058, 0
        %v5125 = vsel %vm1817, %v5059, 0
        %v5128 = vsel %vm1817, %v5060, 0
        %v5131 = vsel %vm1817, %v5061, 0
        %v5134 = vsel %vm1817, %v5062, 0
        %5136 = vmatpush.msra.mxu0 0.0
        %5137 = vmatpush.msra.mxu0 0.0
        %5138 = vmatpush.msra.mxu0 0.0
        %5139 = vmatpush.msra.mxu0 0.0
        %5140 = vmatpush.msra.mxu0 0.0
        %5141 = vmatpush.msra.mxu0 0.0
        %5142 = vmatpush.msra.mxu0 0.0
        %5143 = vmatpush.msra.mxu0 0.0
        %5144 = vmatpush.msra.mxu0 %v5053
        %5145 = vmatpush.msra.mxu0 %v5052
        %5146 = vmatpush.msra.mxu0 %v5051
        %5147 = vmatpush.msra.mxu0 %v5050
        %5148 = vmatpush.msra.mxu0 %v5049
        %5149 = vmatpush.msra.mxu0 %v5048
        %5150 = vmatpush.msra.mxu0 %v5047
        %5151 = vmatpush.msra.mxu0 %v5046
        %5152 = vmatmul.f32.gmra.mxu0 %v5113
        %v5153 = vpop.f32.mrf.mxu0
        %v5154 = vadd.f32 %v5075, %v5153
        %5155 = vmatmul.f32.gmra.mxu0 %v5116
        %v5156 = vpop.f32.mrf.mxu0
        %v5157 = vadd.f32 %v5080, %v5156
        %5158 = vmatmul.f32.gmra.mxu0 %v5119
        %v5159 = vpop.f32.mrf.mxu0
        %v5160 = vadd.f32 %v5085, %v5159
        %5161 = vmatmul.f32.gmra.mxu0 %v5122
        %v5162 = vpop.f32.mrf.mxu0
        %v5163 = vadd.f32 %v5090, %v5162
        %5164 = vmatmul.f32.gmra.mxu0 %v5125
        %v5165 = vpop.f32.mrf.mxu0
        %v5166 = vadd.f32 %v5095, %v5165
        %5167 = vmatmul.f32.gmra.mxu0 %v5128
        %v5168 = vpop.f32.mrf.mxu0
        %v5169 = vadd.f32 %v5100, %v5168
        %5170 = vmatmul.f32.gmra.mxu0 %v5131
        %v5171 = vpop.f32.mrf.mxu0
        %v5172 = vadd.f32 %v5105, %v5171
        %5173 = vmatmul.f32.gmra.mxu0 %v5134
        %v5174 = vpop.f32.mrf.mxu0
        %v5175 = vadd.f32 %v5110, %v5174
        %5176 = vdwg.mxu0
        %vm5177 = vcmp.ge.f32.partialorder %v5154, 0.0
        %vm5178 = vcmp.ge.f32.partialorder %v5157, 0.0
        %vm5179 = vcmp.ge.f32.partialorder %v5160, 0.0
        %vm5180 = vcmp.ge.f32.partialorder %v5163, 0.0
        %vm5181 = vcmp.ge.f32.partialorder %v5166, 0.0
        %vm5182 = vcmp.ge.f32.partialorder %v5169, 0.0
        %vm5183 = vcmp.ge.f32.partialorder %v5172, 0.0
        %vm5184 = vcmp.ge.f32.partialorder %v5175, 0.0
        %v5185 = vmul.f32 %v5154, 0.01
        %v5186 = vmul.f32 %v5157, 0.01
        %v5187 = vmul.f32 %v5160, 0.01
        %v5188 = vmul.f32 %v5163, 0.01
        %v5189 = vmul.f32 %v5166, 0.01
        %v5190 = vmul.f32 %v5169, 0.01
        %v5191 = vmul.f32 %v5172, 0.01
        %v5192 = vmul.f32 %v5175, 0.01
        %v5193 = vsel %vm5177, %v5154, %v5185
        %v5194 = vsel %vm5178, %v5157, %v5186
        %v5195 = vsel %vm5179, %v5160, %v5187
        %v5196 = vsel %vm5180, %v5163, %v5188
        %v5197 = vsel %vm5181, %v5166, %v5189
        %v5198 = vsel %vm5182, %v5169, %v5190
        %v5199 = vsel %vm5183, %v5172, %v5191
        %v5200 = vsel %vm5184, %v5175, %v5192
        %s5201 = scalar_lea.vmem %s15, 112
        %v5202 = vld [vmem:[%s5201] sm:$0xff]
        %v5203 = vld [vmem:[%s5201 + $0x8] sm:$0xff]
        %s5204 = scalar_lea.vmem %s16, 112
        %v5205 = vld [vmem:[%s5204] sm:$0xff]
        %v5206 = vld [vmem:[%s5204 + $0x8] sm:$0xff]
        %5208 = vset.pattern.permute.xlu0 0
        %5209 = vperm.xlu0 %5208, %v5205
        %v5210 = vpop.permute.xlu0 %5209
        %5213 = vset.pattern.permute.xlu0 0
        %5214 = vperm.xlu0 %5213, %v5206
        %v5215 = vpop.permute.xlu0 %5214
        %v5218 = vsel %vm1817, %v5202, 0
        %v5221 = vsel %vm1817, %v5203, 0
        %5223 = vmatpush.msra.mxu0 0.0
        %5224 = vmatpush.msra.mxu0 0.0
        %5225 = vmatpush.msra.mxu0 0.0
        %5226 = vmatpush.msra.mxu0 0.0
        %5227 = vmatpush.msra.mxu0 0.0
        %5228 = vmatpush.msra.mxu0 0.0
        %5229 = vmatpush.msra.mxu0 0.0
        %5230 = vmatpush.msra.mxu0 0.0
        %5231 = vmatpush.msra.mxu0 %v5200
        %5232 = vmatpush.msra.mxu0 %v5199
        %5233 = vmatpush.msra.mxu0 %v5198
        %5234 = vmatpush.msra.mxu0 %v5197
        %5235 = vmatpush.msra.mxu0 %v5196
        %5236 = vmatpush.msra.mxu0 %v5195
        %5237 = vmatpush.msra.mxu0 %v5194
        %5238 = vmatpush.msra.mxu0 %v5193
        %5239 = vmatmul.f32.gmra.mxu0 %v5218
        %v5240 = vpop.f32.mrf.mxu0
        %v5241 = vadd.f32 %v5210, %v5240
        %5242 = vmatmul.f32.gmra.mxu0 %v5221
        %v5243 = vpop.f32.mrf.mxu0
        %v5244 = vadd.f32 %v5215, %v5243
        %5245 = vdwg.mxu0
        %v5246 = vtanh.pop %v5241
        %v5247 = vmul.f32 %v5246, 1.442695
        %v5248 = vpow.pop %v5247
        %v5249 = vmul.f32 %v4807, %v5248
        %v5250 = vadd.f32 %v5249, %v5244
        %v5251 = vadd.f32 %v4808, %v5246
        %5252 = vst [vmem:[%s598] sm:$0xff] %v5250
        %5253 = vst [vmem:[%s598 + $0x8] sm:$0xff] %v5251
        %s5254 = sand.u32 %s406, 1
        %s5255 = scalar_lea.sflag [#allocation4], %s5254
        %s5256 = sand.u32 %s406, 1
        %s5257 = smul.addr %s5256, 16
        %s5258 = scalar_lea.vmem [#allocation3], %s5257
        // Predicated region
        $region127: #{tpu_custom_call.1} parent=121 // pred_check
          %p5259 = pneg %p416
        $region128: #{tpu_custom_call.1} parent=121 // pred_check_branch
          %5261 = sbr.rel (%p5259) target = $region130
        $region129: #{tpu_custom_call.1} parent=121 // pred_region
          %5263 = vsyncadd %s5255, 0
          %s5264 = smul.addr %s31, 8
          %s5265 = scalar_lea.hbm %s17, %s5264
          %s5266 = sshll.u32 %s5258, 4
          %s5267 = int_to_ptr.vmem [resolvable:$true] %s5266
          %s5268 = sshll.u32 %s5265, 4
          %s5269 = int_to_ptr.hbm [resolvable:$true] %s5268
          %5274 = dma.vmem_to_hbm [thread:$0]  %s5267, 256, %s5269, %s5255, 128, 384, 8
        $region130: #{tpu_custom_call.1} parent=121 // pred_fallthru
          _
      $region122: #{tpu_custom_call.1} parent=5 // pred_fallthru
        _
      %p5275 = scmp.le.s32.totalorder 2, %s26
      // Predicated region
      $region131: #{tpu_custom_call.1} parent=5 // pred_check
        %p5276 = pneg %p5275
      $region132: #{tpu_custom_call.1} parent=5 // pred_check_branch
        %5278 = sbr.rel (%p5276) target = $region134
      $region133: #{tpu_custom_call.1} parent=5 // pred_region
        %s5279 = ssub.s32 %s26, 2
        // Predicated region
        $region135: #{tpu_custom_call.1} parent=133 // pred_check
          %p5280 = pneg %p422
        $region136: #{tpu_custom_call.1} parent=133 // pred_check_branch
          %5282 = sbr.rel (%p5280) target = $region138
        $region137: #{tpu_custom_call.1} parent=133 // pred_region
          %s5283 = sand.u32 %s407, 1
          %s5284 = scalar_lea.sflag [#allocation4], %s5283
          %s5285 = sand.u32 %s407, 1
          %s5286 = smul.addr %s5285, 16
          %s5287 = scalar_lea.vmem [#allocation3], %s5286
          %5289 = dma.done %s5284, 256
        $region138: #{tpu_custom_call.1} parent=133 // pred_fallthru
          _
      $region134: #{tpu_custom_call.1} parent=5 // pred_fallthru
        _
    $region6: #{tpu_custom_call.1} parent=1 // loop_footer
      %s30 = sadd.s32 1, %s26
    $region7: #{tpu_custom_call.1} parent=1 // loop_footer_branch
      %25 = sbr.rel target = $region3
    $region8: #{tpu_custom_call.1} parent=1 // loop_exit
      _
    %5290 = vsyncpa [#allocation4], 1
    %s5291 = scalar_lea.sflag [#allocation4], 1
    %5292 = vsyncpa %s5291, 1

</llo_original>
